<compile_context>
chip_gen: v7x
topology: tpu7x:2x2x1
jax: 0.10.0
libtpu: 0.0.40
codegen_flags: <defaults>
</compile_context>

<pallas_src>
import functools

import jax
import jax.numpy as jnp
from jax.experimental import pallas as pl
from jax.experimental.pallas import tpu as pltpu

NUM_HIDDEN_LAYERS = 4
LANE = 128          # lane padding for tiny feature dims (latent/param/state+action)
HIDDEN = 256        # PyTorch default hidden_dim; packing assumes HIDDEN == 2*LANE
TB = 8              # batch tile (f32 sublane count)

ENC, DEC, DYN = 0, 1, 2

# --- row offsets inside the flat weight slab (rows x 256 lanes, bf16) ---------
W_IN_OFF = 0                                          # 4 input mats, 128 rows each
W_HID_OFF = W_IN_OFF + 4 * LANE                       # 512:  12 hidden mats, 256 rows
W_OUT_OFF = W_HID_OFF + 3 * NUM_HIDDEN_LAYERS * HIDDEN  # 3584: output mats
W_ROWS = W_OUT_OFF + 2 * HIDDEN                       # 4096

# --- row offsets inside the flat bias slab (rows x 256 lanes, f32) ------------
B_IN_OFF = 0
B_HID_OFF = 3
B_OUT_OFF = B_HID_OFF + 3 * NUM_HIDDEN_LAYERS         # 15
B_ROWS = 24                                           # 18 used rows, sublane-padded


def _encdec_dynamics_kernel(x_ref, w_ref, b_ref, out_ref):
    bf16 = jnp.bfloat16
    f32 = jnp.float32

    def mm(x_bf16, w):
        # bf16 x bf16 on the MXU, f32 accumulation.
        return jnp.dot(x_bf16, w, preferred_element_type=f32)

    relu = lambda v: jnp.maximum(v, 0.0)

    # ---- static views into the flat slabs (row/lane offsets are 128-aligned) ----
    def w_in(idx):                       # 0=enc, 1=dec, 2=dyn_sa, 3=dyn_alpha
        r = W_IN_OFF + idx * LANE
        return w_ref[r:r + LANE, :]

    def w_hid(mlp, layer):
        r = W_HID_OFF + (mlp * NUM_HIDDEN_LAYERS + layer) * HIDDEN
        return w_ref[r:r + HIDDEN, :]

    def w_out(mlp):
        if mlp == ENC:
            return w_ref[W_OUT_OFF:W_OUT_OFF + HIDDEN, 0:LANE]
        if mlp == DEC:
            return w_ref[W_OUT_OFF:W_OUT_OFF + HIDDEN, LANE:2 * LANE]
        return w_ref[W_OUT_OFF + HIDDEN:W_OUT_OFF + 2 * HIDDEN, 0:LANE]

    def b_in(mlp):
        return b_ref[B_IN_OFF + mlp:B_IN_OFF + mlp + 1, :]

    def b_hid(mlp, layer):
        r = B_HID_OFF + mlp * NUM_HIDDEN_LAYERS + layer
        return b_ref[r:r + 1, :]

    def b_out(mlp):
        r = B_OUT_OFF + mlp
        return b_ref[r:r + 1, 0:LANE]

    x = x_ref[...]                            # (TB, 256) f32
    sa = x[:, 0:LANE].astype(bf16)            # (TB, 128) zero-padded
    theta = x[:, LANE:2 * LANE].astype(bf16)  # (TB, 128) zero-padded

    # ---- encoder: theta -> alpha (tanh output; padded lanes stay exactly 0) ----
    h = relu(mm(theta, w_in(0)) + b_in(ENC))
    for l in range(NUM_HIDDEN_LAYERS):        # static unroll (4)
        h = relu(mm(h.astype(bf16), w_hid(ENC, l)) + b_hid(ENC, l))
    alpha = jnp.tanh(mm(h.astype(bf16), w_out(ENC)) + b_out(ENC)).astype(bf16)

    # ---- decoder & dynamics: independent chains, interleaved layer-by-layer ----
    # dynamics input layer was pre-split (W_sa / W_alpha) -> no in-kernel concat.
    h_dec = relu(mm(alpha, w_in(1)) + b_in(DEC))
    h_dyn = relu(mm(sa, w_in(2)) + mm(alpha, w_in(3)) + b_in(DYN))
    for l in range(NUM_HIDDEN_LAYERS):        # static unroll (4), two chains/iter
        h_dec = relu(mm(h_dec.astype(bf16), w_hid(DEC, l)) + b_hid(DEC, l))
        h_dyn = relu(mm(h_dyn.astype(bf16), w_hid(DYN, l)) + b_hid(DYN, l))
    pre_theta = mm(h_dec.astype(bf16), w_out(DEC)) + b_out(DEC)   # (TB, 128) f32
    pre_s = mm(h_dyn.astype(bf16), w_out(DYN)) + b_out(DYN)       # (TB, 128) f32

    out_ref[:, 0:LANE] = pre_theta
    out_ref[:, LANE:2 * LANE] = pre_s


# ----------------------------------------------------------------------------
# Parameter construction (PyTorch nn.Linear-style init) and slab packing.
# ----------------------------------------------------------------------------
def make_linear(key, in_dim, out_dim):
    kw, kb = jax.random.split(key)
    bound = 1.0 / (in_dim ** 0.5)
    w = jax.random.uniform(kw, (in_dim, out_dim), jnp.float32, -bound, bound)
    b = jax.random.uniform(kb, (out_dim,), jnp.float32, -bound, bound)
    return w, b


def make_mlp_params(key, in_dim, hidden_dim, out_dim, num_hidden=NUM_HIDDEN_LAYERS):
    keys = jax.random.split(key, num_hidden + 2)
    w_in, b_in = make_linear(keys[0], in_dim, hidden_dim)
    whs, bhs = zip(*(make_linear(keys[1 + l], hidden_dim, hidden_dim)
                     for l in range(num_hidden)))
    w_out, b_out = make_linear(keys[-1], hidden_dim, out_dim)
    return (w_in, b_in, jnp.stack(whs), jnp.stack(bhs), w_out, b_out)


def pack_params(enc_params, dec_params, dyn_params, *, sa_dim):
    """Pack everything into one bf16 weight slab + one f32 bias slab."""
    e_wi, e_bi, e_wh, e_bh, e_wo, e_bo = enc_params
    d_wi, d_bi, d_wh, d_bh, d_wo, d_bo = dec_params
    f_wi, f_bi, f_wh, f_bh, f_wo, f_bo = dyn_params
    assert e_wi.shape[1] == HIDDEN == 2 * LANE

    pad_rows = lambda w: jnp.pad(w, ((0, LANE - w.shape[0]), (0, 0)))
    pad_cols = lambda w: jnp.pad(w, ((0, 0), (0, LANE - w.shape[1])))
    pad_vec = lambda b: jnp.pad(b, (0, LANE - b.shape[0]))

    # Split the dynamics input layer so the kernel never concatenates [sa, alpha].
    f_wi_sa, f_wi_alpha = f_wi[:sa_dim], f_wi[sa_dim:]

    w_in = jnp.concatenate([pad_rows(e_wi), pad_rows(d_wi),
                            pad_rows(f_wi_sa), pad_rows(f_wi_alpha)], axis=0)  # (512, 256)
    w_hid = jnp.concatenate([e_wh, d_wh, f_wh], axis=0).reshape(-1, HIDDEN)    # (3072, 256)
    w_out_ed = jnp.concatenate([pad_cols(e_wo), pad_cols(d_wo)], axis=1)       # (256, 256)
    w_out_dy = jnp.concatenate([pad_cols(f_wo),
                                jnp.zeros((HIDDEN, LANE), jnp.float32)], axis=1)
    w_flat = jnp.concatenate([w_in, w_hid, w_out_ed, w_out_dy],
                             axis=0).astype(jnp.bfloat16)                      # (4096, 256)
    assert w_flat.shape == (W_ROWS, 2 * LANE)

    zeros_l = jnp.zeros((LANE,), jnp.float32)
    b_in_all = jnp.stack([e_bi, d_bi, f_bi], axis=0)                           # (3, 256)
    b_hid_all = jnp.concatenate([e_bh, d_bh, f_bh], axis=0)                    # (12, 256)
    b_out_all = jnp.stack([jnp.concatenate([pad_vec(e_bo), zeros_l]),
                           jnp.concatenate([pad_vec(d_bo), zeros_l]),
                           jnp.concatenate([pad_vec(f_bo), zeros_l])], axis=0)  # (3, 256)
    b_flat = jnp.concatenate([b_in_all, b_hid_all, b_out_all], axis=0)         # (18, 256)
    b_flat = jnp.pad(b_flat, ((0, B_ROWS - b_flat.shape[0]), (0, 0)))          # (24, 256)
    return w_flat, b_flat


@functools.partial(jax.jit, static_argnames=("param_dim", "state_dim"))
def encoder_decoder_dynamics_forward(sa, theta, w_flat, b_flat, *, param_dim, state_dim):
    batch = sa.shape[0]
    bpad = (-batch) % TB
    b_padded = batch + bpad

    sa_p = jnp.pad(sa, ((0, bpad), (0, LANE - sa.shape[1])))
    theta_p = jnp.pad(theta, ((0, bpad), (0, LANE - theta.shape[1])))
    x = jnp.concatenate([sa_p, theta_p], axis=-1)        # (B_pad, 256), lane dense

    macs_per_row = (
        LANE * HIDDEN + NUM_HIDDEN_LAYERS * HIDDEN * HIDDEN + HIDDEN * LANE      # encoder
        + LANE * HIDDEN + NUM_HIDDEN_LAYERS * HIDDEN * HIDDEN + HIDDEN * LANE    # decoder
        + 2 * LANE * HIDDEN + NUM_HIDDEN_LAYERS * HIDDEN * HIDDEN + HIDDEN * LANE)  # dynamics
    cost = pl.CostEstimate(
        flops=2 * b_padded * macs_per_row,
        transcendentals=b_padded * LANE,
        bytes_accessed=(w_flat.size * 2 + b_flat.size * 4
                        + x.size * 4 + b_padded * 2 * LANE * 4),
    )

    out = pl.pallas_call(
        _encdec_dynamics_kernel,
        out_shape=jax.ShapeDtypeStruct((b_padded, 2 * LANE), jnp.float32),
        grid=(b_padded // TB,),
        in_specs=[
            pl.BlockSpec((TB, 2 * LANE), lambda i: (i, 0)),       # activations, per tile
            pl.BlockSpec((W_ROWS, 2 * LANE), lambda i: (0, 0)),   # weights: DMA once, resident
            pl.BlockSpec((B_ROWS, 2 * LANE), lambda i: (0, 0)),   # biases:  DMA once, resident
        ],
        out_specs=pl.BlockSpec((TB, 2 * LANE), lambda i: (i, 0)),
        compiler_params=pltpu.CompilerParams(dimension_semantics=("parallel",)),
        cost_estimate=cost,
    )(x, w_flat, b_flat)

    pre_theta = out[:batch, 0:param_dim]
    pre_s = out[:batch, LANE:LANE + state_dim]
    return pre_theta, pre_s


# ----------------------------------------------------------------------------
# Pure-JAX references.
# ----------------------------------------------------------------------------
def reference_forward(sa, theta, enc_params, dec_params, dyn_params):
    def mlp(x, params, final_act):
        w_in, b_in, w_hid, b_hid, w_out, b_out = params
        h = jnp.maximum(x @ w_in + b_in, 0.0)
        for l in range(NUM_HIDDEN_LAYERS):
            h = jnp.maximum(h @ w_hid[l] + b_hid[l], 0.0)
        out = h @ w_out + b_out
        return final_act(out) if final_act is not None else out

    alpha = mlp(theta, enc_params, jnp.tanh)
    pre_theta = mlp(alpha, dec_params, None)
    x = jnp.concatenate([sa, alpha], axis=-1)
    pre_s = mlp(x, dyn_params, None)
    return pre_theta, pre_s


def quantize_like_kernel(params):
    """Round weights to bf16 (and back to f32), matching kernel weight storage."""
    w_in, b_in, w_hid, b_hid, w_out, b_out = params
    q = lambda w: w.astype(jnp.bfloat16).astype(jnp.float32)
    return (q(w_in), b_in, q(w_hid), b_hid, q(w_out), b_out)


if __name__ == "__main__":
    batch = 2
    state_dim, action_dim = 6, 2
    param_dim, latent_dim = 5, 3
    hidden_dim = HIDDEN                   # PyTorch default hidden_dim = 256
    sa_dim = state_dim + action_dim

    key = jax.random.PRNGKey(0)
    k_sa, k_theta, k_enc, k_dec, k_dyn = jax.random.split(key, 5)
    sa = jax.random.normal(k_sa, (batch, sa_dim), jnp.float32)
    theta = jax.random.normal(k_theta, (batch, param_dim), jnp.float32)

    enc_params = make_mlp_params(k_enc, param_dim, hidden_dim, latent_dim)
    dec_params = make_mlp_params(k_dec, latent_dim, hidden_dim, param_dim)
    dyn_params = make_mlp_params(k_dyn, sa_dim + latent_dim, hidden_dim, state_dim)

    w_flat, b_flat = pack_params(enc_params, dec_params, dyn_params, sa_dim=sa_dim)

    pre_theta_, pre_s_ = encoder_decoder_dynamics_forward(
        sa, theta, w_flat, b_flat, param_dim=param_dim, state_dim=state_dim)
    jax.block_until_ready((pre_theta_, pre_s_))

    assert pre_theta_.shape == (batch, param_dim)
    assert pre_s_.shape == (batch, state_dim)

    # Tight check vs. a reference that uses the same bf16-quantized weights
    # (only bf16 activation rounding differs).
    ref_q_theta, ref_q_s = reference_forward(
        sa, theta,
        quantize_like_kernel(enc_params),
        quantize_like_kernel(dec_params),
        quantize_like_kernel(dyn_params))
    assert jnp.allclose(pre_theta_, ref_q_theta, atol=3e-3, rtol=3e-2)
    assert jnp.allclose(pre_s_, ref_q_s, atol=3e-3, rtol=3e-2)

    # Loose check vs. the full-f32 reference (covers bf16 weight storage error).
    ref_theta, ref_s = reference_forward(sa, theta, enc_params, dec_params, dyn_params)
    assert jnp.allclose(pre_theta_, ref_theta, atol=3e-2, rtol=3e-2)
    assert jnp.allclose(pre_s_, ref_s, atol=3e-2, rtol=3e-2)

    print("KERNEL_OK")
</pallas_src>

<mosaic_0001>
module attributes {stable_mosaic.version = 11 : i64} {
  func.func @_encdec_dynamics_kernel(%arg0: i32, %arg1: memref<8x256xf32, #tpu.memory_space<vmem>>, %arg2: memref<4096x256xbf16, #tpu.memory_space<vmem>>, %arg3: memref<24x256xf32, #tpu.memory_space<vmem>>, %arg4: memref<8x256xf32, #tpu.memory_space<vmem>>) attributes {dimension_semantics = [#tpu.dimension_semantics<parallel>], iteration_bounds = array<i64: 1>, scalar_prefetch = 0 : i64, scratch_operands = 0 : i64, tpu.core_type = #tpu.core_type<tc>, window_params = [{transform_indices = @transform_0, window_bounds = array<i64: 8, 256>}, {pipeline_mode = #tpu.pipeline_mode<synchronous>, transform_indices = @transform_1, window_bounds = array<i64: 4096, 256>}, {pipeline_mode = #tpu.pipeline_mode<synchronous>, transform_indices = @transform_2, window_bounds = array<i64: 24, 256>}, {transform_indices = @transform_3, window_bounds = array<i64: 8, 256>}]} {
    %c0 = arith.constant 0 : index
    %c0_0 = arith.constant 0 : index
    %0 = vector.load %arg1[%c0, %c0_0] : memref<8x256xf32, #tpu.memory_space<vmem>>, vector<8x256xf32>
    %1 = vector.extract_strided_slice %0 {offsets = [0, 0], sizes = [8, 128], strides = [1, 1]} : vector<8x256xf32> to vector<8x128xf32>
    %2 = arith.truncf %1 : vector<8x128xf32> to vector<8x128xbf16>
    %3 = vector.extract_strided_slice %0 {offsets = [0, 128], sizes = [8, 128], strides = [1, 1]} : vector<8x256xf32> to vector<8x128xf32>
    %4 = arith.truncf %3 : vector<8x128xf32> to vector<8x128xbf16>
    %c0_1 = arith.constant 0 : index
    %c0_2 = arith.constant 0 : index
    %5 = vector.load %arg2[%c0_1, %c0_2] : memref<4096x256xbf16, #tpu.memory_space<vmem>>, vector<128x256xbf16>
    %cst = arith.constant dense<0.000000e+00> : vector<8x256xf32>
    %6 = tpu.matmul %4, %5, %cst {dimension_numbers = #tpu.dot_dimension_numbers<[1], [0], [0], [1], [0, 0, 1, 1], [], []>} : vector<8x128xbf16>, vector<128x256xbf16>, vector<8x256xf32> -> vector<8x256xf32>
    %c0_3 = arith.constant 0 : index
    %c0_4 = arith.constant 0 : index
    %7 = vector.load %arg3[%c0_3, %c0_4] : memref<24x256xf32, #tpu.memory_space<vmem>>, vector<1x256xf32>
    %8 = vector.broadcast %7 : vector<1x256xf32> to vector<8x256xf32>
    %9 = arith.addf %6, %8 : vector<8x256xf32>
    %cst_5 = arith.constant 0.000000e+00 : f32
    %10 = vector.broadcast %cst_5 : f32 to vector<8x256xf32>
    %11 = arith.maximumf %9, %10 : vector<8x256xf32>
    %12 = arith.truncf %11 : vector<8x256xf32> to vector<8x256xbf16>
    %c512 = arith.constant 512 : index
    %c0_6 = arith.constant 0 : index
    %13 = vector.load %arg2[%c512, %c0_6] : memref<4096x256xbf16, #tpu.memory_space<vmem>>, vector<256x256xbf16>
    %cst_7 = arith.constant dense<0.000000e+00> : vector<8x256xf32>
    %14 = tpu.matmul %12, %13, %cst_7 {dimension_numbers = #tpu.dot_dimension_numbers<[1], [0], [0], [1], [0, 0, 1, 1], [], []>} : vector<8x256xbf16>, vector<256x256xbf16>, vector<8x256xf32> -> vector<8x256xf32>
    %c3 = arith.constant 3 : index
    %c0_8 = arith.constant 0 : index
    %15 = vector.load %arg3[%c3, %c0_8] : memref<24x256xf32, #tpu.memory_space<vmem>>, vector<1x256xf32>
    %16 = vector.broadcast %15 : vector<1x256xf32> to vector<8x256xf32>
    %17 = arith.addf %14, %16 : vector<8x256xf32>
    %cst_9 = arith.constant 0.000000e+00 : f32
    %18 = vector.broadcast %cst_9 : f32 to vector<8x256xf32>
    %19 = arith.maximumf %17, %18 : vector<8x256xf32>
    %20 = arith.truncf %19 : vector<8x256xf32> to vector<8x256xbf16>
    %c768 = arith.constant 768 : index
    %c0_10 = arith.constant 0 : index
    %21 = vector.load %arg2[%c768, %c0_10] : memref<4096x256xbf16, #tpu.memory_space<vmem>>, vector<256x256xbf16>
    %cst_11 = arith.constant dense<0.000000e+00> : vector<8x256xf32>
    %22 = tpu.matmul %20, %21, %cst_11 {dimension_numbers = #tpu.dot_dimension_numbers<[1], [0], [0], [1], [0, 0, 1, 1], [], []>} : vector<8x256xbf16>, vector<256x256xbf16>, vector<8x256xf32> -> vector<8x256xf32>
    %c4 = arith.constant 4 : index
    %c0_12 = arith.constant 0 : index
    %23 = vector.load %arg3[%c4, %c0_12] : memref<24x256xf32, #tpu.memory_space<vmem>>, vector<1x256xf32>
    %24 = vector.broadcast %23 : vector<1x256xf32> to vector<8x256xf32>
    %25 = arith.addf %22, %24 : vector<8x256xf32>
    %cst_13 = arith.constant 0.000000e+00 : f32
    %26 = vector.broadcast %cst_13 : f32 to vector<8x256xf32>
    %27 = arith.maximumf %25, %26 : vector<8x256xf32>
    %28 = arith.truncf %27 : vector<8x256xf32> to vector<8x256xbf16>
    %c1024 = arith.constant 1024 : index
    %c0_14 = arith.constant 0 : index
    %29 = vector.load %arg2[%c1024, %c0_14] : memref<4096x256xbf16, #tpu.memory_space<vmem>>, vector<256x256xbf16>
    %cst_15 = arith.constant dense<0.000000e+00> : vector<8x256xf32>
    %30 = tpu.matmul %28, %29, %cst_15 {dimension_numbers = #tpu.dot_dimension_numbers<[1], [0], [0], [1], [0, 0, 1, 1], [], []>} : vector<8x256xbf16>, vector<256x256xbf16>, vector<8x256xf32> -> vector<8x256xf32>
    %c5 = arith.constant 5 : index
    %c0_16 = arith.constant 0 : index
    %31 = vector.load %arg3[%c5, %c0_16] : memref<24x256xf32, #tpu.memory_space<vmem>>, vector<1x256xf32>
    %32 = vector.broadcast %31 : vector<1x256xf32> to vector<8x256xf32>
    %33 = arith.addf %30, %32 : vector<8x256xf32>
    %cst_17 = arith.constant 0.000000e+00 : f32
    %34 = vector.broadcast %cst_17 : f32 to vector<8x256xf32>
    %35 = arith.maximumf %33, %34 : vector<8x256xf32>
    %36 = arith.truncf %35 : vector<8x256xf32> to vector<8x256xbf16>
    %c1280 = arith.constant 1280 : index
    %c0_18 = arith.constant 0 : index
    %37 = vector.load %arg2[%c1280, %c0_18] : memref<4096x256xbf16, #tpu.memory_space<vmem>>, vector<256x256xbf16>
    %cst_19 = arith.constant dense<0.000000e+00> : vector<8x256xf32>
    %38 = tpu.matmul %36, %37, %cst_19 {dimension_numbers = #tpu.dot_dimension_numbers<[1], [0], [0], [1], [0, 0, 1, 1], [], []>} : vector<8x256xbf16>, vector<256x256xbf16>, vector<8x256xf32> -> vector<8x256xf32>
    %c6 = arith.constant 6 : index
    %c0_20 = arith.constant 0 : index
    %39 = vector.load %arg3[%c6, %c0_20] : memref<24x256xf32, #tpu.memory_space<vmem>>, vector<1x256xf32>
    %40 = vector.broadcast %39 : vector<1x256xf32> to vector<8x256xf32>
    %41 = arith.addf %38, %40 : vector<8x256xf32>
    %cst_21 = arith.constant 0.000000e+00 : f32
    %42 = vector.broadcast %cst_21 : f32 to vector<8x256xf32>
    %43 = arith.maximumf %41, %42 : vector<8x256xf32>
    %44 = arith.truncf %43 : vector<8x256xf32> to vector<8x256xbf16>
    %c3584 = arith.constant 3584 : index
    %c0_22 = arith.constant 0 : index
    %45 = vector.load %arg2[%c3584, %c0_22] : memref<4096x256xbf16, #tpu.memory_space<vmem>>, vector<256x128xbf16>
    %cst_23 = arith.constant dense<0.000000e+00> : vector<8x128xf32>
    %46 = tpu.matmul %44, %45, %cst_23 {dimension_numbers = #tpu.dot_dimension_numbers<[1], [0], [0], [1], [0, 0, 1, 1], [], []>} : vector<8x256xbf16>, vector<256x128xbf16>, vector<8x128xf32> -> vector<8x128xf32>
    %c15 = arith.constant 15 : index
    %c0_24 = arith.constant 0 : index
    %47 = vector.load %arg3[%c15, %c0_24] : memref<24x256xf32, #tpu.memory_space<vmem>>, vector<1x128xf32>
    %48 = vector.broadcast %47 : vector<1x128xf32> to vector<8x128xf32>
    %49 = arith.addf %46, %48 : vector<8x128xf32>
    %50 = math.tanh %49 : vector<8x128xf32>
    %51 = arith.truncf %50 : vector<8x128xf32> to vector<8x128xbf16>
    %c128 = arith.constant 128 : index
    %c0_25 = arith.constant 0 : index
    %52 = vector.load %arg2[%c128, %c0_25] : memref<4096x256xbf16, #tpu.memory_space<vmem>>, vector<128x256xbf16>
    %cst_26 = arith.constant dense<0.000000e+00> : vector<8x256xf32>
    %53 = tpu.matmul %51, %52, %cst_26 {dimension_numbers = #tpu.dot_dimension_numbers<[1], [0], [0], [1], [0, 0, 1, 1], [], []>} : vector<8x128xbf16>, vector<128x256xbf16>, vector<8x256xf32> -> vector<8x256xf32>
    %c1 = arith.constant 1 : index
    %c0_27 = arith.constant 0 : index
    %54 = vector.load %arg3[%c1, %c0_27] : memref<24x256xf32, #tpu.memory_space<vmem>>, vector<1x256xf32>
    %55 = vector.broadcast %54 : vector<1x256xf32> to vector<8x256xf32>
    %56 = arith.addf %53, %55 : vector<8x256xf32>
    %cst_28 = arith.constant 0.000000e+00 : f32
    %57 = vector.broadcast %cst_28 : f32 to vector<8x256xf32>
    %58 = arith.maximumf %56, %57 : vector<8x256xf32>
    %c256 = arith.constant 256 : index
    %c0_29 = arith.constant 0 : index
    %59 = vector.load %arg2[%c256, %c0_29] : memref<4096x256xbf16, #tpu.memory_space<vmem>>, vector<128x256xbf16>
    %cst_30 = arith.constant dense<0.000000e+00> : vector<8x256xf32>
    %60 = tpu.matmul %2, %59, %cst_30 {dimension_numbers = #tpu.dot_dimension_numbers<[1], [0], [0], [1], [0, 0, 1, 1], [], []>} : vector<8x128xbf16>, vector<128x256xbf16>, vector<8x256xf32> -> vector<8x256xf32>
    %c384 = arith.constant 384 : index
    %c0_31 = arith.constant 0 : index
    %61 = vector.load %arg2[%c384, %c0_31] : memref<4096x256xbf16, #tpu.memory_space<vmem>>, vector<128x256xbf16>
    %cst_32 = arith.constant dense<0.000000e+00> : vector<8x256xf32>
    %62 = tpu.matmul %51, %61, %cst_32 {dimension_numbers = #tpu.dot_dimension_numbers<[1], [0], [0], [1], [0, 0, 1, 1], [], []>} : vector<8x128xbf16>, vector<128x256xbf16>, vector<8x256xf32> -> vector<8x256xf32>
    %63 = arith.addf %60, %62 : vector<8x256xf32>
    %c2 = arith.constant 2 : index
    %c0_33 = arith.constant 0 : index
    %64 = vector.load %arg3[%c2, %c0_33] : memref<24x256xf32, #tpu.memory_space<vmem>>, vector<1x256xf32>
    %65 = vector.broadcast %64 : vector<1x256xf32> to vector<8x256xf32>
    %66 = arith.addf %63, %65 : vector<8x256xf32>
    %cst_34 = arith.constant 0.000000e+00 : f32
    %67 = vector.broadcast %cst_34 : f32 to vector<8x256xf32>
    %68 = arith.maximumf %66, %67 : vector<8x256xf32>
    %69 = arith.truncf %58 : vector<8x256xf32> to vector<8x256xbf16>
    %c1536 = arith.constant 1536 : index
    %c0_35 = arith.constant 0 : index
    %70 = vector.load %arg2[%c1536, %c0_35] : memref<4096x256xbf16, #tpu.memory_space<vmem>>, vector<256x256xbf16>
    %cst_36 = arith.constant dense<0.000000e+00> : vector<8x256xf32>
    %71 = tpu.matmul %69, %70, %cst_36 {dimension_numbers = #tpu.dot_dimension_numbers<[1], [0], [0], [1], [0, 0, 1, 1], [], []>} : vector<8x256xbf16>, vector<256x256xbf16>, vector<8x256xf32> -> vector<8x256xf32>
    %c7 = arith.constant 7 : index
    %c0_37 = arith.constant 0 : index
    %72 = vector.load %arg3[%c7, %c0_37] : memref<24x256xf32, #tpu.memory_space<vmem>>, vector<1x256xf32>
    %73 = vector.broadcast %72 : vector<1x256xf32> to vector<8x256xf32>
    %74 = arith.addf %71, %73 : vector<8x256xf32>
    %cst_38 = arith.constant 0.000000e+00 : f32
    %75 = vector.broadcast %cst_38 : f32 to vector<8x256xf32>
    %76 = arith.maximumf %74, %75 : vector<8x256xf32>
    %77 = arith.truncf %68 : vector<8x256xf32> to vector<8x256xbf16>
    %c2560 = arith.constant 2560 : index
    %c0_39 = arith.constant 0 : index
    %78 = vector.load %arg2[%c2560, %c0_39] : memref<4096x256xbf16, #tpu.memory_space<vmem>>, vector<256x256xbf16>
    %cst_40 = arith.constant dense<0.000000e+00> : vector<8x256xf32>
    %79 = tpu.matmul %77, %78, %cst_40 {dimension_numbers = #tpu.dot_dimension_numbers<[1], [0], [0], [1], [0, 0, 1, 1], [], []>} : vector<8x256xbf16>, vector<256x256xbf16>, vector<8x256xf32> -> vector<8x256xf32>
    %c11 = arith.constant 11 : index
    %c0_41 = arith.constant 0 : index
    %80 = vector.load %arg3[%c11, %c0_41] : memref<24x256xf32, #tpu.memory_space<vmem>>, vector<1x256xf32>
    %81 = vector.broadcast %80 : vector<1x256xf32> to vector<8x256xf32>
    %82 = arith.addf %79, %81 : vector<8x256xf32>
    %cst_42 = arith.constant 0.000000e+00 : f32
    %83 = vector.broadcast %cst_42 : f32 to vector<8x256xf32>
    %84 = arith.maximumf %82, %83 : vector<8x256xf32>
    %85 = arith.truncf %76 : vector<8x256xf32> to vector<8x256xbf16>
    %c1792 = arith.constant 1792 : index
    %c0_43 = arith.constant 0 : index
    %86 = vector.load %arg2[%c1792, %c0_43] : memref<4096x256xbf16, #tpu.memory_space<vmem>>, vector<256x256xbf16>
    %cst_44 = arith.constant dense<0.000000e+00> : vector<8x256xf32>
    %87 = tpu.matmul %85, %86, %cst_44 {dimension_numbers = #tpu.dot_dimension_numbers<[1], [0], [0], [1], [0, 0, 1, 1], [], []>} : vector<8x256xbf16>, vector<256x256xbf16>, vector<8x256xf32> -> vector<8x256xf32>
    %c8 = arith.constant 8 : index
    %c0_45 = arith.constant 0 : index
    %88 = vector.load %arg3[%c8, %c0_45] : memref<24x256xf32, #tpu.memory_space<vmem>>, vector<1x256xf32>
    %89 = vector.broadcast %88 : vector<1x256xf32> to vector<8x256xf32>
    %90 = arith.addf %87, %89 : vector<8x256xf32>
    %cst_46 = arith.constant 0.000000e+00 : f32
    %91 = vector.broadcast %cst_46 : f32 to vector<8x256xf32>
    %92 = arith.maximumf %90, %91 : vector<8x256xf32>
    %93 = arith.truncf %84 : vector<8x256xf32> to vector<8x256xbf16>
    %c2816 = arith.constant 2816 : index
    %c0_47 = arith.constant 0 : index
    %94 = vector.load %arg2[%c2816, %c0_47] : memref<4096x256xbf16, #tpu.memory_space<vmem>>, vector<256x256xbf16>
    %cst_48 = arith.constant dense<0.000000e+00> : vector<8x256xf32>
    %95 = tpu.matmul %93, %94, %cst_48 {dimension_numbers = #tpu.dot_dimension_numbers<[1], [0], [0], [1], [0, 0, 1, 1], [], []>} : vector<8x256xbf16>, vector<256x256xbf16>, vector<8x256xf32> -> vector<8x256xf32>
    %c12 = arith.constant 12 : index
    %c0_49 = arith.constant 0 : index
    %96 = vector.load %arg3[%c12, %c0_49] : memref<24x256xf32, #tpu.memory_space<vmem>>, vector<1x256xf32>
    %97 = vector.broadcast %96 : vector<1x256xf32> to vector<8x256xf32>
    %98 = arith.addf %95, %97 : vector<8x256xf32>
    %cst_50 = arith.constant 0.000000e+00 : f32
    %99 = vector.broadcast %cst_50 : f32 to vector<8x256xf32>
    %100 = arith.maximumf %98, %99 : vector<8x256xf32>
    %101 = arith.truncf %92 : vector<8x256xf32> to vector<8x256xbf16>
    %c2048 = arith.constant 2048 : index
    %c0_51 = arith.constant 0 : index
    %102 = vector.load %arg2[%c2048, %c0_51] : memref<4096x256xbf16, #tpu.memory_space<vmem>>, vector<256x256xbf16>
    %cst_52 = arith.constant dense<0.000000e+00> : vector<8x256xf32>
    %103 = tpu.matmul %101, %102, %cst_52 {dimension_numbers = #tpu.dot_dimension_numbers<[1], [0], [0], [1], [0, 0, 1, 1], [], []>} : vector<8x256xbf16>, vector<256x256xbf16>, vector<8x256xf32> -> vector<8x256xf32>
    %c9 = arith.constant 9 : index
    %c0_53 = arith.constant 0 : index
    %104 = vector.load %arg3[%c9, %c0_53] : memref<24x256xf32, #tpu.memory_space<vmem>>, vector<1x256xf32>
    %105 = vector.broadcast %104 : vector<1x256xf32> to vector<8x256xf32>
    %106 = arith.addf %103, %105 : vector<8x256xf32>
    %cst_54 = arith.constant 0.000000e+00 : f32
    %107 = vector.broadcast %cst_54 : f32 to vector<8x256xf32>
    %108 = arith.maximumf %106, %107 : vector<8x256xf32>
    %109 = arith.truncf %100 : vector<8x256xf32> to vector<8x256xbf16>
    %c3072 = arith.constant 3072 : index
    %c0_55 = arith.constant 0 : index
    %110 = vector.load %arg2[%c3072, %c0_55] : memref<4096x256xbf16, #tpu.memory_space<vmem>>, vector<256x256xbf16>
    %cst_56 = arith.constant dense<0.000000e+00> : vector<8x256xf32>
    %111 = tpu.matmul %109, %110, %cst_56 {dimension_numbers = #tpu.dot_dimension_numbers<[1], [0], [0], [1], [0, 0, 1, 1], [], []>} : vector<8x256xbf16>, vector<256x256xbf16>, vector<8x256xf32> -> vector<8x256xf32>
    %c13 = arith.constant 13 : index
    %c0_57 = arith.constant 0 : index
    %112 = vector.load %arg3[%c13, %c0_57] : memref<24x256xf32, #tpu.memory_space<vmem>>, vector<1x256xf32>
    %113 = vector.broadcast %112 : vector<1x256xf32> to vector<8x256xf32>
    %114 = arith.addf %111, %113 : vector<8x256xf32>
    %cst_58 = arith.constant 0.000000e+00 : f32
    %115 = vector.broadcast %cst_58 : f32 to vector<8x256xf32>
    %116 = arith.maximumf %114, %115 : vector<8x256xf32>
    %117 = arith.truncf %108 : vector<8x256xf32> to vector<8x256xbf16>
    %c2304 = arith.constant 2304 : index
    %c0_59 = arith.constant 0 : index
    %118 = vector.load %arg2[%c2304, %c0_59] : memref<4096x256xbf16, #tpu.memory_space<vmem>>, vector<256x256xbf16>
    %cst_60 = arith.constant dense<0.000000e+00> : vector<8x256xf32>
    %119 = tpu.matmul %117, %118, %cst_60 {dimension_numbers = #tpu.dot_dimension_numbers<[1], [0], [0], [1], [0, 0, 1, 1], [], []>} : vector<8x256xbf16>, vector<256x256xbf16>, vector<8x256xf32> -> vector<8x256xf32>
    %c10 = arith.constant 10 : index
    %c0_61 = arith.constant 0 : index
    %120 = vector.load %arg3[%c10, %c0_61] : memref<24x256xf32, #tpu.memory_space<vmem>>, vector<1x256xf32>
    %121 = vector.broadcast %120 : vector<1x256xf32> to vector<8x256xf32>
    %122 = arith.addf %119, %121 : vector<8x256xf32>
    %cst_62 = arith.constant 0.000000e+00 : f32
    %123 = vector.broadcast %cst_62 : f32 to vector<8x256xf32>
    %124 = arith.maximumf %122, %123 : vector<8x256xf32>
    %125 = arith.truncf %116 : vector<8x256xf32> to vector<8x256xbf16>
    %c3328 = arith.constant 3328 : index
    %c0_63 = arith.constant 0 : index
    %126 = vector.load %arg2[%c3328, %c0_63] : memref<4096x256xbf16, #tpu.memory_space<vmem>>, vector<256x256xbf16>
    %cst_64 = arith.constant dense<0.000000e+00> : vector<8x256xf32>
    %127 = tpu.matmul %125, %126, %cst_64 {dimension_numbers = #tpu.dot_dimension_numbers<[1], [0], [0], [1], [0, 0, 1, 1], [], []>} : vector<8x256xbf16>, vector<256x256xbf16>, vector<8x256xf32> -> vector<8x256xf32>
    %c14 = arith.constant 14 : index
    %c0_65 = arith.constant 0 : index
    %128 = vector.load %arg3[%c14, %c0_65] : memref<24x256xf32, #tpu.memory_space<vmem>>, vector<1x256xf32>
    %129 = vector.broadcast %128 : vector<1x256xf32> to vector<8x256xf32>
    %130 = arith.addf %127, %129 : vector<8x256xf32>
    %cst_66 = arith.constant 0.000000e+00 : f32
    %131 = vector.broadcast %cst_66 : f32 to vector<8x256xf32>
    %132 = arith.maximumf %130, %131 : vector<8x256xf32>
    %133 = arith.truncf %124 : vector<8x256xf32> to vector<8x256xbf16>
    %c3584_67 = arith.constant 3584 : index
    %c128_68 = arith.constant 128 : index
    %134 = vector.load %arg2[%c3584_67, %c128_68] : memref<4096x256xbf16, #tpu.memory_space<vmem>>, vector<256x128xbf16>
    %cst_69 = arith.constant dense<0.000000e+00> : vector<8x128xf32>
    %135 = tpu.matmul %133, %134, %cst_69 {dimension_numbers = #tpu.dot_dimension_numbers<[1], [0], [0], [1], [0, 0, 1, 1], [], []>} : vector<8x256xbf16>, vector<256x128xbf16>, vector<8x128xf32> -> vector<8x128xf32>
    %c16 = arith.constant 16 : index
    %c0_70 = arith.constant 0 : index
    %136 = vector.load %arg3[%c16, %c0_70] : memref<24x256xf32, #tpu.memory_space<vmem>>, vector<1x128xf32>
    %137 = vector.broadcast %136 : vector<1x128xf32> to vector<8x128xf32>
    %138 = arith.addf %135, %137 : vector<8x128xf32>
    %139 = arith.truncf %132 : vector<8x256xf32> to vector<8x256xbf16>
    %c3840 = arith.constant 3840 : index
    %c0_71 = arith.constant 0 : index
    %140 = vector.load %arg2[%c3840, %c0_71] : memref<4096x256xbf16, #tpu.memory_space<vmem>>, vector<256x128xbf16>
    %cst_72 = arith.constant dense<0.000000e+00> : vector<8x128xf32>
    %141 = tpu.matmul %139, %140, %cst_72 {dimension_numbers = #tpu.dot_dimension_numbers<[1], [0], [0], [1], [0, 0, 1, 1], [], []>} : vector<8x256xbf16>, vector<256x128xbf16>, vector<8x128xf32> -> vector<8x128xf32>
    %c17 = arith.constant 17 : index
    %c0_73 = arith.constant 0 : index
    %142 = vector.load %arg3[%c17, %c0_73] : memref<24x256xf32, #tpu.memory_space<vmem>>, vector<1x128xf32>
    %143 = vector.broadcast %142 : vector<1x128xf32> to vector<8x128xf32>
    %144 = arith.addf %141, %143 : vector<8x128xf32>
    %c0_74 = arith.constant 0 : index
    %c0_75 = arith.constant 0 : index
    %145 = vector.load %arg4[%c0_74, %c0_75] : memref<8x256xf32, #tpu.memory_space<vmem>>, vector<8x128xf32>
    tpu.vector_store %arg4[%c0_74, %c0_75], %138 {strides = array<i32>} : memref<8x256xf32, #tpu.memory_space<vmem>>, vector<8x128xf32>,
    %c0_76 = arith.constant 0 : index
    %c128_77 = arith.constant 128 : index
    %146 = vector.load %arg4[%c0_76, %c128_77] : memref<8x256xf32, #tpu.memory_space<vmem>>, vector<8x128xf32>
    tpu.vector_store %arg4[%c0_76, %c128_77], %144 {strides = array<i32>} : memref<8x256xf32, #tpu.memory_space<vmem>>, vector<8x128xf32>,
    return
  }
  func.func @transform_0(%arg0: i32) -> (i32, i32) {
    %c0_i32 = arith.constant 0 : i32
    %c0_i32_0 = arith.constant 0 : i32
    return %arg0, %c0_i32 : i32, i32
  }
  func.func @transform_1(%arg0: i32) -> (i32, i32) {
    %c0_i32 = arith.constant 0 : i32
    %c0_i32_0 = arith.constant 0 : i32
    %c0_i32_1 = arith.constant 0 : i32
    return %c0_i32, %c0_i32_0 : i32, i32
  }
  func.func @transform_2(%arg0: i32) -> (i32, i32) {
    %c0_i32 = arith.constant 0 : i32
    %c0_i32_0 = arith.constant 0 : i32
    %c0_i32_1 = arith.constant 0 : i32
    return %c0_i32, %c0_i32_0 : i32, i32
  }
  func.func @transform_3(%arg0: i32) -> (i32, i32) {
    %c0_i32 = arith.constant 0 : i32
    %c0_i32_0 = arith.constant 0 : i32
    return %arg0, %c0_i32 : i32, i32
  }
}

</mosaic_0001>

<llo_original>
// kernel: encoder_decoder_dynamics_forward.1
$region0: #{encoder_decoder_dynamics_forward.1}
  #allocation0 [shape = 'u32[]', space=smem, size = 0x4, offset = 0x4, fixed_abs, tag = 'smem constant byte address 0x4 - core index']
  #allocation1 [shape = 'u32[144,128]{1,0:T(1,128)}', space=vmem, size = 0x12000, scoped, tag = 'internal scratch']
  %s0 = inlined_call_operand.vmem [shape: f32[8,256], index: 0, kind: input, shape index: {}]
  %s1 = inlined_call_operand.hbm [shape: bf16[4096,256], index: 1, kind: input, shape index: {}]
  %s2 = inlined_call_operand.hbm [shape: f32[24,256], index: 2, kind: input, shape index: {}]
  %s3 = inlined_call_operand.vmem [shape: f32[8,256], index: 3, kind: output, shape index: {}]
  %s4 = sld [smem:[#allocation0]]
  $region30: #{encoder_decoder_dynamics_forward.1} parent=0
    _
  %s6 = ssub.s32 1, %s4
  %s7 = scalar_select 0, %s6, %s4
  $region1: #{encoder_decoder_dynamics_forward.1} parent=0
    #allocation2 [shape = 'u8[2097152]{0}', space=vmem, size = 0x200000, scoped, tag = 'input window, operand 1, single buffered']
    #allocation3 [shape = 's32[1]{0}', space=sflag, size = 0x4, scoped, tag = 'scoped memory for encoder_decoder_dynamics_forward.1']
    #allocation4 [shape = 'u8[24576]{0}', space=vmem, size = 0x6000, scoped, tag = 'input window, operand 2, single buffered']
    #allocation5 [shape = 's32[1]{0}', space=sflag, size = 0x4, scoped, tag = 'scoped memory for encoder_decoder_dynamics_forward.1']
    %8 = vsyncpa [#allocation3], 0
    %9 = vsyncpa [#allocation5], 0
    // Predicated region
    $region2: #{encoder_decoder_dynamics_forward.1} parent=1 // pred_check
      _
    $region3: #{encoder_decoder_dynamics_forward.1} parent=1 // pred_check_branch
      %11 = sbr.rel (0) target = $region5
    $region4: #{encoder_decoder_dynamics_forward.1} parent=1 // pred_region
      _
    $region5: #{encoder_decoder_dynamics_forward.1} parent=1 // pred_fallthru
      _
    // Predicated region
    $region6: #{encoder_decoder_dynamics_forward.1} parent=1 // pred_check
      _
    $region7: #{encoder_decoder_dynamics_forward.1} parent=1 // pred_check_branch
      %13 = sbr.rel (0) target = $region9
    $region8: #{encoder_decoder_dynamics_forward.1} parent=1 // pred_region
      %s15 = ssub.s32 65536, 65536
      %16 = vsyncadd [#allocation3], %s15
      %s17 = sshll.u32 [#allocation2], 4
      %s18 = int_to_ptr.vmem [resolvable:$true] %s17
      %23 = dma.hbm_to_vmem [thread:$0]  %s1, 65536, %s18, [#allocation3], 128, 128, 8
    $region9: #{encoder_decoder_dynamics_forward.1} parent=1 // pred_fallthru
      _
    // Predicated region
    $region10: #{encoder_decoder_dynamics_forward.1} parent=1 // pred_check
      _
    $region11: #{encoder_decoder_dynamics_forward.1} parent=1 // pred_check_branch
      %25 = sbr.rel (0) target = $region13
    $region12: #{encoder_decoder_dynamics_forward.1} parent=1 // pred_region
      %s27 = ssub.s32 768, 768
      %28 = vsyncadd [#allocation5], %s27
      %s29 = sshll.u32 [#allocation4], 4
      %s30 = int_to_ptr.vmem [resolvable:$true] %s29
      %35 = dma.hbm_to_vmem [thread:$0]  %s2, 768, %s30, [#allocation5], 256, 256, 16
    $region13: #{encoder_decoder_dynamics_forward.1} parent=1 // pred_fallthru
      _
    // Predicated region
    $region14: #{encoder_decoder_dynamics_forward.1} parent=1 // pred_check
      _
    $region15: #{encoder_decoder_dynamics_forward.1} parent=1 // pred_check_branch
      %37 = sbr.rel (0) target = $region17
    $region16: #{encoder_decoder_dynamics_forward.1} parent=1 // pred_region
      %38 = dma.done [#allocation3], 65536
    $region17: #{encoder_decoder_dynamics_forward.1} parent=1 // pred_fallthru
      _
    // Predicated region
    $region18: #{encoder_decoder_dynamics_forward.1} parent=1 // pred_check
      _
    $region19: #{encoder_decoder_dynamics_forward.1} parent=1 // pred_check_branch
      %40 = sbr.rel (0) target = $region21
    $region20: #{encoder_decoder_dynamics_forward.1} parent=1 // pred_region
      %41 = dma.done [#allocation5], 768
    $region21: #{encoder_decoder_dynamics_forward.1} parent=1 // pred_fallthru
      _
    %v43 = vld [vmem:[%s0] sm:$0xff]
    %v44 = vld [vmem:[%s0 + $0x8] sm:$0xff]
    %v45 = vpack.c.bf16 %v43, %v43
    %v46 = vpack.c.bf16 %v44, %v44
    %v47 = vld [vmem:[#allocation2] sm:$0xff]
    %v48 = vld [vmem:[#allocation2 + $0x8] sm:$0xff]
    %v49 = vld [vmem:[#allocation2 + $0x10] sm:$0xff]
    %v50 = vld [vmem:[#allocation2 + $0x18] sm:$0xff]
    %v51 = vld [vmem:[#allocation2 + $0x20] sm:$0xff]
    %v52 = vld [vmem:[#allocation2 + $0x28] sm:$0xff]
    %v53 = vld [vmem:[#allocation2 + $0x30] sm:$0xff]
    %v54 = vld [vmem:[#allocation2 + $0x38] sm:$0xff]
    %v55 = vld [vmem:[#allocation2 + $0x40] sm:$0xff]
    %v56 = vld [vmem:[#allocation2 + $0x48] sm:$0xff]
    %v57 = vld [vmem:[#allocation2 + $0x50] sm:$0xff]
    %v58 = vld [vmem:[#allocation2 + $0x58] sm:$0xff]
    %v59 = vld [vmem:[#allocation2 + $0x60] sm:$0xff]
    %v60 = vld [vmem:[#allocation2 + $0x68] sm:$0xff]
    %v61 = vld [vmem:[#allocation2 + $0x70] sm:$0xff]
    %v62 = vld [vmem:[#allocation2 + $0x78] sm:$0xff]
    %v63 = vld [vmem:[#allocation4] ss:$8 sm:$0x3]
    %v65 = vlaneseq
    %v66 = vshrl.u32 %v65, 7
    %v67 = vsub.s32 0, %v66
    %v68 = vrot.slane %v63, %v67
    %v69 = vlaneseq
    %v70 = vshrl.u32 %v69, 7
    %v71 = vsub.s32 1, %v70
    %v72 = vrot.slane %v63, %v71
    %v91 = vunpack.c.l.b16 %v47
    %v92 = vunpack.c.h.b16 %v47
    %v93 = vunpack.c.l.b16 %v48
    %v94 = vunpack.c.h.b16 %v48
    %v95 = vunpack.c.l.b16 %v49
    %v96 = vunpack.c.h.b16 %v49
    %v97 = vunpack.c.l.b16 %v50
    %v98 = vunpack.c.h.b16 %v50
    %v99 = vunpack.c.l.b16 %v51
    %v100 = vunpack.c.h.b16 %v51
    %v101 = vunpack.c.l.b16 %v52
    %v102 = vunpack.c.h.b16 %v52
    %v103 = vunpack.c.l.b16 %v53
    %v104 = vunpack.c.h.b16 %v53
    %v105 = vunpack.c.l.b16 %v54
    %v106 = vunpack.c.h.b16 %v54
    %v107 = vunpack.c.l.b16 %v55
    %v108 = vunpack.c.h.b16 %v55
    %v109 = vunpack.c.l.b16 %v56
    %v110 = vunpack.c.h.b16 %v56
    %v111 = vunpack.c.l.b16 %v57
    %v112 = vunpack.c.h.b16 %v57
    %v113 = vunpack.c.l.b16 %v58
    %v114 = vunpack.c.h.b16 %v58
    %v115 = vunpack.c.l.b16 %v59
    %v116 = vunpack.c.h.b16 %v59
    %v117 = vunpack.c.l.b16 %v60
    %v118 = vunpack.c.h.b16 %v60
    %v119 = vunpack.c.l.b16 %v61
    %v120 = vunpack.c.h.b16 %v61
    %v121 = vunpack.c.l.b16 %v62
    %v122 = vunpack.c.h.b16 %v62
    %v123 = vpack.c.b16 %v93, %v91
    %v124 = vpack.c.b16 %v94, %v92
    %v125 = vpack.c.b16 %v97, %v95
    %v126 = vpack.c.b16 %v98, %v96
    %v127 = vpack.c.b16 %v101, %v99
    %v128 = vpack.c.b16 %v102, %v100
    %v129 = vpack.c.b16 %v105, %v103
    %v130 = vpack.c.b16 %v106, %v104
    %v131 = vpack.c.b16 %v109, %v107
    %v132 = vpack.c.b16 %v110, %v108
    %v133 = vpack.c.b16 %v113, %v111
    %v134 = vpack.c.b16 %v114, %v112
    %v135 = vpack.c.b16 %v117, %v115
    %v136 = vpack.c.b16 %v118, %v116
    %v137 = vpack.c.b16 %v121, %v119
    %v138 = vpack.c.b16 %v122, %v120
    %155 = vmatprep.subr.bf16.mxu0 %v124
    %156 = vmatpush1.bf16.msra.mxu0 %v123
    %157 = vmatprep.subr.bf16.mxu0 %v126
    %158 = vmatpush1.bf16.msra.mxu0 %v125
    %159 = vmatprep.subr.bf16.mxu0 %v128
    %160 = vmatpush1.bf16.msra.mxu0 %v127
    %161 = vmatprep.subr.bf16.mxu0 %v130
    %162 = vmatpush1.bf16.msra.mxu0 %v129
    %163 = vmatprep.subr.bf16.mxu0 %v132
    %164 = vmatpush1.bf16.msra.mxu0 %v131
    %165 = vmatprep.subr.bf16.mxu0 %v134
    %166 = vmatpush1.bf16.msra.mxu0 %v133
    %167 = vmatprep.subr.bf16.mxu0 %v136
    %168 = vmatpush1.bf16.msra.mxu0 %v135
    %169 = vmatprep.subr.bf16.mxu0 %v138
    %170 = vmatpush1.bf16.msra.mxu0 %v137
    %171 = vmatprep.subr.bf16.mxu0 0
    %172 = vmatpush1.bf16.msra.mxu0 0
    %173 = vmatprep.subr.bf16.mxu0 0
    %174 = vmatpush1.bf16.msra.mxu0 0
    %175 = vmatprep.subr.bf16.mxu0 0
    %176 = vmatpush1.bf16.msra.mxu0 0
    %177 = vmatprep.subr.bf16.mxu0 0
    %178 = vmatpush1.bf16.msra.mxu0 0
    %179 = vmatprep.subr.bf16.mxu0 0
    %180 = vmatpush1.bf16.msra.mxu0 0
    %181 = vmatprep.subr.bf16.mxu0 0
    %182 = vmatpush1.bf16.msra.mxu0 0
    %183 = vmatprep.subr.bf16.mxu0 0
    %184 = vmatpush1.bf16.msra.mxu0 0
    %185 = vmatprep.subr.bf16.mxu0 0
    %186 = vmatpush1.bf16.msra.mxu0 0
    %187 = vmatprep.mubr.bf16.mxu0 0
    %188 = vmatmul.mubr.bf16.gmra.mrb[0].mxu0 %v46
    %v189 = vpop.f32.mrb[0].mxu0
    %v190 = vadd.f32 %v68, %v189
    %v191 = vpop.f32.mrb[0].mxu0
    %v192 = vadd.f32 %v72, %v191
    %v193 = vpop.f32.mrb[0].mxu0
    %v194 = vpop.f32.mrb[0].mxu0
    %195 = vdwg.mxu0
    %v196 = vmax.f32 %v190, 0.0
    %v197 = vmax.f32 %v192, 0.0
    %v198 = vpack.c.bf16 %v196, %v196
    %v199 = vpack.c.bf16 %v197, %v197
    %v200 = vld [vmem:[#allocation2 + $0x200] sm:$0xff]
    %v201 = vld [vmem:[#allocation2 + $0x208] sm:$0xff]
    %v202 = vld [vmem:[#allocation2 + $0x210] sm:$0xff]
    %v203 = vld [vmem:[#allocation2 + $0x218] sm:$0xff]
    %v204 = vld [vmem:[#allocation2 + $0x220] sm:$0xff]
    %v205 = vld [vmem:[#allocation2 + $0x228] sm:$0xff]
    %v206 = vld [vmem:[#allocation2 + $0x230] sm:$0xff]
    %v207 = vld [vmem:[#allocation2 + $0x238] sm:$0xff]
    %v208 = vld [vmem:[#allocation2 + $0x240] sm:$0xff]
    %v209 = vld [vmem:[#allocation2 + $0x248] sm:$0xff]
    %v210 = vld [vmem:[#allocation2 + $0x250] sm:$0xff]
    %v211 = vld [vmem:[#allocation2 + $0x258] sm:$0xff]
    %v212 = vld [vmem:[#allocation2 + $0x260] sm:$0xff]
    %v213 = vld [vmem:[#allocation2 + $0x268] sm:$0xff]
    %v214 = vld [vmem:[#allocation2 + $0x270] sm:$0xff]
    %v215 = vld [vmem:[#allocation2 + $0x278] sm:$0xff]
    %v216 = vld [vmem:[#allocation2 + $0x280] sm:$0xff]
    %v217 = vld [vmem:[#allocation2 + $0x288] sm:$0xff]
    %v218 = vld [vmem:[#allocation2 + $0x290] sm:$0xff]
    %v219 = vld [vmem:[#allocation2 + $0x298] sm:$0xff]
    %v220 = vld [vmem:[#allocation2 + $0x2a0] sm:$0xff]
    %v221 = vld [vmem:[#allocation2 + $0x2a8] sm:$0xff]
    %v222 = vld [vmem:[#allocation2 + $0x2b0] sm:$0xff]
    %v223 = vld [vmem:[#allocation2 + $0x2b8] sm:$0xff]
    %v224 = vld [vmem:[#allocation2 + $0x2c0] sm:$0xff]
    %v225 = vld [vmem:[#allocation2 + $0x2c8] sm:$0xff]
    %v226 = vld [vmem:[#allocation2 + $0x2d0] sm:$0xff]
    %v227 = vld [vmem:[#allocation2 + $0x2d8] sm:$0xff]
    %v228 = vld [vmem:[#allocation2 + $0x2e0] sm:$0xff]
    %v229 = vld [vmem:[#allocation2 + $0x2e8] sm:$0xff]
    %v230 = vld [vmem:[#allocation2 + $0x2f0] sm:$0xff]
    %v231 = vld [vmem:[#allocation2 + $0x2f8] sm:$0xff]
    %s232 = scalar_lea.vmem [#allocation4], 3
    %v233 = vld [vmem:[%s232] ss:$8 sm:$0x3]
    %v235 = vlaneseq
    %v236 = vshrl.u32 %v235, 7
    %v237 = vsub.s32 0, %v236
    %v238 = vrot.slane %v233, %v237
    %v239 = vlaneseq
    %v240 = vshrl.u32 %v239, 7
    %v241 = vsub.s32 1, %v240
    %v242 = vrot.slane %v233, %v241
    %v277 = vunpack.c.l.b16 %v200
    %v278 = vunpack.c.h.b16 %v200
    %v279 = vunpack.c.l.b16 %v201
    %v280 = vunpack.c.h.b16 %v201
    %v281 = vunpack.c.l.b16 %v202
    %v282 = vunpack.c.h.b16 %v202
    %v283 = vunpack.c.l.b16 %v203
    %v284 = vunpack.c.h.b16 %v203
    %v285 = vunpack.c.l.b16 %v204
    %v286 = vunpack.c.h.b16 %v204
    %v287 = vunpack.c.l.b16 %v205
    %v288 = vunpack.c.h.b16 %v205
    %v289 = vunpack.c.l.b16 %v206
    %v290 = vunpack.c.h.b16 %v206
    %v291 = vunpack.c.l.b16 %v207
    %v292 = vunpack.c.h.b16 %v207
    %v293 = vunpack.c.l.b16 %v208
    %v294 = vunpack.c.h.b16 %v208
    %v295 = vunpack.c.l.b16 %v209
    %v296 = vunpack.c.h.b16 %v209
    %v297 = vunpack.c.l.b16 %v210
    %v298 = vunpack.c.h.b16 %v210
    %v299 = vunpack.c.l.b16 %v211
    %v300 = vunpack.c.h.b16 %v211
    %v301 = vunpack.c.l.b16 %v212
    %v302 = vunpack.c.h.b16 %v212
    %v303 = vunpack.c.l.b16 %v213
    %v304 = vunpack.c.h.b16 %v213
    %v305 = vunpack.c.l.b16 %v214
    %v306 = vunpack.c.h.b16 %v214
    %v307 = vunpack.c.l.b16 %v215
    %v308 = vunpack.c.h.b16 %v215
    %v309 = vunpack.c.l.b16 %v216
    %v310 = vunpack.c.h.b16 %v216
    %v311 = vunpack.c.l.b16 %v217
    %v312 = vunpack.c.h.b16 %v217
    %v313 = vunpack.c.l.b16 %v218
    %v314 = vunpack.c.h.b16 %v218
    %v315 = vunpack.c.l.b16 %v219
    %v316 = vunpack.c.h.b16 %v219
    %v317 = vunpack.c.l.b16 %v220
    %v318 = vunpack.c.h.b16 %v220
    %v319 = vunpack.c.l.b16 %v221
    %v320 = vunpack.c.h.b16 %v221
    %v321 = vunpack.c.l.b16 %v222
    %v322 = vunpack.c.h.b16 %v222
    %v323 = vunpack.c.l.b16 %v223
    %v324 = vunpack.c.h.b16 %v223
    %v325 = vunpack.c.l.b16 %v224
    %v326 = vunpack.c.h.b16 %v224
    %v327 = vunpack.c.l.b16 %v225
    %v328 = vunpack.c.h.b16 %v225
    %v329 = vunpack.c.l.b16 %v226
    %v330 = vunpack.c.h.b16 %v226
    %v331 = vunpack.c.l.b16 %v227
    %v332 = vunpack.c.h.b16 %v227
    %v333 = vunpack.c.l.b16 %v228
    %v334 = vunpack.c.h.b16 %v228
    %v335 = vunpack.c.l.b16 %v229
    %v336 = vunpack.c.h.b16 %v229
    %v337 = vunpack.c.l.b16 %v230
    %v338 = vunpack.c.h.b16 %v230
    %v339 = vunpack.c.l.b16 %v231
    %v340 = vunpack.c.h.b16 %v231
    %v341 = vpack.c.b16 %v279, %v277
    %v342 = vpack.c.b16 %v280, %v278
    %v343 = vpack.c.b16 %v283, %v281
    %v344 = vpack.c.b16 %v284, %v282
    %v345 = vpack.c.b16 %v287, %v285
    %v346 = vpack.c.b16 %v288, %v286
    %v347 = vpack.c.b16 %v291, %v289
    %v348 = vpack.c.b16 %v292, %v290
    %v349 = vpack.c.b16 %v295, %v293
    %v350 = vpack.c.b16 %v296, %v294
    %v351 = vpack.c.b16 %v299, %v297
    %v352 = vpack.c.b16 %v300, %v298
    %v353 = vpack.c.b16 %v303, %v301
    %v354 = vpack.c.b16 %v304, %v302
    %v355 = vpack.c.b16 %v307, %v305
    %v356 = vpack.c.b16 %v308, %v306
    %v357 = vpack.c.b16 %v311, %v309
    %v358 = vpack.c.b16 %v312, %v310
    %v359 = vpack.c.b16 %v315, %v313
    %v360 = vpack.c.b16 %v316, %v314
    %v361 = vpack.c.b16 %v319, %v317
    %v362 = vpack.c.b16 %v320, %v318
    %v363 = vpack.c.b16 %v323, %v321
    %v364 = vpack.c.b16 %v324, %v322
    %v365 = vpack.c.b16 %v327, %v325
    %v366 = vpack.c.b16 %v328, %v326
    %v367 = vpack.c.b16 %v331, %v329
    %v368 = vpack.c.b16 %v332, %v330
    %v369 = vpack.c.b16 %v335, %v333
    %v370 = vpack.c.b16 %v336, %v334
    %v371 = vpack.c.b16 %v339, %v337
    %v372 = vpack.c.b16 %v340, %v338
    %405 = vmatprep.subr.bf16.mxu0 %v342
    %406 = vmatpush1.bf16.msra.mxu0 %v341
    %407 = vmatprep.subr.bf16.mxu0 %v344
    %408 = vmatpush1.bf16.msra.mxu0 %v343
    %409 = vmatprep.subr.bf16.mxu0 %v346
    %410 = vmatpush1.bf16.msra.mxu0 %v345
    %411 = vmatprep.subr.bf16.mxu0 %v348
    %412 = vmatpush1.bf16.msra.mxu0 %v347
    %413 = vmatprep.subr.bf16.mxu0 %v350
    %414 = vmatpush1.bf16.msra.mxu0 %v349
    %415 = vmatprep.subr.bf16.mxu0 %v352
    %416 = vmatpush1.bf16.msra.mxu0 %v351
    %417 = vmatprep.subr.bf16.mxu0 %v354
    %418 = vmatpush1.bf16.msra.mxu0 %v353
    %419 = vmatprep.subr.bf16.mxu0 %v356
    %420 = vmatpush1.bf16.msra.mxu0 %v355
    %421 = vmatprep.subr.bf16.mxu0 %v358
    %422 = vmatpush1.bf16.msra.mxu0 %v357
    %423 = vmatprep.subr.bf16.mxu0 %v360
    %424 = vmatpush1.bf16.msra.mxu0 %v359
    %425 = vmatprep.subr.bf16.mxu0 %v362
    %426 = vmatpush1.bf16.msra.mxu0 %v361
    %427 = vmatprep.subr.bf16.mxu0 %v364
    %428 = vmatpush1.bf16.msra.mxu0 %v363
    %429 = vmatprep.subr.bf16.mxu0 %v366
    %430 = vmatpush1.bf16.msra.mxu0 %v365
    %431 = vmatprep.subr.bf16.mxu0 %v368
    %432 = vmatpush1.bf16.msra.mxu0 %v367
    %433 = vmatprep.subr.bf16.mxu0 %v370
    %434 = vmatpush1.bf16.msra.mxu0 %v369
    %435 = vmatprep.subr.bf16.mxu0 %v372
    %436 = vmatpush1.bf16.msra.mxu0 %v371
    %437 = vmatprep.mubr.bf16.mxu0 %v199
    %438 = vmatmul.mubr.bf16.gmra.mrb[0].mxu0 %v198
    %v439 = vpop.f32.mrb[0].mxu0
    %v440 = vadd.f32 %v238, %v439
    %v441 = vpop.f32.mrb[0].mxu0
    %v442 = vadd.f32 %v242, %v441
    %v443 = vpop.f32.mrb[0].mxu0
    %v444 = vpop.f32.mrb[0].mxu0
    %445 = vdwg.mxu0
    %v446 = vmax.f32 %v440, 0.0
    %v447 = vmax.f32 %v442, 0.0
    %v448 = vpack.c.bf16 %v446, %v446
    %v449 = vpack.c.bf16 %v447, %v447
    %v450 = vld [vmem:[#allocation2 + $0x300] sm:$0xff]
    %v451 = vld [vmem:[#allocation2 + $0x308] sm:$0xff]
    %v452 = vld [vmem:[#allocation2 + $0x310] sm:$0xff]
    %v453 = vld [vmem:[#allocation2 + $0x318] sm:$0xff]
    %v454 = vld [vmem:[#allocation2 + $0x320] sm:$0xff]
    %v455 = vld [vmem:[#allocation2 + $0x328] sm:$0xff]
    %v456 = vld [vmem:[#allocation2 + $0x330] sm:$0xff]
    %v457 = vld [vmem:[#allocation2 + $0x338] sm:$0xff]
    %v458 = vld [vmem:[#allocation2 + $0x340] sm:$0xff]
    %v459 = vld [vmem:[#allocation2 + $0x348] sm:$0xff]
    %v460 = vld [vmem:[#allocation2 + $0x350] sm:$0xff]
    %v461 = vld [vmem:[#allocation2 + $0x358] sm:$0xff]
    %v462 = vld [vmem:[#allocation2 + $0x360] sm:$0xff]
    %v463 = vld [vmem:[#allocation2 + $0x368] sm:$0xff]
    %v464 = vld [vmem:[#allocation2 + $0x370] sm:$0xff]
    %v465 = vld [vmem:[#allocation2 + $0x378] sm:$0xff]
    %v466 = vld [vmem:[#allocation2 + $0x380] sm:$0xff]
    %v467 = vld [vmem:[#allocation2 + $0x388] sm:$0xff]
    %v468 = vld [vmem:[#allocation2 + $0x390] sm:$0xff]
    %v469 = vld [vmem:[#allocation2 + $0x398] sm:$0xff]
    %v470 = vld [vmem:[#allocation2 + $0x3a0] sm:$0xff]
    %v471 = vld [vmem:[#allocation2 + $0x3a8] sm:$0xff]
    %v472 = vld [vmem:[#allocation2 + $0x3b0] sm:$0xff]
    %v473 = vld [vmem:[#allocation2 + $0x3b8] sm:$0xff]
    %v474 = vld [vmem:[#allocation2 + $0x3c0] sm:$0xff]
    %v475 = vld [vmem:[#allocation2 + $0x3c8] sm:$0xff]
    %v476 = vld [vmem:[#allocation2 + $0x3d0] sm:$0xff]
    %v477 = vld [vmem:[#allocation2 + $0x3d8] sm:$0xff]
    %v478 = vld [vmem:[#allocation2 + $0x3e0] sm:$0xff]
    %v479 = vld [vmem:[#allocation2 + $0x3e8] sm:$0xff]
    %v480 = vld [vmem:[#allocation2 + $0x3f0] sm:$0xff]
    %v481 = vld [vmem:[#allocation2 + $0x3f8] sm:$0xff]
    %s482 = scalar_lea.vmem [#allocation4], 4
    %v483 = vld [vmem:[%s482] ss:$8 sm:$0x3]
    %v485 = vlaneseq
    %v486 = vshrl.u32 %v485, 7
    %v487 = vsub.s32 0, %v486
    %v488 = vrot.slane %v483, %v487
    %v489 = vlaneseq
    %v490 = vshrl.u32 %v489, 7
    %v491 = vsub.s32 1, %v490
    %v492 = vrot.slane %v483, %v491
    %v527 = vunpack.c.l.b16 %v450
    %v528 = vunpack.c.h.b16 %v450
    %v529 = vunpack.c.l.b16 %v451
    %v530 = vunpack.c.h.b16 %v451
    %v531 = vunpack.c.l.b16 %v452
    %v532 = vunpack.c.h.b16 %v452
    %v533 = vunpack.c.l.b16 %v453
    %v534 = vunpack.c.h.b16 %v453
    %v535 = vunpack.c.l.b16 %v454
    %v536 = vunpack.c.h.b16 %v454
    %v537 = vunpack.c.l.b16 %v455
    %v538 = vunpack.c.h.b16 %v455
    %v539 = vunpack.c.l.b16 %v456
    %v540 = vunpack.c.h.b16 %v456
    %v541 = vunpack.c.l.b16 %v457
    %v542 = vunpack.c.h.b16 %v457
    %v543 = vunpack.c.l.b16 %v458
    %v544 = vunpack.c.h.b16 %v458
    %v545 = vunpack.c.l.b16 %v459
    %v546 = vunpack.c.h.b16 %v459
    %v547 = vunpack.c.l.b16 %v460
    %v548 = vunpack.c.h.b16 %v460
    %v549 = vunpack.c.l.b16 %v461
    %v550 = vunpack.c.h.b16 %v461
    %v551 = vunpack.c.l.b16 %v462
    %v552 = vunpack.c.h.b16 %v462
    %v553 = vunpack.c.l.b16 %v463
    %v554 = vunpack.c.h.b16 %v463
    %v555 = vunpack.c.l.b16 %v464
    %v556 = vunpack.c.h.b16 %v464
    %v557 = vunpack.c.l.b16 %v465
    %v558 = vunpack.c.h.b16 %v465
    %v559 = vunpack.c.l.b16 %v466
    %v560 = vunpack.c.h.b16 %v466
    %v561 = vunpack.c.l.b16 %v467
    %v562 = vunpack.c.h.b16 %v467
    %v563 = vunpack.c.l.b16 %v468
    %v564 = vunpack.c.h.b16 %v468
    %v565 = vunpack.c.l.b16 %v469
    %v566 = vunpack.c.h.b16 %v469
    %v567 = vunpack.c.l.b16 %v470
    %v568 = vunpack.c.h.b16 %v470
    %v569 = vunpack.c.l.b16 %v471
    %v570 = vunpack.c.h.b16 %v471
    %v571 = vunpack.c.l.b16 %v472
    %v572 = vunpack.c.h.b16 %v472
    %v573 = vunpack.c.l.b16 %v473
    %v574 = vunpack.c.h.b16 %v473
    %v575 = vunpack.c.l.b16 %v474
    %v576 = vunpack.c.h.b16 %v474
    %v577 = vunpack.c.l.b16 %v475
    %v578 = vunpack.c.h.b16 %v475
    %v579 = vunpack.c.l.b16 %v476
    %v580 = vunpack.c.h.b16 %v476
    %v581 = vunpack.c.l.b16 %v477
    %v582 = vunpack.c.h.b16 %v477
    %v583 = vunpack.c.l.b16 %v478
    %v584 = vunpack.c.h.b16 %v478
    %v585 = vunpack.c.l.b16 %v479
    %v586 = vunpack.c.h.b16 %v479
    %v587 = vunpack.c.l.b16 %v480
    %v588 = vunpack.c.h.b16 %v480
    %v589 = vunpack.c.l.b16 %v481
    %v590 = vunpack.c.h.b16 %v481
    %v591 = vpack.c.b16 %v529, %v527
    %v592 = vpack.c.b16 %v530, %v528
    %v593 = vpack.c.b16 %v533, %v531
    %v594 = vpack.c.b16 %v534, %v532
    %v595 = vpack.c.b16 %v537, %v535
    %v596 = vpack.c.b16 %v538, %v536
    %v597 = vpack.c.b16 %v541, %v539
    %v598 = vpack.c.b16 %v542, %v540
    %v599 = vpack.c.b16 %v545, %v543
    %v600 = vpack.c.b16 %v546, %v544
    %v601 = vpack.c.b16 %v549, %v547
    %v602 = vpack.c.b16 %v550, %v548
    %v603 = vpack.c.b16 %v553, %v551
    %v604 = vpack.c.b16 %v554, %v552
    %v605 = vpack.c.b16 %v557, %v555
    %v606 = vpack.c.b16 %v558, %v556
    %v607 = vpack.c.b16 %v561, %v559
    %v608 = vpack.c.b16 %v562, %v560
    %v609 = vpack.c.b16 %v565, %v563
    %v610 = vpack.c.b16 %v566, %v564
    %v611 = vpack.c.b16 %v569, %v567
    %v612 = vpack.c.b16 %v570, %v568
    %v613 = vpack.c.b16 %v573, %v571
    %v614 = vpack.c.b16 %v574, %v572
    %v615 = vpack.c.b16 %v577, %v575
    %v616 = vpack.c.b16 %v578, %v576
    %v617 = vpack.c.b16 %v581, %v579
    %v618 = vpack.c.b16 %v582, %v580
    %v619 = vpack.c.b16 %v585, %v583
    %v620 = vpack.c.b16 %v586, %v584
    %v621 = vpack.c.b16 %v589, %v587
    %v622 = vpack.c.b16 %v590, %v588
    %655 = vmatprep.subr.bf16.mxu0 %v592
    %656 = vmatpush1.bf16.msra.mxu0 %v591
    %657 = vmatprep.subr.bf16.mxu0 %v594
    %658 = vmatpush1.bf16.msra.mxu0 %v593
    %659 = vmatprep.subr.bf16.mxu0 %v596
    %660 = vmatpush1.bf16.msra.mxu0 %v595
    %661 = vmatprep.subr.bf16.mxu0 %v598
    %662 = vmatpush1.bf16.msra.mxu0 %v597
    %663 = vmatprep.subr.bf16.mxu0 %v600
    %664 = vmatpush1.bf16.msra.mxu0 %v599
    %665 = vmatprep.subr.bf16.mxu0 %v602
    %666 = vmatpush1.bf16.msra.mxu0 %v601
    %667 = vmatprep.subr.bf16.mxu0 %v604
    %668 = vmatpush1.bf16.msra.mxu0 %v603
    %669 = vmatprep.subr.bf16.mxu0 %v606
    %670 = vmatpush1.bf16.msra.mxu0 %v605
    %671 = vmatprep.subr.bf16.mxu0 %v608
    %672 = vmatpush1.bf16.msra.mxu0 %v607
    %673 = vmatprep.subr.bf16.mxu0 %v610
    %674 = vmatpush1.bf16.msra.mxu0 %v609
    %675 = vmatprep.subr.bf16.mxu0 %v612
    %676 = vmatpush1.bf16.msra.mxu0 %v611
    %677 = vmatprep.subr.bf16.mxu0 %v614
    %678 = vmatpush1.bf16.msra.mxu0 %v613
    %679 = vmatprep.subr.bf16.mxu0 %v616
    %680 = vmatpush1.bf16.msra.mxu0 %v615
    %681 = vmatprep.subr.bf16.mxu0 %v618
    %682 = vmatpush1.bf16.msra.mxu0 %v617
    %683 = vmatprep.subr.bf16.mxu0 %v620
    %684 = vmatpush1.bf16.msra.mxu0 %v619
    %685 = vmatprep.subr.bf16.mxu0 %v622
    %686 = vmatpush1.bf16.msra.mxu0 %v621
    %687 = vmatprep.mubr.bf16.mxu0 %v449
    %688 = vmatmul.mubr.bf16.gmra.mrb[0].mxu0 %v448
    %v689 = vpop.f32.mrb[0].mxu0
    %v690 = vadd.f32 %v488, %v689
    %v691 = vpop.f32.mrb[0].mxu0
    %v692 = vadd.f32 %v492, %v691
    %v693 = vpop.f32.mrb[0].mxu0
    %v694 = vpop.f32.mrb[0].mxu0
    %695 = vdwg.mxu0
    %v696 = vmax.f32 %v690, 0.0
    %v697 = vmax.f32 %v692, 0.0
    %v698 = vpack.c.bf16 %v696, %v696
    %v699 = vpack.c.bf16 %v697, %v697
    %v700 = vld [vmem:[#allocation2 + $0x400] sm:$0xff]
    %v701 = vld [vmem:[#allocation2 + $0x408] sm:$0xff]
    %v702 = vld [vmem:[#allocation2 + $0x410] sm:$0xff]
    %v703 = vld [vmem:[#allocation2 + $0x418] sm:$0xff]
    %v704 = vld [vmem:[#allocation2 + $0x420] sm:$0xff]
    %v705 = vld [vmem:[#allocation2 + $0x428] sm:$0xff]
    %v706 = vld [vmem:[#allocation2 + $0x430] sm:$0xff]
    %v707 = vld [vmem:[#allocation2 + $0x438] sm:$0xff]
    %v708 = vld [vmem:[#allocation2 + $0x440] sm:$0xff]
    %v709 = vld [vmem:[#allocation2 + $0x448] sm:$0xff]
    %v710 = vld [vmem:[#allocation2 + $0x450] sm:$0xff]
    %v711 = vld [vmem:[#allocation2 + $0x458] sm:$0xff]
    %v712 = vld [vmem:[#allocation2 + $0x460] sm:$0xff]
    %v713 = vld [vmem:[#allocation2 + $0x468] sm:$0xff]
    %v714 = vld [vmem:[#allocation2 + $0x470] sm:$0xff]
    %v715 = vld [vmem:[#allocation2 + $0x478] sm:$0xff]
    %v716 = vld [vmem:[#allocation2 + $0x480] sm:$0xff]
    %v717 = vld [vmem:[#allocation2 + $0x488] sm:$0xff]
    %v718 = vld [vmem:[#allocation2 + $0x490] sm:$0xff]
    %v719 = vld [vmem:[#allocation2 + $0x498] sm:$0xff]
    %v720 = vld [vmem:[#allocation2 + $0x4a0] sm:$0xff]
    %v721 = vld [vmem:[#allocation2 + $0x4a8] sm:$0xff]
    %v722 = vld [vmem:[#allocation2 + $0x4b0] sm:$0xff]
    %v723 = vld [vmem:[#allocation2 + $0x4b8] sm:$0xff]
    %v724 = vld [vmem:[#allocation2 + $0x4c0] sm:$0xff]
    %v725 = vld [vmem:[#allocation2 + $0x4c8] sm:$0xff]
    %v726 = vld [vmem:[#allocation2 + $0x4d0] sm:$0xff]
    %v727 = vld [vmem:[#allocation2 + $0x4d8] sm:$0xff]
    %v728 = vld [vmem:[#allocation2 + $0x4e0] sm:$0xff]
    %v729 = vld [vmem:[#allocation2 + $0x4e8] sm:$0xff]
    %v730 = vld [vmem:[#allocation2 + $0x4f0] sm:$0xff]
    %v731 = vld [vmem:[#allocation2 + $0x4f8] sm:$0xff]
    %s732 = scalar_lea.vmem [#allocation4], 5
    %v733 = vld [vmem:[%s732] ss:$8 sm:$0x3]
    %v735 = vlaneseq
    %v736 = vshrl.u32 %v735, 7
    %v737 = vsub.s32 0, %v736
    %v738 = vrot.slane %v733, %v737
    %v739 = vlaneseq
    %v740 = vshrl.u32 %v739, 7
    %v741 = vsub.s32 1, %v740
    %v742 = vrot.slane %v733, %v741
    %v777 = vunpack.c.l.b16 %v700
    %v778 = vunpack.c.h.b16 %v700
    %v779 = vunpack.c.l.b16 %v701
    %v780 = vunpack.c.h.b16 %v701
    %v781 = vunpack.c.l.b16 %v702
    %v782 = vunpack.c.h.b16 %v702
    %v783 = vunpack.c.l.b16 %v703
    %v784 = vunpack.c.h.b16 %v703
    %v785 = vunpack.c.l.b16 %v704
    %v786 = vunpack.c.h.b16 %v704
    %v787 = vunpack.c.l.b16 %v705
    %v788 = vunpack.c.h.b16 %v705
    %v789 = vunpack.c.l.b16 %v706
    %v790 = vunpack.c.h.b16 %v706
    %v791 = vunpack.c.l.b16 %v707
    %v792 = vunpack.c.h.b16 %v707
    %v793 = vunpack.c.l.b16 %v708
    %v794 = vunpack.c.h.b16 %v708
    %v795 = vunpack.c.l.b16 %v709
    %v796 = vunpack.c.h.b16 %v709
    %v797 = vunpack.c.l.b16 %v710
    %v798 = vunpack.c.h.b16 %v710
    %v799 = vunpack.c.l.b16 %v711
    %v800 = vunpack.c.h.b16 %v711
    %v801 = vunpack.c.l.b16 %v712
    %v802 = vunpack.c.h.b16 %v712
    %v803 = vunpack.c.l.b16 %v713
    %v804 = vunpack.c.h.b16 %v713
    %v805 = vunpack.c.l.b16 %v714
    %v806 = vunpack.c.h.b16 %v714
    %v807 = vunpack.c.l.b16 %v715
    %v808 = vunpack.c.h.b16 %v715
    %v809 = vunpack.c.l.b16 %v716
    %v810 = vunpack.c.h.b16 %v716
    %v811 = vunpack.c.l.b16 %v717
    %v812 = vunpack.c.h.b16 %v717
    %v813 = vunpack.c.l.b16 %v718
    %v814 = vunpack.c.h.b16 %v718
    %v815 = vunpack.c.l.b16 %v719
    %v816 = vunpack.c.h.b16 %v719
    %v817 = vunpack.c.l.b16 %v720
    %v818 = vunpack.c.h.b16 %v720
    %v819 = vunpack.c.l.b16 %v721
    %v820 = vunpack.c.h.b16 %v721
    %v821 = vunpack.c.l.b16 %v722
    %v822 = vunpack.c.h.b16 %v722
    %v823 = vunpack.c.l.b16 %v723
    %v824 = vunpack.c.h.b16 %v723
    %v825 = vunpack.c.l.b16 %v724
    %v826 = vunpack.c.h.b16 %v724
    %v827 = vunpack.c.l.b16 %v725
    %v828 = vunpack.c.h.b16 %v725
    %v829 = vunpack.c.l.b16 %v726
    %v830 = vunpack.c.h.b16 %v726
    %v831 = vunpack.c.l.b16 %v727
    %v832 = vunpack.c.h.b16 %v727
    %v833 = vunpack.c.l.b16 %v728
    %v834 = vunpack.c.h.b16 %v728
    %v835 = vunpack.c.l.b16 %v729
    %v836 = vunpack.c.h.b16 %v729
    %v837 = vunpack.c.l.b16 %v730
    %v838 = vunpack.c.h.b16 %v730
    %v839 = vunpack.c.l.b16 %v731
    %v840 = vunpack.c.h.b16 %v731
    %v841 = vpack.c.b16 %v779, %v777
    %v842 = vpack.c.b16 %v780, %v778
    %v843 = vpack.c.b16 %v783, %v781
    %v844 = vpack.c.b16 %v784, %v782
    %v845 = vpack.c.b16 %v787, %v785
    %v846 = vpack.c.b16 %v788, %v786
    %v847 = vpack.c.b16 %v791, %v789
    %v848 = vpack.c.b16 %v792, %v790
    %v849 = vpack.c.b16 %v795, %v793
    %v850 = vpack.c.b16 %v796, %v794
    %v851 = vpack.c.b16 %v799, %v797
    %v852 = vpack.c.b16 %v800, %v798
    %v853 = vpack.c.b16 %v803, %v801
    %v854 = vpack.c.b16 %v804, %v802
    %v855 = vpack.c.b16 %v807, %v805
    %v856 = vpack.c.b16 %v808, %v806
    %v857 = vpack.c.b16 %v811, %v809
    %v858 = vpack.c.b16 %v812, %v810
    %v859 = vpack.c.b16 %v815, %v813
    %v860 = vpack.c.b16 %v816, %v814
    %v861 = vpack.c.b16 %v819, %v817
    %v862 = vpack.c.b16 %v820, %v818
    %v863 = vpack.c.b16 %v823, %v821
    %v864 = vpack.c.b16 %v824, %v822
    %v865 = vpack.c.b16 %v827, %v825
    %v866 = vpack.c.b16 %v828, %v826
    %v867 = vpack.c.b16 %v831, %v829
    %v868 = vpack.c.b16 %v832, %v830
    %v869 = vpack.c.b16 %v835, %v833
    %v870 = vpack.c.b16 %v836, %v834
    %v871 = vpack.c.b16 %v839, %v837
    %v872 = vpack.c.b16 %v840, %v838
    %905 = vmatprep.subr.bf16.mxu0 %v842
    %906 = vmatpush1.bf16.msra.mxu0 %v841
    %907 = vmatprep.subr.bf16.mxu0 %v844
    %908 = vmatpush1.bf16.msra.mxu0 %v843
    %909 = vmatprep.subr.bf16.mxu0 %v846
    %910 = vmatpush1.bf16.msra.mxu0 %v845
    %911 = vmatprep.subr.bf16.mxu0 %v848
    %912 = vmatpush1.bf16.msra.mxu0 %v847
    %913 = vmatprep.subr.bf16.mxu0 %v850
    %914 = vmatpush1.bf16.msra.mxu0 %v849
    %915 = vmatprep.subr.bf16.mxu0 %v852
    %916 = vmatpush1.bf16.msra.mxu0 %v851
    %917 = vmatprep.subr.bf16.mxu0 %v854
    %918 = vmatpush1.bf16.msra.mxu0 %v853
    %919 = vmatprep.subr.bf16.mxu0 %v856
    %920 = vmatpush1.bf16.msra.mxu0 %v855
    %921 = vmatprep.subr.bf16.mxu0 %v858
    %922 = vmatpush1.bf16.msra.mxu0 %v857
    %923 = vmatprep.subr.bf16.mxu0 %v860
    %924 = vmatpush1.bf16.msra.mxu0 %v859
    %925 = vmatprep.subr.bf16.mxu0 %v862
    %926 = vmatpush1.bf16.msra.mxu0 %v861
    %927 = vmatprep.subr.bf16.mxu0 %v864
    %928 = vmatpush1.bf16.msra.mxu0 %v863
    %929 = vmatprep.subr.bf16.mxu0 %v866
    %930 = vmatpush1.bf16.msra.mxu0 %v865
    %931 = vmatprep.subr.bf16.mxu0 %v868
    %932 = vmatpush1.bf16.msra.mxu0 %v867
    %933 = vmatprep.subr.bf16.mxu0 %v870
    %934 = vmatpush1.bf16.msra.mxu0 %v869
    %935 = vmatprep.subr.bf16.mxu0 %v872
    %936 = vmatpush1.bf16.msra.mxu0 %v871
    %937 = vmatprep.mubr.bf16.mxu0 %v699
    %938 = vmatmul.mubr.bf16.gmra.mrb[0].mxu0 %v698
    %v939 = vpop.f32.mrb[0].mxu0
    %v940 = vadd.f32 %v738, %v939
    %v941 = vpop.f32.mrb[0].mxu0
    %v942 = vadd.f32 %v742, %v941
    %v943 = vpop.f32.mrb[0].mxu0
    %v944 = vpop.f32.mrb[0].mxu0
    %945 = vdwg.mxu0
    %v946 = vmax.f32 %v940, 0.0
    %v947 = vmax.f32 %v942, 0.0
    %v948 = vpack.c.bf16 %v946, %v946
    %v949 = vpack.c.bf16 %v947, %v947
    %v950 = vld [vmem:[#allocation2 + $0x500] sm:$0xff]
    %v951 = vld [vmem:[#allocation2 + $0x508] sm:$0xff]
    %v952 = vld [vmem:[#allocation2 + $0x510] sm:$0xff]
    %v953 = vld [vmem:[#allocation2 + $0x518] sm:$0xff]
    %v954 = vld [vmem:[#allocation2 + $0x520] sm:$0xff]
    %v955 = vld [vmem:[#allocation2 + $0x528] sm:$0xff]
    %v956 = vld [vmem:[#allocation2 + $0x530] sm:$0xff]
    %v957 = vld [vmem:[#allocation2 + $0x538] sm:$0xff]
    %v958 = vld [vmem:[#allocation2 + $0x540] sm:$0xff]
    %v959 = vld [vmem:[#allocation2 + $0x548] sm:$0xff]
    %v960 = vld [vmem:[#allocation2 + $0x550] sm:$0xff]
    %v961 = vld [vmem:[#allocation2 + $0x558] sm:$0xff]
    %v962 = vld [vmem:[#allocation2 + $0x560] sm:$0xff]
    %v963 = vld [vmem:[#allocation2 + $0x568] sm:$0xff]
    %v964 = vld [vmem:[#allocation2 + $0x570] sm:$0xff]
    %v965 = vld [vmem:[#allocation2 + $0x578] sm:$0xff]
    %v966 = vld [vmem:[#allocation2 + $0x580] sm:$0xff]
    %v967 = vld [vmem:[#allocation2 + $0x588] sm:$0xff]
    %v968 = vld [vmem:[#allocation2 + $0x590] sm:$0xff]
    %v969 = vld [vmem:[#allocation2 + $0x598] sm:$0xff]
    %v970 = vld [vmem:[#allocation2 + $0x5a0] sm:$0xff]
    %v971 = vld [vmem:[#allocation2 + $0x5a8] sm:$0xff]
    %v972 = vld [vmem:[#allocation2 + $0x5b0] sm:$0xff]
    %v973 = vld [vmem:[#allocation2 + $0x5b8] sm:$0xff]
    %v974 = vld [vmem:[#allocation2 + $0x5c0] sm:$0xff]
    %v975 = vld [vmem:[#allocation2 + $0x5c8] sm:$0xff]
    %v976 = vld [vmem:[#allocation2 + $0x5d0] sm:$0xff]
    %v977 = vld [vmem:[#allocation2 + $0x5d8] sm:$0xff]
    %v978 = vld [vmem:[#allocation2 + $0x5e0] sm:$0xff]
    %v979 = vld [vmem:[#allocation2 + $0x5e8] sm:$0xff]
    %v980 = vld [vmem:[#allocation2 + $0x5f0] sm:$0xff]
    %v981 = vld [vmem:[#allocation2 + $0x5f8] sm:$0xff]
    %s982 = scalar_lea.vmem [#allocation4], 6
    %v983 = vld [vmem:[%s982] ss:$8 sm:$0x3]
    %v985 = vlaneseq
    %v986 = vshrl.u32 %v985, 7
    %v987 = vsub.s32 0, %v986
    %v988 = vrot.slane %v983, %v987
    %v989 = vlaneseq
    %v990 = vshrl.u32 %v989, 7
    %v991 = vsub.s32 1, %v990
    %v992 = vrot.slane %v983, %v991
    %v1027 = vunpack.c.l.b16 %v950
    %v1028 = vunpack.c.h.b16 %v950
    %v1029 = vunpack.c.l.b16 %v951
    %v1030 = vunpack.c.h.b16 %v951
    %v1031 = vunpack.c.l.b16 %v952
    %v1032 = vunpack.c.h.b16 %v952
    %v1033 = vunpack.c.l.b16 %v953
    %v1034 = vunpack.c.h.b16 %v953
    %v1035 = vunpack.c.l.b16 %v954
    %v1036 = vunpack.c.h.b16 %v954
    %v1037 = vunpack.c.l.b16 %v955
    %v1038 = vunpack.c.h.b16 %v955
    %v1039 = vunpack.c.l.b16 %v956
    %v1040 = vunpack.c.h.b16 %v956
    %v1041 = vunpack.c.l.b16 %v957
    %v1042 = vunpack.c.h.b16 %v957
    %v1043 = vunpack.c.l.b16 %v958
    %v1044 = vunpack.c.h.b16 %v958
    %v1045 = vunpack.c.l.b16 %v959
    %v1046 = vunpack.c.h.b16 %v959
    %v1047 = vunpack.c.l.b16 %v960
    %v1048 = vunpack.c.h.b16 %v960
    %v1049 = vunpack.c.l.b16 %v961
    %v1050 = vunpack.c.h.b16 %v961
    %v1051 = vunpack.c.l.b16 %v962
    %v1052 = vunpack.c.h.b16 %v962
    %v1053 = vunpack.c.l.b16 %v963
    %v1054 = vunpack.c.h.b16 %v963
    %v1055 = vunpack.c.l.b16 %v964
    %v1056 = vunpack.c.h.b16 %v964
    %v1057 = vunpack.c.l.b16 %v965
    %v1058 = vunpack.c.h.b16 %v965
    %v1059 = vunpack.c.l.b16 %v966
    %v1060 = vunpack.c.h.b16 %v966
    %v1061 = vunpack.c.l.b16 %v967
    %v1062 = vunpack.c.h.b16 %v967
    %v1063 = vunpack.c.l.b16 %v968
    %v1064 = vunpack.c.h.b16 %v968
    %v1065 = vunpack.c.l.b16 %v969
    %v1066 = vunpack.c.h.b16 %v969
    %v1067 = vunpack.c.l.b16 %v970
    %v1068 = vunpack.c.h.b16 %v970
    %v1069 = vunpack.c.l.b16 %v971
    %v1070 = vunpack.c.h.b16 %v971
    %v1071 = vunpack.c.l.b16 %v972
    %v1072 = vunpack.c.h.b16 %v972
    %v1073 = vunpack.c.l.b16 %v973
    %v1074 = vunpack.c.h.b16 %v973
    %v1075 = vunpack.c.l.b16 %v974
    %v1076 = vunpack.c.h.b16 %v974
    %v1077 = vunpack.c.l.b16 %v975
    %v1078 = vunpack.c.h.b16 %v975
    %v1079 = vunpack.c.l.b16 %v976
    %v1080 = vunpack.c.h.b16 %v976
    %v1081 = vunpack.c.l.b16 %v977
    %v1082 = vunpack.c.h.b16 %v977
    %v1083 = vunpack.c.l.b16 %v978
    %v1084 = vunpack.c.h.b16 %v978
    %v1085 = vunpack.c.l.b16 %v979
    %v1086 = vunpack.c.h.b16 %v979
    %v1087 = vunpack.c.l.b16 %v980
    %v1088 = vunpack.c.h.b16 %v980
    %v1089 = vunpack.c.l.b16 %v981
    %v1090 = vunpack.c.h.b16 %v981
    %v1091 = vpack.c.b16 %v1029, %v1027
    %v1092 = vpack.c.b16 %v1030, %v1028
    %v1093 = vpack.c.b16 %v1033, %v1031
    %v1094 = vpack.c.b16 %v1034, %v1032
    %v1095 = vpack.c.b16 %v1037, %v1035
    %v1096 = vpack.c.b16 %v1038, %v1036
    %v1097 = vpack.c.b16 %v1041, %v1039
    %v1098 = vpack.c.b16 %v1042, %v1040
    %v1099 = vpack.c.b16 %v1045, %v1043
    %v1100 = vpack.c.b16 %v1046, %v1044
    %v1101 = vpack.c.b16 %v1049, %v1047
    %v1102 = vpack.c.b16 %v1050, %v1048
    %v1103 = vpack.c.b16 %v1053, %v1051
    %v1104 = vpack.c.b16 %v1054, %v1052
    %v1105 = vpack.c.b16 %v1057, %v1055
    %v1106 = vpack.c.b16 %v1058, %v1056
    %v1107 = vpack.c.b16 %v1061, %v1059
    %v1108 = vpack.c.b16 %v1062, %v1060
    %v1109 = vpack.c.b16 %v1065, %v1063
    %v1110 = vpack.c.b16 %v1066, %v1064
    %v1111 = vpack.c.b16 %v1069, %v1067
    %v1112 = vpack.c.b16 %v1070, %v1068
    %v1113 = vpack.c.b16 %v1073, %v1071
    %v1114 = vpack.c.b16 %v1074, %v1072
    %v1115 = vpack.c.b16 %v1077, %v1075
    %v1116 = vpack.c.b16 %v1078, %v1076
    %v1117 = vpack.c.b16 %v1081, %v1079
    %v1118 = vpack.c.b16 %v1082, %v1080
    %v1119 = vpack.c.b16 %v1085, %v1083
    %v1120 = vpack.c.b16 %v1086, %v1084
    %v1121 = vpack.c.b16 %v1089, %v1087
    %v1122 = vpack.c.b16 %v1090, %v1088
    %1155 = vmatprep.subr.bf16.mxu0 %v1092
    %1156 = vmatpush1.bf16.msra.mxu0 %v1091
    %1157 = vmatprep.subr.bf16.mxu0 %v1094
    %1158 = vmatpush1.bf16.msra.mxu0 %v1093
    %1159 = vmatprep.subr.bf16.mxu0 %v1096
    %1160 = vmatpush1.bf16.msra.mxu0 %v1095
    %1161 = vmatprep.subr.bf16.mxu0 %v1098
    %1162 = vmatpush1.bf16.msra.mxu0 %v1097
    %1163 = vmatprep.subr.bf16.mxu0 %v1100
    %1164 = vmatpush1.bf16.msra.mxu0 %v1099
    %1165 = vmatprep.subr.bf16.mxu0 %v1102
    %1166 = vmatpush1.bf16.msra.mxu0 %v1101
    %1167 = vmatprep.subr.bf16.mxu0 %v1104
    %1168 = vmatpush1.bf16.msra.mxu0 %v1103
    %1169 = vmatprep.subr.bf16.mxu0 %v1106
    %1170 = vmatpush1.bf16.msra.mxu0 %v1105
    %1171 = vmatprep.subr.bf16.mxu0 %v1108
    %1172 = vmatpush1.bf16.msra.mxu0 %v1107
    %1173 = vmatprep.subr.bf16.mxu0 %v1110
    %1174 = vmatpush1.bf16.msra.mxu0 %v1109
    %1175 = vmatprep.subr.bf16.mxu0 %v1112
    %1176 = vmatpush1.bf16.msra.mxu0 %v1111
    %1177 = vmatprep.subr.bf16.mxu0 %v1114
    %1178 = vmatpush1.bf16.msra.mxu0 %v1113
    %1179 = vmatprep.subr.bf16.mxu0 %v1116
    %1180 = vmatpush1.bf16.msra.mxu0 %v1115
    %1181 = vmatprep.subr.bf16.mxu0 %v1118
    %1182 = vmatpush1.bf16.msra.mxu0 %v1117
    %1183 = vmatprep.subr.bf16.mxu0 %v1120
    %1184 = vmatpush1.bf16.msra.mxu0 %v1119
    %1185 = vmatprep.subr.bf16.mxu0 %v1122
    %1186 = vmatpush1.bf16.msra.mxu0 %v1121
    %1187 = vmatprep.mubr.bf16.mxu0 %v949
    %1188 = vmatmul.mubr.bf16.gmra.mrb[0].mxu0 %v948
    %v1189 = vpop.f32.mrb[0].mxu0
    %v1190 = vadd.f32 %v988, %v1189
    %v1191 = vpop.f32.mrb[0].mxu0
    %v1192 = vadd.f32 %v992, %v1191
    %v1193 = vpop.f32.mrb[0].mxu0
    %v1194 = vpop.f32.mrb[0].mxu0
    %1195 = vdwg.mxu0
    %v1196 = vmax.f32 %v1190, 0.0
    %v1197 = vmax.f32 %v1192, 0.0
    %v1198 = vpack.c.bf16 %v1196, %v1196
    %v1199 = vpack.c.bf16 %v1197, %v1197
    %v1200 = vld [vmem:[#allocation2 + $0xe00] sm:$0xf]
    %v1201 = vld [vmem:[#allocation2 + $0xe08] sm:$0xf]
    %v1202 = vld [vmem:[#allocation2 + $0xe10] sm:$0xf]
    %v1203 = vld [vmem:[#allocation2 + $0xe18] sm:$0xf]
    %v1204 = vld [vmem:[#allocation2 + $0xe20] sm:$0xf]
    %v1205 = vld [vmem:[#allocation2 + $0xe28] sm:$0xf]
    %v1206 = vld [vmem:[#allocation2 + $0xe30] sm:$0xf]
    %v1207 = vld [vmem:[#allocation2 + $0xe38] sm:$0xf]
    %v1208 = vld [vmem:[#allocation2 + $0xe40] sm:$0xf]
    %v1209 = vld [vmem:[#allocation2 + $0xe48] sm:$0xf]
    %v1210 = vld [vmem:[#allocation2 + $0xe50] sm:$0xf]
    %v1211 = vld [vmem:[#allocation2 + $0xe58] sm:$0xf]
    %v1212 = vld [vmem:[#allocation2 + $0xe60] sm:$0xf]
    %v1213 = vld [vmem:[#allocation2 + $0xe68] sm:$0xf]
    %v1214 = vld [vmem:[#allocation2 + $0xe70] sm:$0xf]
    %v1215 = vld [vmem:[#allocation2 + $0xe78] sm:$0xf]
    %v1216 = vld [vmem:[#allocation2 + $0xe80] sm:$0xf]
    %v1217 = vld [vmem:[#allocation2 + $0xe88] sm:$0xf]
    %v1218 = vld [vmem:[#allocation2 + $0xe90] sm:$0xf]
    %v1219 = vld [vmem:[#allocation2 + $0xe98] sm:$0xf]
    %v1220 = vld [vmem:[#allocation2 + $0xea0] sm:$0xf]
    %v1221 = vld [vmem:[#allocation2 + $0xea8] sm:$0xf]
    %v1222 = vld [vmem:[#allocation2 + $0xeb0] sm:$0xf]
    %v1223 = vld [vmem:[#allocation2 + $0xeb8] sm:$0xf]
    %v1224 = vld [vmem:[#allocation2 + $0xec0] sm:$0xf]
    %v1225 = vld [vmem:[#allocation2 + $0xec8] sm:$0xf]
    %v1226 = vld [vmem:[#allocation2 + $0xed0] sm:$0xf]
    %v1227 = vld [vmem:[#allocation2 + $0xed8] sm:$0xf]
    %v1228 = vld [vmem:[#allocation2 + $0xee0] sm:$0xf]
    %v1229 = vld [vmem:[#allocation2 + $0xee8] sm:$0xf]
    %v1230 = vld [vmem:[#allocation2 + $0xef0] sm:$0xf]
    %v1231 = vld [vmem:[#allocation2 + $0xef8] sm:$0xf]
    %v1232 = vld [vmem:[#allocation4 + $0x17] ss:$0 sm:$0xff]
    %v1265 = vunpack.c.l.b16 %v1200
    %v1266 = vunpack.c.l.b16 %v1201
    %v1267 = vunpack.c.l.b16 %v1202
    %v1268 = vunpack.c.l.b16 %v1203
    %v1269 = vunpack.c.l.b16 %v1204
    %v1270 = vunpack.c.l.b16 %v1205
    %v1271 = vunpack.c.l.b16 %v1206
    %v1272 = vunpack.c.l.b16 %v1207
    %v1273 = vunpack.c.l.b16 %v1208
    %v1274 = vunpack.c.l.b16 %v1209
    %v1275 = vunpack.c.l.b16 %v1210
    %v1276 = vunpack.c.l.b16 %v1211
    %v1277 = vunpack.c.l.b16 %v1212
    %v1278 = vunpack.c.l.b16 %v1213
    %v1279 = vunpack.c.l.b16 %v1214
    %v1280 = vunpack.c.l.b16 %v1215
    %v1281 = vunpack.c.l.b16 %v1216
    %v1282 = vunpack.c.l.b16 %v1217
    %v1283 = vunpack.c.l.b16 %v1218
    %v1284 = vunpack.c.l.b16 %v1219
    %v1285 = vunpack.c.l.b16 %v1220
    %v1286 = vunpack.c.l.b16 %v1221
    %v1287 = vunpack.c.l.b16 %v1222
    %v1288 = vunpack.c.l.b16 %v1223
    %v1289 = vunpack.c.l.b16 %v1224
    %v1290 = vunpack.c.l.b16 %v1225
    %v1291 = vunpack.c.l.b16 %v1226
    %v1292 = vunpack.c.l.b16 %v1227
    %v1293 = vunpack.c.l.b16 %v1228
    %v1294 = vunpack.c.l.b16 %v1229
    %v1295 = vunpack.c.l.b16 %v1230
    %v1296 = vunpack.c.l.b16 %v1231
    %v1297 = vpack.c.b16 %v1266, %v1265
    %v1298 = vpack.c.b16 %v1268, %v1267
    %v1299 = vpack.c.b16 %v1270, %v1269
    %v1300 = vpack.c.b16 %v1272, %v1271
    %v1301 = vpack.c.b16 %v1274, %v1273
    %v1302 = vpack.c.b16 %v1276, %v1275
    %v1303 = vpack.c.b16 %v1278, %v1277
    %v1304 = vpack.c.b16 %v1280, %v1279
    %v1305 = vpack.c.b16 %v1282, %v1281
    %v1306 = vpack.c.b16 %v1284, %v1283
    %v1307 = vpack.c.b16 %v1286, %v1285
    %v1308 = vpack.c.b16 %v1288, %v1287
    %v1309 = vpack.c.b16 %v1290, %v1289
    %v1310 = vpack.c.b16 %v1292, %v1291
    %v1311 = vpack.c.b16 %v1294, %v1293
    %v1312 = vpack.c.b16 %v1296, %v1295
    %1329 = vmatprep.subr.bf16.mxu0 0
    %1330 = vmatpush1.bf16.msra.mxu0 %v1297
    %1331 = vmatprep.subr.bf16.mxu0 0
    %1332 = vmatpush1.bf16.msra.mxu0 %v1298
    %1333 = vmatprep.subr.bf16.mxu0 0
    %1334 = vmatpush1.bf16.msra.mxu0 %v1299
    %1335 = vmatprep.subr.bf16.mxu0 0
    %1336 = vmatpush1.bf16.msra.mxu0 %v1300
    %1337 = vmatprep.subr.bf16.mxu0 0
    %1338 = vmatpush1.bf16.msra.mxu0 %v1301
    %1339 = vmatprep.subr.bf16.mxu0 0
    %1340 = vmatpush1.bf16.msra.mxu0 %v1302
    %1341 = vmatprep.subr.bf16.mxu0 0
    %1342 = vmatpush1.bf16.msra.mxu0 %v1303
    %1343 = vmatprep.subr.bf16.mxu0 0
    %1344 = vmatpush1.bf16.msra.mxu0 %v1304
    %1345 = vmatprep.subr.bf16.mxu0 0
    %1346 = vmatpush1.bf16.msra.mxu0 %v1305
    %1347 = vmatprep.subr.bf16.mxu0 0
    %1348 = vmatpush1.bf16.msra.mxu0 %v1306
    %1349 = vmatprep.subr.bf16.mxu0 0
    %1350 = vmatpush1.bf16.msra.mxu0 %v1307
    %1351 = vmatprep.subr.bf16.mxu0 0
    %1352 = vmatpush1.bf16.msra.mxu0 %v1308
    %1353 = vmatprep.subr.bf16.mxu0 0
    %1354 = vmatpush1.bf16.msra.mxu0 %v1309
    %1355 = vmatprep.subr.bf16.mxu0 0
    %1356 = vmatpush1.bf16.msra.mxu0 %v1310
    %1357 = vmatprep.subr.bf16.mxu0 0
    %1358 = vmatpush1.bf16.msra.mxu0 %v1311
    %1359 = vmatprep.subr.bf16.mxu0 0
    %1360 = vmatpush1.bf16.msra.mxu0 %v1312
    %1361 = vmatprep.mubr.bf16.mxu0 %v1199
    %1362 = vmatmul.mubr.bf16.gmra.mrb[0].mxu0 %v1198
    %v1363 = vpop.f32.mrb[0].mxu0
    %v1364 = vadd.f32 %v1232, %v1363
    %v1365 = vpop.f32.mrb[0].mxu0
    %v1366 = vpop.f32.mrb[0].mxu0
    %v1367 = vpop.f32.mrb[0].mxu0
    %1368 = vdwg.mxu0
    %v1369 = vtanh.pop %v1364
    %v1370 = vpack.c.bf16 %v1369, %v1369
    %v1371 = vld [vmem:[#allocation2 + $0x80] sm:$0xff]
    %v1372 = vld [vmem:[#allocation2 + $0x88] sm:$0xff]
    %v1373 = vld [vmem:[#allocation2 + $0x90] sm:$0xff]
    %v1374 = vld [vmem:[#allocation2 + $0x98] sm:$0xff]
    %v1375 = vld [vmem:[#allocation2 + $0xa0] sm:$0xff]
    %v1376 = vld [vmem:[#allocation2 + $0xa8] sm:$0xff]
    %v1377 = vld [vmem:[#allocation2 + $0xb0] sm:$0xff]
    %v1378 = vld [vmem:[#allocation2 + $0xb8] sm:$0xff]
    %v1379 = vld [vmem:[#allocation2 + $0xc0] sm:$0xff]
    %v1380 = vld [vmem:[#allocation2 + $0xc8] sm:$0xff]
    %v1381 = vld [vmem:[#allocation2 + $0xd0] sm:$0xff]
    %v1382 = vld [vmem:[#allocation2 + $0xd8] sm:$0xff]
    %v1383 = vld [vmem:[#allocation2 + $0xe0] sm:$0xff]
    %v1384 = vld [vmem:[#allocation2 + $0xe8] sm:$0xff]
    %v1385 = vld [vmem:[#allocation2 + $0xf0] sm:$0xff]
    %v1386 = vld [vmem:[#allocation2 + $0xf8] sm:$0xff]
    %s1387 = scalar_lea.vmem [#allocation4], 1
    %v1388 = vld [vmem:[%s1387] ss:$8 sm:$0x3]
    %v1390 = vlaneseq
    %v1391 = vshrl.u32 %v1390, 7
    %v1392 = vsub.s32 0, %v1391
    %v1393 = vrot.slane %v1388, %v1392
    %v1394 = vlaneseq
    %v1395 = vshrl.u32 %v1394, 7
    %v1396 = vsub.s32 1, %v1395
    %v1397 = vrot.slane %v1388, %v1396
    %v1416 = vunpack.c.l.b16 %v1371
    %v1417 = vunpack.c.h.b16 %v1371
    %v1418 = vunpack.c.l.b16 %v1372
    %v1419 = vunpack.c.h.b16 %v1372
    %v1420 = vunpack.c.l.b16 %v1373
    %v1421 = vunpack.c.h.b16 %v1373
    %v1422 = vunpack.c.l.b16 %v1374
    %v1423 = vunpack.c.h.b16 %v1374
    %v1424 = vunpack.c.l.b16 %v1375
    %v1425 = vunpack.c.h.b16 %v1375
    %v1426 = vunpack.c.l.b16 %v1376
    %v1427 = vunpack.c.h.b16 %v1376
    %v1428 = vunpack.c.l.b16 %v1377
    %v1429 = vunpack.c.h.b16 %v1377
    %v1430 = vunpack.c.l.b16 %v1378
    %v1431 = vunpack.c.h.b16 %v1378
    %v1432 = vunpack.c.l.b16 %v1379
    %v1433 = vunpack.c.h.b16 %v1379
    %v1434 = vunpack.c.l.b16 %v1380
    %v1435 = vunpack.c.h.b16 %v1380
    %v1436 = vunpack.c.l.b16 %v1381
    %v1437 = vunpack.c.h.b16 %v1381
    %v1438 = vunpack.c.l.b16 %v1382
    %v1439 = vunpack.c.h.b16 %v1382
    %v1440 = vunpack.c.l.b16 %v1383
    %v1441 = vunpack.c.h.b16 %v1383
    %v1442 = vunpack.c.l.b16 %v1384
    %v1443 = vunpack.c.h.b16 %v1384
    %v1444 = vunpack.c.l.b16 %v1385
    %v1445 = vunpack.c.h.b16 %v1385
    %v1446 = vunpack.c.l.b16 %v1386
    %v1447 = vunpack.c.h.b16 %v1386
    %v1448 = vpack.c.b16 %v1418, %v1416
    %v1449 = vpack.c.b16 %v1419, %v1417
    %v1450 = vpack.c.b16 %v1422, %v1420
    %v1451 = vpack.c.b16 %v1423, %v1421
    %v1452 = vpack.c.b16 %v1426, %v1424
    %v1453 = vpack.c.b16 %v1427, %v1425
    %v1454 = vpack.c.b16 %v1430, %v1428
    %v1455 = vpack.c.b16 %v1431, %v1429
    %v1456 = vpack.c.b16 %v1434, %v1432
    %v1457 = vpack.c.b16 %v1435, %v1433
    %v1458 = vpack.c.b16 %v1438, %v1436
    %v1459 = vpack.c.b16 %v1439, %v1437
    %v1460 = vpack.c.b16 %v1442, %v1440
    %v1461 = vpack.c.b16 %v1443, %v1441
    %v1462 = vpack.c.b16 %v1446, %v1444
    %v1463 = vpack.c.b16 %v1447, %v1445
    %1480 = vmatprep.subr.bf16.mxu0 %v1449
    %1481 = vmatpush1.bf16.msra.mxu0 %v1448
    %1482 = vmatprep.subr.bf16.mxu0 %v1451
    %1483 = vmatpush1.bf16.msra.mxu0 %v1450
    %1484 = vmatprep.subr.bf16.mxu0 %v1453
    %1485 = vmatpush1.bf16.msra.mxu0 %v1452
    %1486 = vmatprep.subr.bf16.mxu0 %v1455
    %1487 = vmatpush1.bf16.msra.mxu0 %v1454
    %1488 = vmatprep.subr.bf16.mxu0 %v1457
    %1489 = vmatpush1.bf16.msra.mxu0 %v1456
    %1490 = vmatprep.subr.bf16.mxu0 %v1459
    %1491 = vmatpush1.bf16.msra.mxu0 %v1458
    %1492 = vmatprep.subr.bf16.mxu0 %v1461
    %1493 = vmatpush1.bf16.msra.mxu0 %v1460
    %1494 = vmatprep.subr.bf16.mxu0 %v1463
    %1495 = vmatpush1.bf16.msra.mxu0 %v1462
    %1496 = vmatprep.subr.bf16.mxu0 0
    %1497 = vmatpush1.bf16.msra.mxu0 0
    %1498 = vmatprep.subr.bf16.mxu0 0
    %1499 = vmatpush1.bf16.msra.mxu0 0
    %1500 = vmatprep.subr.bf16.mxu0 0
    %1501 = vmatpush1.bf16.msra.mxu0 0
    %1502 = vmatprep.subr.bf16.mxu0 0
    %1503 = vmatpush1.bf16.msra.mxu0 0
    %1504 = vmatprep.subr.bf16.mxu0 0
    %1505 = vmatpush1.bf16.msra.mxu0 0
    %1506 = vmatprep.subr.bf16.mxu0 0
    %1507 = vmatpush1.bf16.msra.mxu0 0
    %1508 = vmatprep.subr.bf16.mxu0 0
    %1509 = vmatpush1.bf16.msra.mxu0 0
    %1510 = vmatprep.subr.bf16.mxu0 0
    %1511 = vmatpush1.bf16.msra.mxu0 0
    %1512 = vmatprep.mubr.bf16.mxu0 0
    %1513 = vmatmul.mubr.bf16.gmra.mrb[0].mxu0 %v1370
    %v1514 = vpop.f32.mrb[0].mxu0
    %v1515 = vadd.f32 %v1393, %v1514
    %v1516 = vpop.f32.mrb[0].mxu0
    %v1517 = vadd.f32 %v1397, %v1516
    %v1518 = vpop.f32.mrb[0].mxu0
    %v1519 = vpop.f32.mrb[0].mxu0
    %1520 = vdwg.mxu0
    %v1521 = vmax.f32 %v1515, 0.0
    %v1522 = vmax.f32 %v1517, 0.0
    %v1523 = vld [vmem:[#allocation2 + $0x100] sm:$0xff]
    %v1524 = vld [vmem:[#allocation2 + $0x108] sm:$0xff]
    %v1525 = vld [vmem:[#allocation2 + $0x110] sm:$0xff]
    %v1526 = vld [vmem:[#allocation2 + $0x118] sm:$0xff]
    %v1527 = vld [vmem:[#allocation2 + $0x120] sm:$0xff]
    %v1528 = vld [vmem:[#allocation2 + $0x128] sm:$0xff]
    %v1529 = vld [vmem:[#allocation2 + $0x130] sm:$0xff]
    %v1530 = vld [vmem:[#allocation2 + $0x138] sm:$0xff]
    %v1531 = vld [vmem:[#allocation2 + $0x140] sm:$0xff]
    %v1532 = vld [vmem:[#allocation2 + $0x148] sm:$0xff]
    %v1533 = vld [vmem:[#allocation2 + $0x150] sm:$0xff]
    %v1534 = vld [vmem:[#allocation2 + $0x158] sm:$0xff]
    %v1535 = vld [vmem:[#allocation2 + $0x160] sm:$0xff]
    %v1536 = vld [vmem:[#allocation2 + $0x168] sm:$0xff]
    %v1537 = vld [vmem:[#allocation2 + $0x170] sm:$0xff]
    %v1538 = vld [vmem:[#allocation2 + $0x178] sm:$0xff]
    %v1539 = vld [vmem:[#allocation2 + $0x180] sm:$0xff]
    %v1540 = vld [vmem:[#allocation2 + $0x188] sm:$0xff]
    %v1541 = vld [vmem:[#allocation2 + $0x190] sm:$0xff]
    %v1542 = vld [vmem:[#allocation2 + $0x198] sm:$0xff]
    %v1543 = vld [vmem:[#allocation2 + $0x1a0] sm:$0xff]
    %v1544 = vld [vmem:[#allocation2 + $0x1a8] sm:$0xff]
    %v1545 = vld [vmem:[#allocation2 + $0x1b0] sm:$0xff]
    %v1546 = vld [vmem:[#allocation2 + $0x1b8] sm:$0xff]
    %v1547 = vld [vmem:[#allocation2 + $0x1c0] sm:$0xff]
    %v1548 = vld [vmem:[#allocation2 + $0x1c8] sm:$0xff]
    %v1549 = vld [vmem:[#allocation2 + $0x1d0] sm:$0xff]
    %v1550 = vld [vmem:[#allocation2 + $0x1d8] sm:$0xff]
    %v1551 = vld [vmem:[#allocation2 + $0x1e0] sm:$0xff]
    %v1552 = vld [vmem:[#allocation2 + $0x1e8] sm:$0xff]
    %v1553 = vld [vmem:[#allocation2 + $0x1f0] sm:$0xff]
    %v1554 = vld [vmem:[#allocation2 + $0x1f8] sm:$0xff]
    %v1571 = vunpack.c.l.b16 %v1539
    %v1572 = vunpack.c.h.b16 %v1539
    %v1573 = vunpack.c.l.b16 %v1540
    %v1574 = vunpack.c.h.b16 %v1540
    %v1575 = vunpack.c.l.b16 %v1541
    %v1576 = vunpack.c.h.b16 %v1541
    %v1577 = vunpack.c.l.b16 %v1542
    %v1578 = vunpack.c.h.b16 %v1542
    %v1579 = vunpack.c.l.b16 %v1543
    %v1580 = vunpack.c.h.b16 %v1543
    %v1581 = vunpack.c.l.b16 %v1544
    %v1582 = vunpack.c.h.b16 %v1544
    %v1583 = vunpack.c.l.b16 %v1545
    %v1584 = vunpack.c.h.b16 %v1545
    %v1585 = vunpack.c.l.b16 %v1546
    %v1586 = vunpack.c.h.b16 %v1546
    %v1587 = vunpack.c.l.b16 %v1547
    %v1588 = vunpack.c.h.b16 %v1547
    %v1589 = vunpack.c.l.b16 %v1548
    %v1590 = vunpack.c.h.b16 %v1548
    %v1591 = vunpack.c.l.b16 %v1549
    %v1592 = vunpack.c.h.b16 %v1549
    %v1593 = vunpack.c.l.b16 %v1550
    %v1594 = vunpack.c.h.b16 %v1550
    %v1595 = vunpack.c.l.b16 %v1551
    %v1596 = vunpack.c.h.b16 %v1551
    %v1597 = vunpack.c.l.b16 %v1552
    %v1598 = vunpack.c.h.b16 %v1552
    %v1599 = vunpack.c.l.b16 %v1553
    %v1600 = vunpack.c.h.b16 %v1553
    %v1601 = vunpack.c.l.b16 %v1554
    %v1602 = vunpack.c.h.b16 %v1554
    %v1603 = vpack.c.b16 %v1573, %v1571
    %v1604 = vpack.c.b16 %v1574, %v1572
    %v1605 = vpack.c.b16 %v1577, %v1575
    %v1606 = vpack.c.b16 %v1578, %v1576
    %v1607 = vpack.c.b16 %v1581, %v1579
    %v1608 = vpack.c.b16 %v1582, %v1580
    %v1609 = vpack.c.b16 %v1585, %v1583
    %v1610 = vpack.c.b16 %v1586, %v1584
    %v1611 = vpack.c.b16 %v1589, %v1587
    %v1612 = vpack.c.b16 %v1590, %v1588
    %v1613 = vpack.c.b16 %v1593, %v1591
    %v1614 = vpack.c.b16 %v1594, %v1592
    %v1615 = vpack.c.b16 %v1597, %v1595
    %v1616 = vpack.c.b16 %v1598, %v1596
    %v1617 = vpack.c.b16 %v1601, %v1599
    %v1618 = vpack.c.b16 %v1602, %v1600
    %1635 = vmatprep.subr.bf16.mxu0 %v1604
    %1636 = vmatpush1.bf16.msra.mxu0 %v1603
    %1637 = vmatprep.subr.bf16.mxu0 %v1606
    %1638 = vmatpush1.bf16.msra.mxu0 %v1605
    %1639 = vmatprep.subr.bf16.mxu0 %v1608
    %1640 = vmatpush1.bf16.msra.mxu0 %v1607
    %1641 = vmatprep.subr.bf16.mxu0 %v1610
    %1642 = vmatpush1.bf16.msra.mxu0 %v1609
    %1643 = vmatprep.subr.bf16.mxu0 %v1612
    %1644 = vmatpush1.bf16.msra.mxu0 %v1611
    %1645 = vmatprep.subr.bf16.mxu0 %v1614
    %1646 = vmatpush1.bf16.msra.mxu0 %v1613
    %1647 = vmatprep.subr.bf16.mxu0 %v1616
    %1648 = vmatpush1.bf16.msra.mxu0 %v1615
    %1649 = vmatprep.subr.bf16.mxu0 %v1618
    %1650 = vmatpush1.bf16.msra.mxu0 %v1617
    %1651 = vmatprep.subr.bf16.mxu0 0
    %1652 = vmatpush1.bf16.msra.mxu0 0
    %1653 = vmatprep.subr.bf16.mxu0 0
    %1654 = vmatpush1.bf16.msra.mxu0 0
    %1655 = vmatprep.subr.bf16.mxu0 0
    %1656 = vmatpush1.bf16.msra.mxu0 0
    %1657 = vmatprep.subr.bf16.mxu0 0
    %1658 = vmatpush1.bf16.msra.mxu0 0
    %1659 = vmatprep.subr.bf16.mxu0 0
    %1660 = vmatpush1.bf16.msra.mxu0 0
    %1661 = vmatprep.subr.bf16.mxu0 0
    %1662 = vmatpush1.bf16.msra.mxu0 0
    %1663 = vmatprep.subr.bf16.mxu0 0
    %1664 = vmatpush1.bf16.msra.mxu0 0
    %1665 = vmatprep.subr.bf16.mxu0 0
    %1666 = vmatpush1.bf16.msra.mxu0 0
    %1667 = vmatprep.mubr.bf16.mxu0 0
    %1668 = vmatmul.mubr.bf16.gmra.mrb[0].mxu0 %v1370
    %v1669 = vpop.f32.mrb[0].mxu0
    %v1670 = vadd.f32 0.0, %v1669
    %v1671 = vpop.f32.mrb[0].mxu0
    %v1672 = vadd.f32 0.0, %v1671
    %v1673 = vpop.f32.mrb[0].mxu0
    %v1674 = vpop.f32.mrb[0].mxu0
    %1675 = vdwg.mxu0
    %v1692 = vunpack.c.l.b16 %v1523
    %v1693 = vunpack.c.h.b16 %v1523
    %v1694 = vunpack.c.l.b16 %v1524
    %v1695 = vunpack.c.h.b16 %v1524
    %v1696 = vunpack.c.l.b16 %v1525
    %v1697 = vunpack.c.h.b16 %v1525
    %v1698 = vunpack.c.l.b16 %v1526
    %v1699 = vunpack.c.h.b16 %v1526
    %v1700 = vunpack.c.l.b16 %v1527
    %v1701 = vunpack.c.h.b16 %v1527
    %v1702 = vunpack.c.l.b16 %v1528
    %v1703 = vunpack.c.h.b16 %v1528
    %v1704 = vunpack.c.l.b16 %v1529
    %v1705 = vunpack.c.h.b16 %v1529
    %v1706 = vunpack.c.l.b16 %v1530
    %v1707 = vunpack.c.h.b16 %v1530
    %v1708 = vunpack.c.l.b16 %v1531
    %v1709 = vunpack.c.h.b16 %v1531
    %v1710 = vunpack.c.l.b16 %v1532
    %v1711 = vunpack.c.h.b16 %v1532
    %v1712 = vunpack.c.l.b16 %v1533
    %v1713 = vunpack.c.h.b16 %v1533
    %v1714 = vunpack.c.l.b16 %v1534
    %v1715 = vunpack.c.h.b16 %v1534
    %v1716 = vunpack.c.l.b16 %v1535
    %v1717 = vunpack.c.h.b16 %v1535
    %v1718 = vunpack.c.l.b16 %v1536
    %v1719 = vunpack.c.h.b16 %v1536
    %v1720 = vunpack.c.l.b16 %v1537
    %v1721 = vunpack.c.h.b16 %v1537
    %v1722 = vunpack.c.l.b16 %v1538
    %v1723 = vunpack.c.h.b16 %v1538
    %v1724 = vpack.c.b16 %v1694, %v1692
    %v1725 = vpack.c.b16 %v1695, %v1693
    %v1726 = vpack.c.b16 %v1698, %v1696
    %v1727 = vpack.c.b16 %v1699, %v1697
    %v1728 = vpack.c.b16 %v1702, %v1700
    %v1729 = vpack.c.b16 %v1703, %v1701
    %v1730 = vpack.c.b16 %v1706, %v1704
    %v1731 = vpack.c.b16 %v1707, %v1705
    %v1732 = vpack.c.b16 %v1710, %v1708
    %v1733 = vpack.c.b16 %v1711, %v1709
    %v1734 = vpack.c.b16 %v1714, %v1712
    %v1735 = vpack.c.b16 %v1715, %v1713
    %v1736 = vpack.c.b16 %v1718, %v1716
    %v1737 = vpack.c.b16 %v1719, %v1717
    %v1738 = vpack.c.b16 %v1722, %v1720
    %v1739 = vpack.c.b16 %v1723, %v1721
    %1756 = vmatprep.subr.bf16.mxu0 %v1725
    %1757 = vmatpush1.bf16.msra.mxu0 %v1724
    %1758 = vmatprep.subr.bf16.mxu0 %v1727
    %1759 = vmatpush1.bf16.msra.mxu0 %v1726
    %1760 = vmatprep.subr.bf16.mxu0 %v1729
    %1761 = vmatpush1.bf16.msra.mxu0 %v1728
    %1762 = vmatprep.subr.bf16.mxu0 %v1731
    %1763 = vmatpush1.bf16.msra.mxu0 %v1730
    %1764 = vmatprep.subr.bf16.mxu0 %v1733
    %1765 = vmatpush1.bf16.msra.mxu0 %v1732
    %1766 = vmatprep.subr.bf16.mxu0 %v1735
    %1767 = vmatpush1.bf16.msra.mxu0 %v1734
    %1768 = vmatprep.subr.bf16.mxu0 %v1737
    %1769 = vmatpush1.bf16.msra.mxu0 %v1736
    %1770 = vmatprep.subr.bf16.mxu0 %v1739
    %1771 = vmatpush1.bf16.msra.mxu0 %v1738
    %1772 = vmatprep.subr.bf16.mxu0 0
    %1773 = vmatpush1.bf16.msra.mxu0 0
    %1774 = vmatprep.subr.bf16.mxu0 0
    %1775 = vmatpush1.bf16.msra.mxu0 0
    %1776 = vmatprep.subr.bf16.mxu0 0
    %1777 = vmatpush1.bf16.msra.mxu0 0
    %1778 = vmatprep.subr.bf16.mxu0 0
    %1779 = vmatpush1.bf16.msra.mxu0 0
    %1780 = vmatprep.subr.bf16.mxu0 0
    %1781 = vmatpush1.bf16.msra.mxu0 0
    %1782 = vmatprep.subr.bf16.mxu0 0
    %1783 = vmatpush1.bf16.msra.mxu0 0
    %1784 = vmatprep.subr.bf16.mxu0 0
    %1785 = vmatpush1.bf16.msra.mxu0 0
    %1786 = vmatprep.subr.bf16.mxu0 0
    %1787 = vmatpush1.bf16.msra.mxu0 0
    %1788 = vmatprep.mubr.bf16.mxu0 0
    %1789 = vmatmul.mubr.bf16.gmra.mrb[0].mxu0 %v45
    %v1790 = vpop.f32.mrb[0].mxu0
    %v1791 = vadd.f32 %v1670, %v1790
    %v1792 = vpop.f32.mrb[0].mxu0
    %v1793 = vadd.f32 %v1672, %v1792
    %v1794 = vpop.f32.mrb[0].mxu0
    %v1795 = vpop.f32.mrb[0].mxu0
    %1796 = vdwg.mxu0
    %s1797 = scalar_lea.vmem [#allocation4], 2
    %v1798 = vld [vmem:[%s1797] ss:$8 sm:$0x3]
    %v1800 = vlaneseq
    %v1801 = vshrl.u32 %v1800, 7
    %v1802 = vsub.s32 0, %v1801
    %v1803 = vrot.slane %v1798, %v1802
    %v1804 = vlaneseq
    %v1805 = vshrl.u32 %v1804, 7
    %v1806 = vsub.s32 1, %v1805
    %v1807 = vrot.slane %v1798, %v1806
    %v1810 = vadd.f32 %v1791, %v1803
    %v1811 = vadd.f32 %v1793, %v1807
    %v1812 = vmax.f32 %v1810, 0.0
    %v1813 = vmax.f32 %v1811, 0.0
    %v1814 = vpack.c.bf16 %v1521, %v1521
    %v1815 = vpack.c.bf16 %v1522, %v1522
    %v1816 = vld [vmem:[#allocation2 + $0x600] sm:$0xff]
    %v1817 = vld [vmem:[#allocation2 + $0x608] sm:$0xff]
    %v1818 = vld [vmem:[#allocation2 + $0x610] sm:$0xff]
    %v1819 = vld [vmem:[#allocation2 + $0x618] sm:$0xff]
    %v1820 = vld [vmem:[#allocation2 + $0x620] sm:$0xff]
    %v1821 = vld [vmem:[#allocation2 + $0x628] sm:$0xff]
    %v1822 = vld [vmem:[#allocation2 + $0x630] sm:$0xff]
    %v1823 = vld [vmem:[#allocation2 + $0x638] sm:$0xff]
    %v1824 = vld [vmem:[#allocation2 + $0x640] sm:$0xff]
    %v1825 = vld [vmem:[#allocation2 + $0x648] sm:$0xff]
    %v1826 = vld [vmem:[#allocation2 + $0x650] sm:$0xff]
    %v1827 = vld [vmem:[#allocation2 + $0x658] sm:$0xff]
    %v1828 = vld [vmem:[#allocation2 + $0x660] sm:$0xff]
    %v1829 = vld [vmem:[#allocation2 + $0x668] sm:$0xff]
    %v1830 = vld [vmem:[#allocation2 + $0x670] sm:$0xff]
    %v1831 = vld [vmem:[#allocation2 + $0x678] sm:$0xff]
    %v1832 = vld [vmem:[#allocation2 + $0x680] sm:$0xff]
    %v1833 = vld [vmem:[#allocation2 + $0x688] sm:$0xff]
    %v1834 = vld [vmem:[#allocation2 + $0x690] sm:$0xff]
    %v1835 = vld [vmem:[#allocation2 + $0x698] sm:$0xff]
    %v1836 = vld [vmem:[#allocation2 + $0x6a0] sm:$0xff]
    %v1837 = vld [vmem:[#allocation2 + $0x6a8] sm:$0xff]
    %v1838 = vld [vmem:[#allocation2 + $0x6b0] sm:$0xff]
    %v1839 = vld [vmem:[#allocation2 + $0x6b8] sm:$0xff]
    %v1840 = vld [vmem:[#allocation2 + $0x6c0] sm:$0xff]
    %v1841 = vld [vmem:[#allocation2 + $0x6c8] sm:$0xff]
    %v1842 = vld [vmem:[#allocation2 + $0x6d0] sm:$0xff]
    %v1843 = vld [vmem:[#allocation2 + $0x6d8] sm:$0xff]
    %v1844 = vld [vmem:[#allocation2 + $0x6e0] sm:$0xff]
    %v1845 = vld [vmem:[#allocation2 + $0x6e8] sm:$0xff]
    %v1846 = vld [vmem:[#allocation2 + $0x6f0] sm:$0xff]
    %v1847 = vld [vmem:[#allocation2 + $0x6f8] sm:$0xff]
    %s1848 = scalar_lea.vmem [#allocation4], 7
    %v1849 = vld [vmem:[%s1848] ss:$8 sm:$0x3]
    %v1851 = vlaneseq
    %v1852 = vshrl.u32 %v1851, 7
    %v1853 = vsub.s32 0, %v1852
    %v1854 = vrot.slane %v1849, %v1853
    %v1855 = vlaneseq
    %v1856 = vshrl.u32 %v1855, 7
    %v1857 = vsub.s32 1, %v1856
    %v1858 = vrot.slane %v1849, %v1857
    %v1893 = vunpack.c.l.b16 %v1816
    %v1894 = vunpack.c.h.b16 %v1816
    %v1895 = vunpack.c.l.b16 %v1817
    %v1896 = vunpack.c.h.b16 %v1817
    %v1897 = vunpack.c.l.b16 %v1818
    %v1898 = vunpack.c.h.b16 %v1818
    %v1899 = vunpack.c.l.b16 %v1819
    %v1900 = vunpack.c.h.b16 %v1819
    %v1901 = vunpack.c.l.b16 %v1820
    %v1902 = vunpack.c.h.b16 %v1820
    %v1903 = vunpack.c.l.b16 %v1821
    %v1904 = vunpack.c.h.b16 %v1821
    %v1905 = vunpack.c.l.b16 %v1822
    %v1906 = vunpack.c.h.b16 %v1822
    %v1907 = vunpack.c.l.b16 %v1823
    %v1908 = vunpack.c.h.b16 %v1823
    %v1909 = vunpack.c.l.b16 %v1824
    %v1910 = vunpack.c.h.b16 %v1824
    %v1911 = vunpack.c.l.b16 %v1825
    %v1912 = vunpack.c.h.b16 %v1825
    %v1913 = vunpack.c.l.b16 %v1826
    %v1914 = vunpack.c.h.b16 %v1826
    %v1915 = vunpack.c.l.b16 %v1827
    %v1916 = vunpack.c.h.b16 %v1827
    %v1917 = vunpack.c.l.b16 %v1828
    %v1918 = vunpack.c.h.b16 %v1828
    %v1919 = vunpack.c.l.b16 %v1829
    %v1920 = vunpack.c.h.b16 %v1829
    %v1921 = vunpack.c.l.b16 %v1830
    %v1922 = vunpack.c.h.b16 %v1830
    %v1923 = vunpack.c.l.b16 %v1831
    %v1924 = vunpack.c.h.b16 %v1831
    %v1925 = vunpack.c.l.b16 %v1832
    %v1926 = vunpack.c.h.b16 %v1832
    %v1927 = vunpack.c.l.b16 %v1833
    %v1928 = vunpack.c.h.b16 %v1833
    %v1929 = vunpack.c.l.b16 %v1834
    %v1930 = vunpack.c.h.b16 %v1834
    %v1931 = vunpack.c.l.b16 %v1835
    %v1932 = vunpack.c.h.b16 %v1835
    %v1933 = vunpack.c.l.b16 %v1836
    %v1934 = vunpack.c.h.b16 %v1836
    %v1935 = vunpack.c.l.b16 %v1837
    %v1936 = vunpack.c.h.b16 %v1837
    %v1937 = vunpack.c.l.b16 %v1838
    %v1938 = vunpack.c.h.b16 %v1838
    %v1939 = vunpack.c.l.b16 %v1839
    %v1940 = vunpack.c.h.b16 %v1839
    %v1941 = vunpack.c.l.b16 %v1840
    %v1942 = vunpack.c.h.b16 %v1840
    %v1943 = vunpack.c.l.b16 %v1841
    %v1944 = vunpack.c.h.b16 %v1841
    %v1945 = vunpack.c.l.b16 %v1842
    %v1946 = vunpack.c.h.b16 %v1842
    %v1947 = vunpack.c.l.b16 %v1843
    %v1948 = vunpack.c.h.b16 %v1843
    %v1949 = vunpack.c.l.b16 %v1844
    %v1950 = vunpack.c.h.b16 %v1844
    %v1951 = vunpack.c.l.b16 %v1845
    %v1952 = vunpack.c.h.b16 %v1845
    %v1953 = vunpack.c.l.b16 %v1846
    %v1954 = vunpack.c.h.b16 %v1846
    %v1955 = vunpack.c.l.b16 %v1847
    %v1956 = vunpack.c.h.b16 %v1847
    %v1957 = vpack.c.b16 %v1895, %v1893
    %v1958 = vpack.c.b16 %v1896, %v1894
    %v1959 = vpack.c.b16 %v1899, %v1897
    %v1960 = vpack.c.b16 %v1900, %v1898
    %v1961 = vpack.c.b16 %v1903, %v1901
    %v1962 = vpack.c.b16 %v1904, %v1902
    %v1963 = vpack.c.b16 %v1907, %v1905
    %v1964 = vpack.c.b16 %v1908, %v1906
    %v1965 = vpack.c.b16 %v1911, %v1909
    %v1966 = vpack.c.b16 %v1912, %v1910
    %v1967 = vpack.c.b16 %v1915, %v1913
    %v1968 = vpack.c.b16 %v1916, %v1914
    %v1969 = vpack.c.b16 %v1919, %v1917
    %v1970 = vpack.c.b16 %v1920, %v1918
    %v1971 = vpack.c.b16 %v1923, %v1921
    %v1972 = vpack.c.b16 %v1924, %v1922
    %v1973 = vpack.c.b16 %v1927, %v1925
    %v1974 = vpack.c.b16 %v1928, %v1926
    %v1975 = vpack.c.b16 %v1931, %v1929
    %v1976 = vpack.c.b16 %v1932, %v1930
    %v1977 = vpack.c.b16 %v1935, %v1933
    %v1978 = vpack.c.b16 %v1936, %v1934
    %v1979 = vpack.c.b16 %v1939, %v1937
    %v1980 = vpack.c.b16 %v1940, %v1938
    %v1981 = vpack.c.b16 %v1943, %v1941
    %v1982 = vpack.c.b16 %v1944, %v1942
    %v1983 = vpack.c.b16 %v1947, %v1945
    %v1984 = vpack.c.b16 %v1948, %v1946
    %v1985 = vpack.c.b16 %v1951, %v1949
    %v1986 = vpack.c.b16 %v1952, %v1950
    %v1987 = vpack.c.b16 %v1955, %v1953
    %v1988 = vpack.c.b16 %v1956, %v1954
    %2021 = vmatprep.subr.bf16.mxu0 %v1958
    %2022 = vmatpush1.bf16.msra.mxu0 %v1957
    %2023 = vmatprep.subr.bf16.mxu0 %v1960
    %2024 = vmatpush1.bf16.msra.mxu0 %v1959
    %2025 = vmatprep.subr.bf16.mxu0 %v1962
    %2026 = vmatpush1.bf16.msra.mxu0 %v1961
    %2027 = vmatprep.subr.bf16.mxu0 %v1964
    %2028 = vmatpush1.bf16.msra.mxu0 %v1963
    %2029 = vmatprep.subr.bf16.mxu0 %v1966
    %2030 = vmatpush1.bf16.msra.mxu0 %v1965
    %2031 = vmatprep.subr.bf16.mxu0 %v1968
    %2032 = vmatpush1.bf16.msra.mxu0 %v1967
    %2033 = vmatprep.subr.bf16.mxu0 %v1970
    %2034 = vmatpush1.bf16.msra.mxu0 %v1969
    %2035 = vmatprep.subr.bf16.mxu0 %v1972
    %2036 = vmatpush1.bf16.msra.mxu0 %v1971
    %2037 = vmatprep.subr.bf16.mxu0 %v1974
    %2038 = vmatpush1.bf16.msra.mxu0 %v1973
    %2039 = vmatprep.subr.bf16.mxu0 %v1976
    %2040 = vmatpush1.bf16.msra.mxu0 %v1975
    %2041 = vmatprep.subr.bf16.mxu0 %v1978
    %2042 = vmatpush1.bf16.msra.mxu0 %v1977
    %2043 = vmatprep.subr.bf16.mxu0 %v1980
    %2044 = vmatpush1.bf16.msra.mxu0 %v1979
    %2045 = vmatprep.subr.bf16.mxu0 %v1982
    %2046 = vmatpush1.bf16.msra.mxu0 %v1981
    %2047 = vmatprep.subr.bf16.mxu0 %v1984
    %2048 = vmatpush1.bf16.msra.mxu0 %v1983
    %2049 = vmatprep.subr.bf16.mxu0 %v1986
    %2050 = vmatpush1.bf16.msra.mxu0 %v1985
    %2051 = vmatprep.subr.bf16.mxu0 %v1988
    %2052 = vmatpush1.bf16.msra.mxu0 %v1987
    %2053 = vmatprep.mubr.bf16.mxu0 %v1815
    %2054 = vmatmul.mubr.bf16.gmra.mrb[0].mxu0 %v1814
    %v2055 = vpop.f32.mrb[0].mxu0
    %v2056 = vadd.f32 %v1854, %v2055
    %v2057 = vpop.f32.mrb[0].mxu0
    %v2058 = vadd.f32 %v1858, %v2057
    %v2059 = vpop.f32.mrb[0].mxu0
    %v2060 = vpop.f32.mrb[0].mxu0
    %2061 = vdwg.mxu0
    %v2062 = vmax.f32 %v2056, 0.0
    %v2063 = vmax.f32 %v2058, 0.0
    %v2064 = vpack.c.bf16 %v1812, %v1812
    %v2065 = vpack.c.bf16 %v1813, %v1813
    %v2066 = vld [vmem:[#allocation2 + $0xa00] sm:$0xff]
    %v2067 = vld [vmem:[#allocation2 + $0xa08] sm:$0xff]
    %v2068 = vld [vmem:[#allocation2 + $0xa10] sm:$0xff]
    %v2069 = vld [vmem:[#allocation2 + $0xa18] sm:$0xff]
    %v2070 = vld [vmem:[#allocation2 + $0xa20] sm:$0xff]
    %v2071 = vld [vmem:[#allocation2 + $0xa28] sm:$0xff]
    %v2072 = vld [vmem:[#allocation2 + $0xa30] sm:$0xff]
    %v2073 = vld [vmem:[#allocation2 + $0xa38] sm:$0xff]
    %v2074 = vld [vmem:[#allocation2 + $0xa40] sm:$0xff]
    %v2075 = vld [vmem:[#allocation2 + $0xa48] sm:$0xff]
    %v2076 = vld [vmem:[#allocation2 + $0xa50] sm:$0xff]
    %v2077 = vld [vmem:[#allocation2 + $0xa58] sm:$0xff]
    %v2078 = vld [vmem:[#allocation2 + $0xa60] sm:$0xff]
    %v2079 = vld [vmem:[#allocation2 + $0xa68] sm:$0xff]
    %v2080 = vld [vmem:[#allocation2 + $0xa70] sm:$0xff]
    %v2081 = vld [vmem:[#allocation2 + $0xa78] sm:$0xff]
    %v2082 = vld [vmem:[#allocation2 + $0xa80] sm:$0xff]
    %v2083 = vld [vmem:[#allocation2 + $0xa88] sm:$0xff]
    %v2084 = vld [vmem:[#allocation2 + $0xa90] sm:$0xff]
    %v2085 = vld [vmem:[#allocation2 + $0xa98] sm:$0xff]
    %v2086 = vld [vmem:[#allocation2 + $0xaa0] sm:$0xff]
    %v2087 = vld [vmem:[#allocation2 + $0xaa8] sm:$0xff]
    %v2088 = vld [vmem:[#allocation2 + $0xab0] sm:$0xff]
    %v2089 = vld [vmem:[#allocation2 + $0xab8] sm:$0xff]
    %v2090 = vld [vmem:[#allocation2 + $0xac0] sm:$0xff]
    %v2091 = vld [vmem:[#allocation2 + $0xac8] sm:$0xff]
    %v2092 = vld [vmem:[#allocation2 + $0xad0] sm:$0xff]
    %v2093 = vld [vmem:[#allocation2 + $0xad8] sm:$0xff]
    %v2094 = vld [vmem:[#allocation2 + $0xae0] sm:$0xff]
    %v2095 = vld [vmem:[#allocation2 + $0xae8] sm:$0xff]
    %v2096 = vld [vmem:[#allocation2 + $0xaf0] sm:$0xff]
    %v2097 = vld [vmem:[#allocation2 + $0xaf8] sm:$0xff]
    %s2098 = scalar_lea.vmem [#allocation4], 19
    %v2099 = vld [vmem:[%s2098] ss:$8 sm:$0x3]
    %v2101 = vlaneseq
    %v2102 = vshrl.u32 %v2101, 7
    %v2103 = vsub.s32 0, %v2102
    %v2104 = vrot.slane %v2099, %v2103
    %v2105 = vlaneseq
    %v2106 = vshrl.u32 %v2105, 7
    %v2107 = vsub.s32 1, %v2106
    %v2108 = vrot.slane %v2099, %v2107
    %v2143 = vunpack.c.l.b16 %v2066
    %v2144 = vunpack.c.h.b16 %v2066
    %v2145 = vunpack.c.l.b16 %v2067
    %v2146 = vunpack.c.h.b16 %v2067
    %v2147 = vunpack.c.l.b16 %v2068
    %v2148 = vunpack.c.h.b16 %v2068
    %v2149 = vunpack.c.l.b16 %v2069
    %v2150 = vunpack.c.h.b16 %v2069
    %v2151 = vunpack.c.l.b16 %v2070
    %v2152 = vunpack.c.h.b16 %v2070
    %v2153 = vunpack.c.l.b16 %v2071
    %v2154 = vunpack.c.h.b16 %v2071
    %v2155 = vunpack.c.l.b16 %v2072
    %v2156 = vunpack.c.h.b16 %v2072
    %v2157 = vunpack.c.l.b16 %v2073
    %v2158 = vunpack.c.h.b16 %v2073
    %v2159 = vunpack.c.l.b16 %v2074
    %v2160 = vunpack.c.h.b16 %v2074
    %v2161 = vunpack.c.l.b16 %v2075
    %v2162 = vunpack.c.h.b16 %v2075
    %v2163 = vunpack.c.l.b16 %v2076
    %v2164 = vunpack.c.h.b16 %v2076
    %v2165 = vunpack.c.l.b16 %v2077
    %v2166 = vunpack.c.h.b16 %v2077
    %v2167 = vunpack.c.l.b16 %v2078
    %v2168 = vunpack.c.h.b16 %v2078
    %v2169 = vunpack.c.l.b16 %v2079
    %v2170 = vunpack.c.h.b16 %v2079
    %v2171 = vunpack.c.l.b16 %v2080
    %v2172 = vunpack.c.h.b16 %v2080
    %v2173 = vunpack.c.l.b16 %v2081
    %v2174 = vunpack.c.h.b16 %v2081
    %v2175 = vunpack.c.l.b16 %v2082
    %v2176 = vunpack.c.h.b16 %v2082
    %v2177 = vunpack.c.l.b16 %v2083
    %v2178 = vunpack.c.h.b16 %v2083
    %v2179 = vunpack.c.l.b16 %v2084
    %v2180 = vunpack.c.h.b16 %v2084
    %v2181 = vunpack.c.l.b16 %v2085
    %v2182 = vunpack.c.h.b16 %v2085
    %v2183 = vunpack.c.l.b16 %v2086
    %v2184 = vunpack.c.h.b16 %v2086
    %v2185 = vunpack.c.l.b16 %v2087
    %v2186 = vunpack.c.h.b16 %v2087
    %v2187 = vunpack.c.l.b16 %v2088
    %v2188 = vunpack.c.h.b16 %v2088
    %v2189 = vunpack.c.l.b16 %v2089
    %v2190 = vunpack.c.h.b16 %v2089
    %v2191 = vunpack.c.l.b16 %v2090
    %v2192 = vunpack.c.h.b16 %v2090
    %v2193 = vunpack.c.l.b16 %v2091
    %v2194 = vunpack.c.h.b16 %v2091
    %v2195 = vunpack.c.l.b16 %v2092
    %v2196 = vunpack.c.h.b16 %v2092
    %v2197 = vunpack.c.l.b16 %v2093
    %v2198 = vunpack.c.h.b16 %v2093
    %v2199 = vunpack.c.l.b16 %v2094
    %v2200 = vunpack.c.h.b16 %v2094
    %v2201 = vunpack.c.l.b16 %v2095
    %v2202 = vunpack.c.h.b16 %v2095
    %v2203 = vunpack.c.l.b16 %v2096
    %v2204 = vunpack.c.h.b16 %v2096
    %v2205 = vunpack.c.l.b16 %v2097
    %v2206 = vunpack.c.h.b16 %v2097
    %v2207 = vpack.c.b16 %v2145, %v2143
    %v2208 = vpack.c.b16 %v2146, %v2144
    %v2209 = vpack.c.b16 %v2149, %v2147
    %v2210 = vpack.c.b16 %v2150, %v2148
    %v2211 = vpack.c.b16 %v2153, %v2151
    %v2212 = vpack.c.b16 %v2154, %v2152
    %v2213 = vpack.c.b16 %v2157, %v2155
    %v2214 = vpack.c.b16 %v2158, %v2156
    %v2215 = vpack.c.b16 %v2161, %v2159
    %v2216 = vpack.c.b16 %v2162, %v2160
    %v2217 = vpack.c.b16 %v2165, %v2163
    %v2218 = vpack.c.b16 %v2166, %v2164
    %v2219 = vpack.c.b16 %v2169, %v2167
    %v2220 = vpack.c.b16 %v2170, %v2168
    %v2221 = vpack.c.b16 %v2173, %v2171
    %v2222 = vpack.c.b16 %v2174, %v2172
    %v2223 = vpack.c.b16 %v2177, %v2175
    %v2224 = vpack.c.b16 %v2178, %v2176
    %v2225 = vpack.c.b16 %v2181, %v2179
    %v2226 = vpack.c.b16 %v2182, %v2180
    %v2227 = vpack.c.b16 %v2185, %v2183
    %v2228 = vpack.c.b16 %v2186, %v2184
    %v2229 = vpack.c.b16 %v2189, %v2187
    %v2230 = vpack.c.b16 %v2190, %v2188
    %v2231 = vpack.c.b16 %v2193, %v2191
    %v2232 = vpack.c.b16 %v2194, %v2192
    %v2233 = vpack.c.b16 %v2197, %v2195
    %v2234 = vpack.c.b16 %v2198, %v2196
    %v2235 = vpack.c.b16 %v2201, %v2199
    %v2236 = vpack.c.b16 %v2202, %v2200
    %v2237 = vpack.c.b16 %v2205, %v2203
    %v2238 = vpack.c.b16 %v2206, %v2204
    %2271 = vmatprep.subr.bf16.mxu0 %v2208
    %2272 = vmatpush1.bf16.msra.mxu0 %v2207
    %2273 = vmatprep.subr.bf16.mxu0 %v2210
    %2274 = vmatpush1.bf16.msra.mxu0 %v2209
    %2275 = vmatprep.subr.bf16.mxu0 %v2212
    %2276 = vmatpush1.bf16.msra.mxu0 %v2211
    %2277 = vmatprep.subr.bf16.mxu0 %v2214
    %2278 = vmatpush1.bf16.msra.mxu0 %v2213
    %2279 = vmatprep.subr.bf16.mxu0 %v2216
    %2280 = vmatpush1.bf16.msra.mxu0 %v2215
    %2281 = vmatprep.subr.bf16.mxu0 %v2218
    %2282 = vmatpush1.bf16.msra.mxu0 %v2217
    %2283 = vmatprep.subr.bf16.mxu0 %v2220
    %2284 = vmatpush1.bf16.msra.mxu0 %v2219
    %2285 = vmatprep.subr.bf16.mxu0 %v2222
    %2286 = vmatpush1.bf16.msra.mxu0 %v2221
    %2287 = vmatprep.subr.bf16.mxu0 %v2224
    %2288 = vmatpush1.bf16.msra.mxu0 %v2223
    %2289 = vmatprep.subr.bf16.mxu0 %v2226
    %2290 = vmatpush1.bf16.msra.mxu0 %v2225
    %2291 = vmatprep.subr.bf16.mxu0 %v2228
    %2292 = vmatpush1.bf16.msra.mxu0 %v2227
    %2293 = vmatprep.subr.bf16.mxu0 %v2230
    %2294 = vmatpush1.bf16.msra.mxu0 %v2229
    %2295 = vmatprep.subr.bf16.mxu0 %v2232
    %2296 = vmatpush1.bf16.msra.mxu0 %v2231
    %2297 = vmatprep.subr.bf16.mxu0 %v2234
    %2298 = vmatpush1.bf16.msra.mxu0 %v2233
    %2299 = vmatprep.subr.bf16.mxu0 %v2236
    %2300 = vmatpush1.bf16.msra.mxu0 %v2235
    %2301 = vmatprep.subr.bf16.mxu0 %v2238
    %2302 = vmatpush1.bf16.msra.mxu0 %v2237
    %2303 = vmatprep.mubr.bf16.mxu0 %v2065
    %2304 = vmatmul.mubr.bf16.gmra.mrb[0].mxu0 %v2064
    %v2305 = vpop.f32.mrb[0].mxu0
    %v2306 = vadd.f32 %v2104, %v2305
    %v2307 = vpop.f32.mrb[0].mxu0
    %v2308 = vadd.f32 %v2108, %v2307
    %v2309 = vpop.f32.mrb[0].mxu0
    %v2310 = vpop.f32.mrb[0].mxu0
    %2311 = vdwg.mxu0
    %v2312 = vmax.f32 %v2306, 0.0
    %v2313 = vmax.f32 %v2308, 0.0
    %v2314 = vpack.c.bf16 %v2062, %v2062
    %v2315 = vpack.c.bf16 %v2063, %v2063
    %v2316 = vld [vmem:[#allocation2 + $0x700] sm:$0xff]
    %v2317 = vld [vmem:[#allocation2 + $0x708] sm:$0xff]
    %v2318 = vld [vmem:[#allocation2 + $0x710] sm:$0xff]
    %v2319 = vld [vmem:[#allocation2 + $0x718] sm:$0xff]
    %v2320 = vld [vmem:[#allocation2 + $0x720] sm:$0xff]
    %v2321 = vld [vmem:[#allocation2 + $0x728] sm:$0xff]
    %v2322 = vld [vmem:[#allocation2 + $0x730] sm:$0xff]
    %v2323 = vld [vmem:[#allocation2 + $0x738] sm:$0xff]
    %v2324 = vld [vmem:[#allocation2 + $0x740] sm:$0xff]
    %v2325 = vld [vmem:[#allocation2 + $0x748] sm:$0xff]
    %v2326 = vld [vmem:[#allocation2 + $0x750] sm:$0xff]
    %v2327 = vld [vmem:[#allocation2 + $0x758] sm:$0xff]
    %v2328 = vld [vmem:[#allocation2 + $0x760] sm:$0xff]
    %v2329 = vld [vmem:[#allocation2 + $0x768] sm:$0xff]
    %v2330 = vld [vmem:[#allocation2 + $0x770] sm:$0xff]
    %v2331 = vld [vmem:[#allocation2 + $0x778] sm:$0xff]
    %v2332 = vld [vmem:[#allocation2 + $0x780] sm:$0xff]
    %v2333 = vld [vmem:[#allocation2 + $0x788] sm:$0xff]
    %v2334 = vld [vmem:[#allocation2 + $0x790] sm:$0xff]
    %v2335 = vld [vmem:[#allocation2 + $0x798] sm:$0xff]
    %v2336 = vld [vmem:[#allocation2 + $0x7a0] sm:$0xff]
    %v2337 = vld [vmem:[#allocation2 + $0x7a8] sm:$0xff]
    %v2338 = vld [vmem:[#allocation2 + $0x7b0] sm:$0xff]
    %v2339 = vld [vmem:[#allocation2 + $0x7b8] sm:$0xff]
    %v2340 = vld [vmem:[#allocation2 + $0x7c0] sm:$0xff]
    %v2341 = vld [vmem:[#allocation2 + $0x7c8] sm:$0xff]
    %v2342 = vld [vmem:[#allocation2 + $0x7d0] sm:$0xff]
    %v2343 = vld [vmem:[#allocation2 + $0x7d8] sm:$0xff]
    %v2344 = vld [vmem:[#allocation2 + $0x7e0] sm:$0xff]
    %v2345 = vld [vmem:[#allocation2 + $0x7e8] sm:$0xff]
    %v2346 = vld [vmem:[#allocation2 + $0x7f0] sm:$0xff]
    %v2347 = vld [vmem:[#allocation2 + $0x7f8] sm:$0xff]
    %s2348 = scalar_lea.vmem [#allocation4], 16
    %v2349 = vld [vmem:[%s2348] ss:$8 sm:$0x3]
    %v2351 = vlaneseq
    %v2352 = vshrl.u32 %v2351, 7
    %v2353 = vsub.s32 0, %v2352
    %v2354 = vrot.slane %v2349, %v2353
    %v2355 = vlaneseq
    %v2356 = vshrl.u32 %v2355, 7
    %v2357 = vsub.s32 1, %v2356
    %v2358 = vrot.slane %v2349, %v2357
    %v2393 = vunpack.c.l.b16 %v2316
    %v2394 = vunpack.c.h.b16 %v2316
    %v2395 = vunpack.c.l.b16 %v2317
    %v2396 = vunpack.c.h.b16 %v2317
    %v2397 = vunpack.c.l.b16 %v2318
    %v2398 = vunpack.c.h.b16 %v2318
    %v2399 = vunpack.c.l.b16 %v2319
    %v2400 = vunpack.c.h.b16 %v2319
    %v2401 = vunpack.c.l.b16 %v2320
    %v2402 = vunpack.c.h.b16 %v2320
    %v2403 = vunpack.c.l.b16 %v2321
    %v2404 = vunpack.c.h.b16 %v2321
    %v2405 = vunpack.c.l.b16 %v2322
    %v2406 = vunpack.c.h.b16 %v2322
    %v2407 = vunpack.c.l.b16 %v2323
    %v2408 = vunpack.c.h.b16 %v2323
    %v2409 = vunpack.c.l.b16 %v2324
    %v2410 = vunpack.c.h.b16 %v2324
    %v2411 = vunpack.c.l.b16 %v2325
    %v2412 = vunpack.c.h.b16 %v2325
    %v2413 = vunpack.c.l.b16 %v2326
    %v2414 = vunpack.c.h.b16 %v2326
    %v2415 = vunpack.c.l.b16 %v2327
    %v2416 = vunpack.c.h.b16 %v2327
    %v2417 = vunpack.c.l.b16 %v2328
    %v2418 = vunpack.c.h.b16 %v2328
    %v2419 = vunpack.c.l.b16 %v2329
    %v2420 = vunpack.c.h.b16 %v2329
    %v2421 = vunpack.c.l.b16 %v2330
    %v2422 = vunpack.c.h.b16 %v2330
    %v2423 = vunpack.c.l.b16 %v2331
    %v2424 = vunpack.c.h.b16 %v2331
    %v2425 = vunpack.c.l.b16 %v2332
    %v2426 = vunpack.c.h.b16 %v2332
    %v2427 = vunpack.c.l.b16 %v2333
    %v2428 = vunpack.c.h.b16 %v2333
    %v2429 = vunpack.c.l.b16 %v2334
    %v2430 = vunpack.c.h.b16 %v2334
    %v2431 = vunpack.c.l.b16 %v2335
    %v2432 = vunpack.c.h.b16 %v2335
    %v2433 = vunpack.c.l.b16 %v2336
    %v2434 = vunpack.c.h.b16 %v2336
    %v2435 = vunpack.c.l.b16 %v2337
    %v2436 = vunpack.c.h.b16 %v2337
    %v2437 = vunpack.c.l.b16 %v2338
    %v2438 = vunpack.c.h.b16 %v2338
    %v2439 = vunpack.c.l.b16 %v2339
    %v2440 = vunpack.c.h.b16 %v2339
    %v2441 = vunpack.c.l.b16 %v2340
    %v2442 = vunpack.c.h.b16 %v2340
    %v2443 = vunpack.c.l.b16 %v2341
    %v2444 = vunpack.c.h.b16 %v2341
    %v2445 = vunpack.c.l.b16 %v2342
    %v2446 = vunpack.c.h.b16 %v2342
    %v2447 = vunpack.c.l.b16 %v2343
    %v2448 = vunpack.c.h.b16 %v2343
    %v2449 = vunpack.c.l.b16 %v2344
    %v2450 = vunpack.c.h.b16 %v2344
    %v2451 = vunpack.c.l.b16 %v2345
    %v2452 = vunpack.c.h.b16 %v2345
    %v2453 = vunpack.c.l.b16 %v2346
    %v2454 = vunpack.c.h.b16 %v2346
    %v2455 = vunpack.c.l.b16 %v2347
    %v2456 = vunpack.c.h.b16 %v2347
    %v2457 = vpack.c.b16 %v2395, %v2393
    %v2458 = vpack.c.b16 %v2396, %v2394
    %v2459 = vpack.c.b16 %v2399, %v2397
    %v2460 = vpack.c.b16 %v2400, %v2398
    %v2461 = vpack.c.b16 %v2403, %v2401
    %v2462 = vpack.c.b16 %v2404, %v2402
    %v2463 = vpack.c.b16 %v2407, %v2405
    %v2464 = vpack.c.b16 %v2408, %v2406
    %v2465 = vpack.c.b16 %v2411, %v2409
    %v2466 = vpack.c.b16 %v2412, %v2410
    %v2467 = vpack.c.b16 %v2415, %v2413
    %v2468 = vpack.c.b16 %v2416, %v2414
    %v2469 = vpack.c.b16 %v2419, %v2417
    %v2470 = vpack.c.b16 %v2420, %v2418
    %v2471 = vpack.c.b16 %v2423, %v2421
    %v2472 = vpack.c.b16 %v2424, %v2422
    %v2473 = vpack.c.b16 %v2427, %v2425
    %v2474 = vpack.c.b16 %v2428, %v2426
    %v2475 = vpack.c.b16 %v2431, %v2429
    %v2476 = vpack.c.b16 %v2432, %v2430
    %v2477 = vpack.c.b16 %v2435, %v2433
    %v2478 = vpack.c.b16 %v2436, %v2434
    %v2479 = vpack.c.b16 %v2439, %v2437
    %v2480 = vpack.c.b16 %v2440, %v2438
    %v2481 = vpack.c.b16 %v2443, %v2441
    %v2482 = vpack.c.b16 %v2444, %v2442
    %v2483 = vpack.c.b16 %v2447, %v2445
    %v2484 = vpack.c.b16 %v2448, %v2446
    %v2485 = vpack.c.b16 %v2451, %v2449
    %v2486 = vpack.c.b16 %v2452, %v2450
    %v2487 = vpack.c.b16 %v2455, %v2453
    %v2488 = vpack.c.b16 %v2456, %v2454
    %2521 = vmatprep.subr.bf16.mxu0 %v2458
    %2522 = vmatpush1.bf16.msra.mxu0 %v2457
    %2523 = vmatprep.subr.bf16.mxu0 %v2460
    %2524 = vmatpush1.bf16.msra.mxu0 %v2459
    %2525 = vmatprep.subr.bf16.mxu0 %v2462
    %2526 = vmatpush1.bf16.msra.mxu0 %v2461
    %2527 = vmatprep.subr.bf16.mxu0 %v2464
    %2528 = vmatpush1.bf16.msra.mxu0 %v2463
    %2529 = vmatprep.subr.bf16.mxu0 %v2466
    %2530 = vmatpush1.bf16.msra.mxu0 %v2465
    %2531 = vmatprep.subr.bf16.mxu0 %v2468
    %2532 = vmatpush1.bf16.msra.mxu0 %v2467
    %2533 = vmatprep.subr.bf16.mxu0 %v2470
    %2534 = vmatpush1.bf16.msra.mxu0 %v2469
    %2535 = vmatprep.subr.bf16.mxu0 %v2472
    %2536 = vmatpush1.bf16.msra.mxu0 %v2471
    %2537 = vmatprep.subr.bf16.mxu0 %v2474
    %2538 = vmatpush1.bf16.msra.mxu0 %v2473
    %2539 = vmatprep.subr.bf16.mxu0 %v2476
    %2540 = vmatpush1.bf16.msra.mxu0 %v2475
    %2541 = vmatprep.subr.bf16.mxu0 %v2478
    %2542 = vmatpush1.bf16.msra.mxu0 %v2477
    %2543 = vmatprep.subr.bf16.mxu0 %v2480
    %2544 = vmatpush1.bf16.msra.mxu0 %v2479
    %2545 = vmatprep.subr.bf16.mxu0 %v2482
    %2546 = vmatpush1.bf16.msra.mxu0 %v2481
    %2547 = vmatprep.subr.bf16.mxu0 %v2484
    %2548 = vmatpush1.bf16.msra.mxu0 %v2483
    %2549 = vmatprep.subr.bf16.mxu0 %v2486
    %2550 = vmatpush1.bf16.msra.mxu0 %v2485
    %2551 = vmatprep.subr.bf16.mxu0 %v2488
    %2552 = vmatpush1.bf16.msra.mxu0 %v2487
    %2553 = vmatprep.mubr.bf16.mxu0 %v2315
    %2554 = vmatmul.mubr.bf16.gmra.mrb[0].mxu0 %v2314
    %v2555 = vpop.f32.mrb[0].mxu0
    %v2556 = vadd.f32 %v2354, %v2555
    %v2557 = vpop.f32.mrb[0].mxu0
    %v2558 = vadd.f32 %v2358, %v2557
    %v2559 = vpop.f32.mrb[0].mxu0
    %v2560 = vpop.f32.mrb[0].mxu0
    %2561 = vdwg.mxu0
    %v2562 = vmax.f32 %v2556, 0.0
    %v2563 = vmax.f32 %v2558, 0.0
    %v2564 = vpack.c.bf16 %v2312, %v2312
    %v2565 = vpack.c.bf16 %v2313, %v2313
    %v2566 = vld [vmem:[#allocation2 + $0xb00] sm:$0xff]
    %v2567 = vld [vmem:[#allocation2 + $0xb08] sm:$0xff]
    %v2568 = vld [vmem:[#allocation2 + $0xb10] sm:$0xff]
    %v2569 = vld [vmem:[#allocation2 + $0xb18] sm:$0xff]
    %v2570 = vld [vmem:[#allocation2 + $0xb20] sm:$0xff]
    %v2571 = vld [vmem:[#allocation2 + $0xb28] sm:$0xff]
    %v2572 = vld [vmem:[#allocation2 + $0xb30] sm:$0xff]
    %v2573 = vld [vmem:[#allocation2 + $0xb38] sm:$0xff]
    %v2574 = vld [vmem:[#allocation2 + $0xb40] sm:$0xff]
    %v2575 = vld [vmem:[#allocation2 + $0xb48] sm:$0xff]
    %v2576 = vld [vmem:[#allocation2 + $0xb50] sm:$0xff]
    %v2577 = vld [vmem:[#allocation2 + $0xb58] sm:$0xff]
    %v2578 = vld [vmem:[#allocation2 + $0xb60] sm:$0xff]
    %v2579 = vld [vmem:[#allocation2 + $0xb68] sm:$0xff]
    %v2580 = vld [vmem:[#allocation2 + $0xb70] sm:$0xff]
    %v2581 = vld [vmem:[#allocation2 + $0xb78] sm:$0xff]
    %v2582 = vld [vmem:[#allocation2 + $0xb80] sm:$0xff]
    %v2583 = vld [vmem:[#allocation2 + $0xb88] sm:$0xff]
    %v2584 = vld [vmem:[#allocation2 + $0xb90] sm:$0xff]
    %v2585 = vld [vmem:[#allocation2 + $0xb98] sm:$0xff]
    %v2586 = vld [vmem:[#allocation2 + $0xba0] sm:$0xff]
    %v2587 = vld [vmem:[#allocation2 + $0xba8] sm:$0xff]
    %v2588 = vld [vmem:[#allocation2 + $0xbb0] sm:$0xff]
    %v2589 = vld [vmem:[#allocation2 + $0xbb8] sm:$0xff]
    %v2590 = vld [vmem:[#allocation2 + $0xbc0] sm:$0xff]
    %v2591 = vld [vmem:[#allocation2 + $0xbc8] sm:$0xff]
    %v2592 = vld [vmem:[#allocation2 + $0xbd0] sm:$0xff]
    %v2593 = vld [vmem:[#allocation2 + $0xbd8] sm:$0xff]
    %v2594 = vld [vmem:[#allocation2 + $0xbe0] sm:$0xff]
    %v2595 = vld [vmem:[#allocation2 + $0xbe8] sm:$0xff]
    %v2596 = vld [vmem:[#allocation2 + $0xbf0] sm:$0xff]
    %v2597 = vld [vmem:[#allocation2 + $0xbf8] sm:$0xff]
    %s2598 = scalar_lea.vmem [#allocation4], 20
    %v2599 = vld [vmem:[%s2598] ss:$8 sm:$0x3]
    %v2601 = vlaneseq
    %v2602 = vshrl.u32 %v2601, 7
    %v2603 = vsub.s32 0, %v2602
    %v2604 = vrot.slane %v2599, %v2603
    %v2605 = vlaneseq
    %v2606 = vshrl.u32 %v2605, 7
    %v2607 = vsub.s32 1, %v2606
    %v2608 = vrot.slane %v2599, %v2607
    %v2643 = vunpack.c.l.b16 %v2566
    %v2644 = vunpack.c.h.b16 %v2566
    %v2645 = vunpack.c.l.b16 %v2567
    %v2646 = vunpack.c.h.b16 %v2567
    %v2647 = vunpack.c.l.b16 %v2568
    %v2648 = vunpack.c.h.b16 %v2568
    %v2649 = vunpack.c.l.b16 %v2569
    %v2650 = vunpack.c.h.b16 %v2569
    %v2651 = vunpack.c.l.b16 %v2570
    %v2652 = vunpack.c.h.b16 %v2570
    %v2653 = vunpack.c.l.b16 %v2571
    %v2654 = vunpack.c.h.b16 %v2571
    %v2655 = vunpack.c.l.b16 %v2572
    %v2656 = vunpack.c.h.b16 %v2572
    %v2657 = vunpack.c.l.b16 %v2573
    %v2658 = vunpack.c.h.b16 %v2573
    %v2659 = vunpack.c.l.b16 %v2574
    %v2660 = vunpack.c.h.b16 %v2574
    %v2661 = vunpack.c.l.b16 %v2575
    %v2662 = vunpack.c.h.b16 %v2575
    %v2663 = vunpack.c.l.b16 %v2576
    %v2664 = vunpack.c.h.b16 %v2576
    %v2665 = vunpack.c.l.b16 %v2577
    %v2666 = vunpack.c.h.b16 %v2577
    %v2667 = vunpack.c.l.b16 %v2578
    %v2668 = vunpack.c.h.b16 %v2578
    %v2669 = vunpack.c.l.b16 %v2579
    %v2670 = vunpack.c.h.b16 %v2579
    %v2671 = vunpack.c.l.b16 %v2580
    %v2672 = vunpack.c.h.b16 %v2580
    %v2673 = vunpack.c.l.b16 %v2581
    %v2674 = vunpack.c.h.b16 %v2581
    %v2675 = vunpack.c.l.b16 %v2582
    %v2676 = vunpack.c.h.b16 %v2582
    %v2677 = vunpack.c.l.b16 %v2583
    %v2678 = vunpack.c.h.b16 %v2583
    %v2679 = vunpack.c.l.b16 %v2584
    %v2680 = vunpack.c.h.b16 %v2584
    %v2681 = vunpack.c.l.b16 %v2585
    %v2682 = vunpack.c.h.b16 %v2585
    %v2683 = vunpack.c.l.b16 %v2586
    %v2684 = vunpack.c.h.b16 %v2586
    %v2685 = vunpack.c.l.b16 %v2587
    %v2686 = vunpack.c.h.b16 %v2587
    %v2687 = vunpack.c.l.b16 %v2588
    %v2688 = vunpack.c.h.b16 %v2588
    %v2689 = vunpack.c.l.b16 %v2589
    %v2690 = vunpack.c.h.b16 %v2589
    %v2691 = vunpack.c.l.b16 %v2590
    %v2692 = vunpack.c.h.b16 %v2590
    %v2693 = vunpack.c.l.b16 %v2591
    %v2694 = vunpack.c.h.b16 %v2591
    %v2695 = vunpack.c.l.b16 %v2592
    %v2696 = vunpack.c.h.b16 %v2592
    %v2697 = vunpack.c.l.b16 %v2593
    %v2698 = vunpack.c.h.b16 %v2593
    %v2699 = vunpack.c.l.b16 %v2594
    %v2700 = vunpack.c.h.b16 %v2594
    %v2701 = vunpack.c.l.b16 %v2595
    %v2702 = vunpack.c.h.b16 %v2595
    %v2703 = vunpack.c.l.b16 %v2596
    %v2704 = vunpack.c.h.b16 %v2596
    %v2705 = vunpack.c.l.b16 %v2597
    %v2706 = vunpack.c.h.b16 %v2597
    %v2707 = vpack.c.b16 %v2645, %v2643
    %v2708 = vpack.c.b16 %v2646, %v2644
    %v2709 = vpack.c.b16 %v2649, %v2647
    %v2710 = vpack.c.b16 %v2650, %v2648
    %v2711 = vpack.c.b16 %v2653, %v2651
    %v2712 = vpack.c.b16 %v2654, %v2652
    %v2713 = vpack.c.b16 %v2657, %v2655
    %v2714 = vpack.c.b16 %v2658, %v2656
    %v2715 = vpack.c.b16 %v2661, %v2659
    %v2716 = vpack.c.b16 %v2662, %v2660
    %v2717 = vpack.c.b16 %v2665, %v2663
    %v2718 = vpack.c.b16 %v2666, %v2664
    %v2719 = vpack.c.b16 %v2669, %v2667
    %v2720 = vpack.c.b16 %v2670, %v2668
    %v2721 = vpack.c.b16 %v2673, %v2671
    %v2722 = vpack.c.b16 %v2674, %v2672
    %v2723 = vpack.c.b16 %v2677, %v2675
    %v2724 = vpack.c.b16 %v2678, %v2676
    %v2725 = vpack.c.b16 %v2681, %v2679
    %v2726 = vpack.c.b16 %v2682, %v2680
    %v2727 = vpack.c.b16 %v2685, %v2683
    %v2728 = vpack.c.b16 %v2686, %v2684
    %v2729 = vpack.c.b16 %v2689, %v2687
    %v2730 = vpack.c.b16 %v2690, %v2688
    %v2731 = vpack.c.b16 %v2693, %v2691
    %v2732 = vpack.c.b16 %v2694, %v2692
    %v2733 = vpack.c.b16 %v2697, %v2695
    %v2734 = vpack.c.b16 %v2698, %v2696
    %v2735 = vpack.c.b16 %v2701, %v2699
    %v2736 = vpack.c.b16 %v2702, %v2700
    %v2737 = vpack.c.b16 %v2705, %v2703
    %v2738 = vpack.c.b16 %v2706, %v2704
    %2771 = vmatprep.subr.bf16.mxu0 %v2708
    %2772 = vmatpush1.bf16.msra.mxu0 %v2707
    %2773 = vmatprep.subr.bf16.mxu0 %v2710
    %2774 = vmatpush1.bf16.msra.mxu0 %v2709
    %2775 = vmatprep.subr.bf16.mxu0 %v2712
    %2776 = vmatpush1.bf16.msra.mxu0 %v2711
    %2777 = vmatprep.subr.bf16.mxu0 %v2714
    %2778 = vmatpush1.bf16.msra.mxu0 %v2713
    %2779 = vmatprep.subr.bf16.mxu0 %v2716
    %2780 = vmatpush1.bf16.msra.mxu0 %v2715
    %2781 = vmatprep.subr.bf16.mxu0 %v2718
    %2782 = vmatpush1.bf16.msra.mxu0 %v2717
    %2783 = vmatprep.subr.bf16.mxu0 %v2720
    %2784 = vmatpush1.bf16.msra.mxu0 %v2719
    %2785 = vmatprep.subr.bf16.mxu0 %v2722
    %2786 = vmatpush1.bf16.msra.mxu0 %v2721
    %2787 = vmatprep.subr.bf16.mxu0 %v2724
    %2788 = vmatpush1.bf16.msra.mxu0 %v2723
    %2789 = vmatprep.subr.bf16.mxu0 %v2726
    %2790 = vmatpush1.bf16.msra.mxu0 %v2725
    %2791 = vmatprep.subr.bf16.mxu0 %v2728
    %2792 = vmatpush1.bf16.msra.mxu0 %v2727
    %2793 = vmatprep.subr.bf16.mxu0 %v2730
    %2794 = vmatpush1.bf16.msra.mxu0 %v2729
    %2795 = vmatprep.subr.bf16.mxu0 %v2732
    %2796 = vmatpush1.bf16.msra.mxu0 %v2731
    %2797 = vmatprep.subr.bf16.mxu0 %v2734
    %2798 = vmatpush1.bf16.msra.mxu0 %v2733
    %2799 = vmatprep.subr.bf16.mxu0 %v2736
    %2800 = vmatpush1.bf16.msra.mxu0 %v2735
    %2801 = vmatprep.subr.bf16.mxu0 %v2738
    %2802 = vmatpush1.bf16.msra.mxu0 %v2737
    %2803 = vmatprep.mubr.bf16.mxu0 %v2565
    %2804 = vmatmul.mubr.bf16.gmra.mrb[0].mxu0 %v2564
    %v2805 = vpop.f32.mrb[0].mxu0
    %v2806 = vadd.f32 %v2604, %v2805
    %v2807 = vpop.f32.mrb[0].mxu0
    %v2808 = vadd.f32 %v2608, %v2807
    %v2809 = vpop.f32.mrb[0].mxu0
    %v2810 = vpop.f32.mrb[0].mxu0
    %2811 = vdwg.mxu0
    %v2812 = vmax.f32 %v2806, 0.0
    %v2813 = vmax.f32 %v2808, 0.0
    %v2814 = vpack.c.bf16 %v2562, %v2562
    %v2815 = vpack.c.bf16 %v2563, %v2563
    %v2816 = vld [vmem:[#allocation2 + $0x800] sm:$0xff]
    %v2817 = vld [vmem:[#allocation2 + $0x808] sm:$0xff]
    %v2818 = vld [vmem:[#allocation2 + $0x810] sm:$0xff]
    %v2819 = vld [vmem:[#allocation2 + $0x818] sm:$0xff]
    %v2820 = vld [vmem:[#allocation2 + $0x820] sm:$0xff]
    %v2821 = vld [vmem:[#allocation2 + $0x828] sm:$0xff]
    %v2822 = vld [vmem:[#allocation2 + $0x830] sm:$0xff]
    %v2823 = vld [vmem:[#allocation2 + $0x838] sm:$0xff]
    %v2824 = vld [vmem:[#allocation2 + $0x840] sm:$0xff]
    %v2825 = vld [vmem:[#allocation2 + $0x848] sm:$0xff]
    %v2826 = vld [vmem:[#allocation2 + $0x850] sm:$0xff]
    %v2827 = vld [vmem:[#allocation2 + $0x858] sm:$0xff]
    %v2828 = vld [vmem:[#allocation2 + $0x860] sm:$0xff]
    %v2829 = vld [vmem:[#allocation2 + $0x868] sm:$0xff]
    %v2830 = vld [vmem:[#allocation2 + $0x870] sm:$0xff]
    %v2831 = vld [vmem:[#allocation2 + $0x878] sm:$0xff]
    %v2832 = vld [vmem:[#allocation2 + $0x880] sm:$0xff]
    %v2833 = vld [vmem:[#allocation2 + $0x888] sm:$0xff]
    %v2834 = vld [vmem:[#allocation2 + $0x890] sm:$0xff]
    %v2835 = vld [vmem:[#allocation2 + $0x898] sm:$0xff]
    %v2836 = vld [vmem:[#allocation2 + $0x8a0] sm:$0xff]
    %v2837 = vld [vmem:[#allocation2 + $0x8a8] sm:$0xff]
    %v2838 = vld [vmem:[#allocation2 + $0x8b0] sm:$0xff]
    %v2839 = vld [vmem:[#allocation2 + $0x8b8] sm:$0xff]
    %v2840 = vld [vmem:[#allocation2 + $0x8c0] sm:$0xff]
    %v2841 = vld [vmem:[#allocation2 + $0x8c8] sm:$0xff]
    %v2842 = vld [vmem:[#allocation2 + $0x8d0] sm:$0xff]
    %v2843 = vld [vmem:[#allocation2 + $0x8d8] sm:$0xff]
    %v2844 = vld [vmem:[#allocation2 + $0x8e0] sm:$0xff]
    %v2845 = vld [vmem:[#allocation2 + $0x8e8] sm:$0xff]
    %v2846 = vld [vmem:[#allocation2 + $0x8f0] sm:$0xff]
    %v2847 = vld [vmem:[#allocation2 + $0x8f8] sm:$0xff]
    %s2848 = scalar_lea.vmem [#allocation4], 17
    %v2849 = vld [vmem:[%s2848] ss:$8 sm:$0x3]
    %v2851 = vlaneseq
    %v2852 = vshrl.u32 %v2851, 7
    %v2853 = vsub.s32 0, %v2852
    %v2854 = vrot.slane %v2849, %v2853
    %v2855 = vlaneseq
    %v2856 = vshrl.u32 %v2855, 7
    %v2857 = vsub.s32 1, %v2856
    %v2858 = vrot.slane %v2849, %v2857
    %v2893 = vunpack.c.l.b16 %v2816
    %v2894 = vunpack.c.h.b16 %v2816
    %v2895 = vunpack.c.l.b16 %v2817
    %v2896 = vunpack.c.h.b16 %v2817
    %v2897 = vunpack.c.l.b16 %v2818
    %v2898 = vunpack.c.h.b16 %v2818
    %v2899 = vunpack.c.l.b16 %v2819
    %v2900 = vunpack.c.h.b16 %v2819
    %v2901 = vunpack.c.l.b16 %v2820
    %v2902 = vunpack.c.h.b16 %v2820
    %v2903 = vunpack.c.l.b16 %v2821
    %v2904 = vunpack.c.h.b16 %v2821
    %v2905 = vunpack.c.l.b16 %v2822
    %v2906 = vunpack.c.h.b16 %v2822
    %v2907 = vunpack.c.l.b16 %v2823
    %v2908 = vunpack.c.h.b16 %v2823
    %v2909 = vunpack.c.l.b16 %v2824
    %v2910 = vunpack.c.h.b16 %v2824
    %v2911 = vunpack.c.l.b16 %v2825
    %v2912 = vunpack.c.h.b16 %v2825
    %v2913 = vunpack.c.l.b16 %v2826
    %v2914 = vunpack.c.h.b16 %v2826
    %v2915 = vunpack.c.l.b16 %v2827
    %v2916 = vunpack.c.h.b16 %v2827
    %v2917 = vunpack.c.l.b16 %v2828
    %v2918 = vunpack.c.h.b16 %v2828
    %v2919 = vunpack.c.l.b16 %v2829
    %v2920 = vunpack.c.h.b16 %v2829
    %v2921 = vunpack.c.l.b16 %v2830
    %v2922 = vunpack.c.h.b16 %v2830
    %v2923 = vunpack.c.l.b16 %v2831
    %v2924 = vunpack.c.h.b16 %v2831
    %v2925 = vunpack.c.l.b16 %v2832
    %v2926 = vunpack.c.h.b16 %v2832
    %v2927 = vunpack.c.l.b16 %v2833
    %v2928 = vunpack.c.h.b16 %v2833
    %v2929 = vunpack.c.l.b16 %v2834
    %v2930 = vunpack.c.h.b16 %v2834
    %v2931 = vunpack.c.l.b16 %v2835
    %v2932 = vunpack.c.h.b16 %v2835
    %v2933 = vunpack.c.l.b16 %v2836
    %v2934 = vunpack.c.h.b16 %v2836
    %v2935 = vunpack.c.l.b16 %v2837
    %v2936 = vunpack.c.h.b16 %v2837
    %v2937 = vunpack.c.l.b16 %v2838
    %v2938 = vunpack.c.h.b16 %v2838
    %v2939 = vunpack.c.l.b16 %v2839
    %v2940 = vunpack.c.h.b16 %v2839
    %v2941 = vunpack.c.l.b16 %v2840
    %v2942 = vunpack.c.h.b16 %v2840
    %v2943 = vunpack.c.l.b16 %v2841
    %v2944 = vunpack.c.h.b16 %v2841
    %v2945 = vunpack.c.l.b16 %v2842
    %v2946 = vunpack.c.h.b16 %v2842
    %v2947 = vunpack.c.l.b16 %v2843
    %v2948 = vunpack.c.h.b16 %v2843
    %v2949 = vunpack.c.l.b16 %v2844
    %v2950 = vunpack.c.h.b16 %v2844
    %v2951 = vunpack.c.l.b16 %v2845
    %v2952 = vunpack.c.h.b16 %v2845
    %v2953 = vunpack.c.l.b16 %v2846
    %v2954 = vunpack.c.h.b16 %v2846
    %v2955 = vunpack.c.l.b16 %v2847
    %v2956 = vunpack.c.h.b16 %v2847
    %v2957 = vpack.c.b16 %v2895, %v2893
    %v2958 = vpack.c.b16 %v2896, %v2894
    %v2959 = vpack.c.b16 %v2899, %v2897
    %v2960 = vpack.c.b16 %v2900, %v2898
    %v2961 = vpack.c.b16 %v2903, %v2901
    %v2962 = vpack.c.b16 %v2904, %v2902
    %v2963 = vpack.c.b16 %v2907, %v2905
    %v2964 = vpack.c.b16 %v2908, %v2906
    %v2965 = vpack.c.b16 %v2911, %v2909
    %v2966 = vpack.c.b16 %v2912, %v2910
    %v2967 = vpack.c.b16 %v2915, %v2913
    %v2968 = vpack.c.b16 %v2916, %v2914
    %v2969 = vpack.c.b16 %v2919, %v2917
    %v2970 = vpack.c.b16 %v2920, %v2918
    %v2971 = vpack.c.b16 %v2923, %v2921
    %v2972 = vpack.c.b16 %v2924, %v2922
    %v2973 = vpack.c.b16 %v2927, %v2925
    %v2974 = vpack.c.b16 %v2928, %v2926
    %v2975 = vpack.c.b16 %v2931, %v2929
    %v2976 = vpack.c.b16 %v2932, %v2930
    %v2977 = vpack.c.b16 %v2935, %v2933
    %v2978 = vpack.c.b16 %v2936, %v2934
    %v2979 = vpack.c.b16 %v2939, %v2937
    %v2980 = vpack.c.b16 %v2940, %v2938
    %v2981 = vpack.c.b16 %v2943, %v2941
    %v2982 = vpack.c.b16 %v2944, %v2942
    %v2983 = vpack.c.b16 %v2947, %v2945
    %v2984 = vpack.c.b16 %v2948, %v2946
    %v2985 = vpack.c.b16 %v2951, %v2949
    %v2986 = vpack.c.b16 %v2952, %v2950
    %v2987 = vpack.c.b16 %v2955, %v2953
    %v2988 = vpack.c.b16 %v2956, %v2954
    %3021 = vmatprep.subr.bf16.mxu0 %v2958
    %3022 = vmatpush1.bf16.msra.mxu0 %v2957
    %3023 = vmatprep.subr.bf16.mxu0 %v2960
    %3024 = vmatpush1.bf16.msra.mxu0 %v2959
    %3025 = vmatprep.subr.bf16.mxu0 %v2962
    %3026 = vmatpush1.bf16.msra.mxu0 %v2961
    %3027 = vmatprep.subr.bf16.mxu0 %v2964
    %3028 = vmatpush1.bf16.msra.mxu0 %v2963
    %3029 = vmatprep.subr.bf16.mxu0 %v2966
    %3030 = vmatpush1.bf16.msra.mxu0 %v2965
    %3031 = vmatprep.subr.bf16.mxu0 %v2968
    %3032 = vmatpush1.bf16.msra.mxu0 %v2967
    %3033 = vmatprep.subr.bf16.mxu0 %v2970
    %3034 = vmatpush1.bf16.msra.mxu0 %v2969
    %3035 = vmatprep.subr.bf16.mxu0 %v2972
    %3036 = vmatpush1.bf16.msra.mxu0 %v2971
    %3037 = vmatprep.subr.bf16.mxu0 %v2974
    %3038 = vmatpush1.bf16.msra.mxu0 %v2973
    %3039 = vmatprep.subr.bf16.mxu0 %v2976
    %3040 = vmatpush1.bf16.msra.mxu0 %v2975
    %3041 = vmatprep.subr.bf16.mxu0 %v2978
    %3042 = vmatpush1.bf16.msra.mxu0 %v2977
    %3043 = vmatprep.subr.bf16.mxu0 %v2980
    %3044 = vmatpush1.bf16.msra.mxu0 %v2979
    %3045 = vmatprep.subr.bf16.mxu0 %v2982
    %3046 = vmatpush1.bf16.msra.mxu0 %v2981
    %3047 = vmatprep.subr.bf16.mxu0 %v2984
    %3048 = vmatpush1.bf16.msra.mxu0 %v2983
    %3049 = vmatprep.subr.bf16.mxu0 %v2986
    %3050 = vmatpush1.bf16.msra.mxu0 %v2985
    %3051 = vmatprep.subr.bf16.mxu0 %v2988
    %3052 = vmatpush1.bf16.msra.mxu0 %v2987
    %3053 = vmatprep.mubr.bf16.mxu0 %v2815
    %3054 = vmatmul.mubr.bf16.gmra.mrb[0].mxu0 %v2814
    %v3055 = vpop.f32.mrb[0].mxu0
    %v3056 = vadd.f32 %v2854, %v3055
    %v3057 = vpop.f32.mrb[0].mxu0
    %v3058 = vadd.f32 %v2858, %v3057
    %v3059 = vpop.f32.mrb[0].mxu0
    %v3060 = vpop.f32.mrb[0].mxu0
    %3061 = vdwg.mxu0
    %v3062 = vmax.f32 %v3056, 0.0
    %v3063 = vmax.f32 %v3058, 0.0
    %v3064 = vpack.c.bf16 %v2812, %v2812
    %v3065 = vpack.c.bf16 %v2813, %v2813
    %v3066 = vld [vmem:[#allocation2 + $0xc00] sm:$0xff]
    %v3067 = vld [vmem:[#allocation2 + $0xc08] sm:$0xff]
    %v3068 = vld [vmem:[#allocation2 + $0xc10] sm:$0xff]
    %v3069 = vld [vmem:[#allocation2 + $0xc18] sm:$0xff]
    %v3070 = vld [vmem:[#allocation2 + $0xc20] sm:$0xff]
    %v3071 = vld [vmem:[#allocation2 + $0xc28] sm:$0xff]
    %v3072 = vld [vmem:[#allocation2 + $0xc30] sm:$0xff]
    %v3073 = vld [vmem:[#allocation2 + $0xc38] sm:$0xff]
    %v3074 = vld [vmem:[#allocation2 + $0xc40] sm:$0xff]
    %v3075 = vld [vmem:[#allocation2 + $0xc48] sm:$0xff]
    %v3076 = vld [vmem:[#allocation2 + $0xc50] sm:$0xff]
    %v3077 = vld [vmem:[#allocation2 + $0xc58] sm:$0xff]
    %v3078 = vld [vmem:[#allocation2 + $0xc60] sm:$0xff]
    %v3079 = vld [vmem:[#allocation2 + $0xc68] sm:$0xff]
    %v3080 = vld [vmem:[#allocation2 + $0xc70] sm:$0xff]
    %v3081 = vld [vmem:[#allocation2 + $0xc78] sm:$0xff]
    %v3082 = vld [vmem:[#allocation2 + $0xc80] sm:$0xff]
    %v3083 = vld [vmem:[#allocation2 + $0xc88] sm:$0xff]
    %v3084 = vld [vmem:[#allocation2 + $0xc90] sm:$0xff]
    %v3085 = vld [vmem:[#allocation2 + $0xc98] sm:$0xff]
    %v3086 = vld [vmem:[#allocation2 + $0xca0] sm:$0xff]
    %v3087 = vld [vmem:[#allocation2 + $0xca8] sm:$0xff]
    %v3088 = vld [vmem:[#allocation2 + $0xcb0] sm:$0xff]
    %v3089 = vld [vmem:[#allocation2 + $0xcb8] sm:$0xff]
    %v3090 = vld [vmem:[#allocation2 + $0xcc0] sm:$0xff]
    %v3091 = vld [vmem:[#allocation2 + $0xcc8] sm:$0xff]
    %v3092 = vld [vmem:[#allocation2 + $0xcd0] sm:$0xff]
    %v3093 = vld [vmem:[#allocation2 + $0xcd8] sm:$0xff]
    %v3094 = vld [vmem:[#allocation2 + $0xce0] sm:$0xff]
    %v3095 = vld [vmem:[#allocation2 + $0xce8] sm:$0xff]
    %v3096 = vld [vmem:[#allocation2 + $0xcf0] sm:$0xff]
    %v3097 = vld [vmem:[#allocation2 + $0xcf8] sm:$0xff]
    %s3098 = scalar_lea.vmem [#allocation4], 21
    %v3099 = vld [vmem:[%s3098] ss:$8 sm:$0x3]
    %v3101 = vlaneseq
    %v3102 = vshrl.u32 %v3101, 7
    %v3103 = vsub.s32 0, %v3102
    %v3104 = vrot.slane %v3099, %v3103
    %v3105 = vlaneseq
    %v3106 = vshrl.u32 %v3105, 7
    %v3107 = vsub.s32 1, %v3106
    %v3108 = vrot.slane %v3099, %v3107
    %v3143 = vunpack.c.l.b16 %v3066
    %v3144 = vunpack.c.h.b16 %v3066
    %v3145 = vunpack.c.l.b16 %v3067
    %v3146 = vunpack.c.h.b16 %v3067
    %v3147 = vunpack.c.l.b16 %v3068
    %v3148 = vunpack.c.h.b16 %v3068
    %v3149 = vunpack.c.l.b16 %v3069
    %v3150 = vunpack.c.h.b16 %v3069
    %v3151 = vunpack.c.l.b16 %v3070
    %v3152 = vunpack.c.h.b16 %v3070
    %v3153 = vunpack.c.l.b16 %v3071
    %v3154 = vunpack.c.h.b16 %v3071
    %v3155 = vunpack.c.l.b16 %v3072
    %v3156 = vunpack.c.h.b16 %v3072
    %v3157 = vunpack.c.l.b16 %v3073
    %v3158 = vunpack.c.h.b16 %v3073
    %v3159 = vunpack.c.l.b16 %v3074
    %v3160 = vunpack.c.h.b16 %v3074
    %v3161 = vunpack.c.l.b16 %v3075
    %v3162 = vunpack.c.h.b16 %v3075
    %v3163 = vunpack.c.l.b16 %v3076
    %v3164 = vunpack.c.h.b16 %v3076
    %v3165 = vunpack.c.l.b16 %v3077
    %v3166 = vunpack.c.h.b16 %v3077
    %v3167 = vunpack.c.l.b16 %v3078
    %v3168 = vunpack.c.h.b16 %v3078
    %v3169 = vunpack.c.l.b16 %v3079
    %v3170 = vunpack.c.h.b16 %v3079
    %v3171 = vunpack.c.l.b16 %v3080
    %v3172 = vunpack.c.h.b16 %v3080
    %v3173 = vunpack.c.l.b16 %v3081
    %v3174 = vunpack.c.h.b16 %v3081
    %v3175 = vunpack.c.l.b16 %v3082
    %v3176 = vunpack.c.h.b16 %v3082
    %v3177 = vunpack.c.l.b16 %v3083
    %v3178 = vunpack.c.h.b16 %v3083
    %v3179 = vunpack.c.l.b16 %v3084
    %v3180 = vunpack.c.h.b16 %v3084
    %v3181 = vunpack.c.l.b16 %v3085
    %v3182 = vunpack.c.h.b16 %v3085
    %v3183 = vunpack.c.l.b16 %v3086
    %v3184 = vunpack.c.h.b16 %v3086
    %v3185 = vunpack.c.l.b16 %v3087
    %v3186 = vunpack.c.h.b16 %v3087
    %v3187 = vunpack.c.l.b16 %v3088
    %v3188 = vunpack.c.h.b16 %v3088
    %v3189 = vunpack.c.l.b16 %v3089
    %v3190 = vunpack.c.h.b16 %v3089
    %v3191 = vunpack.c.l.b16 %v3090
    %v3192 = vunpack.c.h.b16 %v3090
    %v3193 = vunpack.c.l.b16 %v3091
    %v3194 = vunpack.c.h.b16 %v3091
    %v3195 = vunpack.c.l.b16 %v3092
    %v3196 = vunpack.c.h.b16 %v3092
    %v3197 = vunpack.c.l.b16 %v3093
    %v3198 = vunpack.c.h.b16 %v3093
    %v3199 = vunpack.c.l.b16 %v3094
    %v3200 = vunpack.c.h.b16 %v3094
    %v3201 = vunpack.c.l.b16 %v3095
    %v3202 = vunpack.c.h.b16 %v3095
    %v3203 = vunpack.c.l.b16 %v3096
    %v3204 = vunpack.c.h.b16 %v3096
    %v3205 = vunpack.c.l.b16 %v3097
    %v3206 = vunpack.c.h.b16 %v3097
    %v3207 = vpack.c.b16 %v3145, %v3143
    %v3208 = vpack.c.b16 %v3146, %v3144
    %v3209 = vpack.c.b16 %v3149, %v3147
    %v3210 = vpack.c.b16 %v3150, %v3148
    %v3211 = vpack.c.b16 %v3153, %v3151
    %v3212 = vpack.c.b16 %v3154, %v3152
    %v3213 = vpack.c.b16 %v3157, %v3155
    %v3214 = vpack.c.b16 %v3158, %v3156
    %v3215 = vpack.c.b16 %v3161, %v3159
    %v3216 = vpack.c.b16 %v3162, %v3160
    %v3217 = vpack.c.b16 %v3165, %v3163
    %v3218 = vpack.c.b16 %v3166, %v3164
    %v3219 = vpack.c.b16 %v3169, %v3167
    %v3220 = vpack.c.b16 %v3170, %v3168
    %v3221 = vpack.c.b16 %v3173, %v3171
    %v3222 = vpack.c.b16 %v3174, %v3172
    %v3223 = vpack.c.b16 %v3177, %v3175
    %v3224 = vpack.c.b16 %v3178, %v3176
    %v3225 = vpack.c.b16 %v3181, %v3179
    %v3226 = vpack.c.b16 %v3182, %v3180
    %v3227 = vpack.c.b16 %v3185, %v3183
    %v3228 = vpack.c.b16 %v3186, %v3184
    %v3229 = vpack.c.b16 %v3189, %v3187
    %v3230 = vpack.c.b16 %v3190, %v3188
    %v3231 = vpack.c.b16 %v3193, %v3191
    %v3232 = vpack.c.b16 %v3194, %v3192
    %v3233 = vpack.c.b16 %v3197, %v3195
    %v3234 = vpack.c.b16 %v3198, %v3196
    %v3235 = vpack.c.b16 %v3201, %v3199
    %v3236 = vpack.c.b16 %v3202, %v3200
    %v3237 = vpack.c.b16 %v3205, %v3203
    %v3238 = vpack.c.b16 %v3206, %v3204
    %3271 = vmatprep.subr.bf16.mxu0 %v3208
    %3272 = vmatpush1.bf16.msra.mxu0 %v3207
    %3273 = vmatprep.subr.bf16.mxu0 %v3210
    %3274 = vmatpush1.bf16.msra.mxu0 %v3209
    %3275 = vmatprep.subr.bf16.mxu0 %v3212
    %3276 = vmatpush1.bf16.msra.mxu0 %v3211
    %3277 = vmatprep.subr.bf16.mxu0 %v3214
    %3278 = vmatpush1.bf16.msra.mxu0 %v3213
    %3279 = vmatprep.subr.bf16.mxu0 %v3216
    %3280 = vmatpush1.bf16.msra.mxu0 %v3215
    %3281 = vmatprep.subr.bf16.mxu0 %v3218
    %3282 = vmatpush1.bf16.msra.mxu0 %v3217
    %3283 = vmatprep.subr.bf16.mxu0 %v3220
    %3284 = vmatpush1.bf16.msra.mxu0 %v3219
    %3285 = vmatprep.subr.bf16.mxu0 %v3222
    %3286 = vmatpush1.bf16.msra.mxu0 %v3221
    %3287 = vmatprep.subr.bf16.mxu0 %v3224
    %3288 = vmatpush1.bf16.msra.mxu0 %v3223
    %3289 = vmatprep.subr.bf16.mxu0 %v3226
    %3290 = vmatpush1.bf16.msra.mxu0 %v3225
    %3291 = vmatprep.subr.bf16.mxu0 %v3228
    %3292 = vmatpush1.bf16.msra.mxu0 %v3227
    %3293 = vmatprep.subr.bf16.mxu0 %v3230
    %3294 = vmatpush1.bf16.msra.mxu0 %v3229
    %3295 = vmatprep.subr.bf16.mxu0 %v3232
    %3296 = vmatpush1.bf16.msra.mxu0 %v3231
    %3297 = vmatprep.subr.bf16.mxu0 %v3234
    %3298 = vmatpush1.bf16.msra.mxu0 %v3233
    %3299 = vmatprep.subr.bf16.mxu0 %v3236
    %3300 = vmatpush1.bf16.msra.mxu0 %v3235
    %3301 = vmatprep.subr.bf16.mxu0 %v3238
    %3302 = vmatpush1.bf16.msra.mxu0 %v3237
    %3303 = vmatprep.mubr.bf16.mxu0 %v3065
    %3304 = vmatmul.mubr.bf16.gmra.mrb[0].mxu0 %v3064
    %v3305 = vpop.f32.mrb[0].mxu0
    %v3306 = vadd.f32 %v3104, %v3305
    %v3307 = vpop.f32.mrb[0].mxu0
    %v3308 = vadd.f32 %v3108, %v3307
    %v3309 = vpop.f32.mrb[0].mxu0
    %v3310 = vpop.f32.mrb[0].mxu0
    %3311 = vdwg.mxu0
    %v3312 = vmax.f32 %v3306, 0.0
    %v3313 = vmax.f32 %v3308, 0.0
    %v3314 = vpack.c.bf16 %v3062, %v3062
    %v3315 = vpack.c.bf16 %v3063, %v3063
    %v3316 = vld [vmem:[#allocation2 + $0x900] sm:$0xff]
    %v3317 = vld [vmem:[#allocation2 + $0x908] sm:$0xff]
    %v3318 = vld [vmem:[#allocation2 + $0x910] sm:$0xff]
    %v3319 = vld [vmem:[#allocation2 + $0x918] sm:$0xff]
    %v3320 = vld [vmem:[#allocation2 + $0x920] sm:$0xff]
    %v3321 = vld [vmem:[#allocation2 + $0x928] sm:$0xff]
    %v3322 = vld [vmem:[#allocation2 + $0x930] sm:$0xff]
    %v3323 = vld [vmem:[#allocation2 + $0x938] sm:$0xff]
    %v3324 = vld [vmem:[#allocation2 + $0x940] sm:$0xff]
    %v3325 = vld [vmem:[#allocation2 + $0x948] sm:$0xff]
    %v3326 = vld [vmem:[#allocation2 + $0x950] sm:$0xff]
    %v3327 = vld [vmem:[#allocation2 + $0x958] sm:$0xff]
    %v3328 = vld [vmem:[#allocation2 + $0x960] sm:$0xff]
    %v3329 = vld [vmem:[#allocation2 + $0x968] sm:$0xff]
    %v3330 = vld [vmem:[#allocation2 + $0x970] sm:$0xff]
    %v3331 = vld [vmem:[#allocation2 + $0x978] sm:$0xff]
    %v3332 = vld [vmem:[#allocation2 + $0x980] sm:$0xff]
    %v3333 = vld [vmem:[#allocation2 + $0x988] sm:$0xff]
    %v3334 = vld [vmem:[#allocation2 + $0x990] sm:$0xff]
    %v3335 = vld [vmem:[#allocation2 + $0x998] sm:$0xff]
    %v3336 = vld [vmem:[#allocation2 + $0x9a0] sm:$0xff]
    %v3337 = vld [vmem:[#allocation2 + $0x9a8] sm:$0xff]
    %v3338 = vld [vmem:[#allocation2 + $0x9b0] sm:$0xff]
    %v3339 = vld [vmem:[#allocation2 + $0x9b8] sm:$0xff]
    %v3340 = vld [vmem:[#allocation2 + $0x9c0] sm:$0xff]
    %v3341 = vld [vmem:[#allocation2 + $0x9c8] sm:$0xff]
    %v3342 = vld [vmem:[#allocation2 + $0x9d0] sm:$0xff]
    %v3343 = vld [vmem:[#allocation2 + $0x9d8] sm:$0xff]
    %v3344 = vld [vmem:[#allocation2 + $0x9e0] sm:$0xff]
    %v3345 = vld [vmem:[#allocation2 + $0x9e8] sm:$0xff]
    %v3346 = vld [vmem:[#allocation2 + $0x9f0] sm:$0xff]
    %v3347 = vld [vmem:[#allocation2 + $0x9f8] sm:$0xff]
    %s3348 = scalar_lea.vmem [#allocation4], 18
    %v3349 = vld [vmem:[%s3348] ss:$8 sm:$0x3]
    %v3351 = vlaneseq
    %v3352 = vshrl.u32 %v3351, 7
    %v3353 = vsub.s32 0, %v3352
    %v3354 = vrot.slane %v3349, %v3353
    %v3355 = vlaneseq
    %v3356 = vshrl.u32 %v3355, 7
    %v3357 = vsub.s32 1, %v3356
    %v3358 = vrot.slane %v3349, %v3357
    %v3393 = vunpack.c.l.b16 %v3316
    %v3394 = vunpack.c.h.b16 %v3316
    %v3395 = vunpack.c.l.b16 %v3317
    %v3396 = vunpack.c.h.b16 %v3317
    %v3397 = vunpack.c.l.b16 %v3318
    %v3398 = vunpack.c.h.b16 %v3318
    %v3399 = vunpack.c.l.b16 %v3319
    %v3400 = vunpack.c.h.b16 %v3319
    %v3401 = vunpack.c.l.b16 %v3320
    %v3402 = vunpack.c.h.b16 %v3320
    %v3403 = vunpack.c.l.b16 %v3321
    %v3404 = vunpack.c.h.b16 %v3321
    %v3405 = vunpack.c.l.b16 %v3322
    %v3406 = vunpack.c.h.b16 %v3322
    %v3407 = vunpack.c.l.b16 %v3323
    %v3408 = vunpack.c.h.b16 %v3323
    %v3409 = vunpack.c.l.b16 %v3324
    %v3410 = vunpack.c.h.b16 %v3324
    %v3411 = vunpack.c.l.b16 %v3325
    %v3412 = vunpack.c.h.b16 %v3325
    %v3413 = vunpack.c.l.b16 %v3326
    %v3414 = vunpack.c.h.b16 %v3326
    %v3415 = vunpack.c.l.b16 %v3327
    %v3416 = vunpack.c.h.b16 %v3327
    %v3417 = vunpack.c.l.b16 %v3328
    %v3418 = vunpack.c.h.b16 %v3328
    %v3419 = vunpack.c.l.b16 %v3329
    %v3420 = vunpack.c.h.b16 %v3329
    %v3421 = vunpack.c.l.b16 %v3330
    %v3422 = vunpack.c.h.b16 %v3330
    %v3423 = vunpack.c.l.b16 %v3331
    %v3424 = vunpack.c.h.b16 %v3331
    %v3425 = vunpack.c.l.b16 %v3332
    %v3426 = vunpack.c.h.b16 %v3332
    %v3427 = vunpack.c.l.b16 %v3333
    %v3428 = vunpack.c.h.b16 %v3333
    %v3429 = vunpack.c.l.b16 %v3334
    %v3430 = vunpack.c.h.b16 %v3334
    %v3431 = vunpack.c.l.b16 %v3335
    %v3432 = vunpack.c.h.b16 %v3335
    %v3433 = vunpack.c.l.b16 %v3336
    %v3434 = vunpack.c.h.b16 %v3336
    %v3435 = vunpack.c.l.b16 %v3337
    %v3436 = vunpack.c.h.b16 %v3337
    %v3437 = vunpack.c.l.b16 %v3338
    %v3438 = vunpack.c.h.b16 %v3338
    %v3439 = vunpack.c.l.b16 %v3339
    %v3440 = vunpack.c.h.b16 %v3339
    %v3441 = vunpack.c.l.b16 %v3340
    %v3442 = vunpack.c.h.b16 %v3340
    %v3443 = vunpack.c.l.b16 %v3341
    %v3444 = vunpack.c.h.b16 %v3341
    %v3445 = vunpack.c.l.b16 %v3342
    %v3446 = vunpack.c.h.b16 %v3342
    %v3447 = vunpack.c.l.b16 %v3343
    %v3448 = vunpack.c.h.b16 %v3343
    %v3449 = vunpack.c.l.b16 %v3344
    %v3450 = vunpack.c.h.b16 %v3344
    %v3451 = vunpack.c.l.b16 %v3345
    %v3452 = vunpack.c.h.b16 %v3345
    %v3453 = vunpack.c.l.b16 %v3346
    %v3454 = vunpack.c.h.b16 %v3346
    %v3455 = vunpack.c.l.b16 %v3347
    %v3456 = vunpack.c.h.b16 %v3347
    %v3457 = vpack.c.b16 %v3395, %v3393
    %v3458 = vpack.c.b16 %v3396, %v3394
    %v3459 = vpack.c.b16 %v3399, %v3397
    %v3460 = vpack.c.b16 %v3400, %v3398
    %v3461 = vpack.c.b16 %v3403, %v3401
    %v3462 = vpack.c.b16 %v3404, %v3402
    %v3463 = vpack.c.b16 %v3407, %v3405
    %v3464 = vpack.c.b16 %v3408, %v3406
    %v3465 = vpack.c.b16 %v3411, %v3409
    %v3466 = vpack.c.b16 %v3412, %v3410
    %v3467 = vpack.c.b16 %v3415, %v3413
    %v3468 = vpack.c.b16 %v3416, %v3414
    %v3469 = vpack.c.b16 %v3419, %v3417
    %v3470 = vpack.c.b16 %v3420, %v3418
    %v3471 = vpack.c.b16 %v3423, %v3421
    %v3472 = vpack.c.b16 %v3424, %v3422
    %v3473 = vpack.c.b16 %v3427, %v3425
    %v3474 = vpack.c.b16 %v3428, %v3426
    %v3475 = vpack.c.b16 %v3431, %v3429
    %v3476 = vpack.c.b16 %v3432, %v3430
    %v3477 = vpack.c.b16 %v3435, %v3433
    %v3478 = vpack.c.b16 %v3436, %v3434
    %v3479 = vpack.c.b16 %v3439, %v3437
    %v3480 = vpack.c.b16 %v3440, %v3438
    %v3481 = vpack.c.b16 %v3443, %v3441
    %v3482 = vpack.c.b16 %v3444, %v3442
    %v3483 = vpack.c.b16 %v3447, %v3445
    %v3484 = vpack.c.b16 %v3448, %v3446
    %v3485 = vpack.c.b16 %v3451, %v3449
    %v3486 = vpack.c.b16 %v3452, %v3450
    %v3487 = vpack.c.b16 %v3455, %v3453
    %v3488 = vpack.c.b16 %v3456, %v3454
    %3521 = vmatprep.subr.bf16.mxu0 %v3458
    %3522 = vmatpush1.bf16.msra.mxu0 %v3457
    %3523 = vmatprep.subr.bf16.mxu0 %v3460
    %3524 = vmatpush1.bf16.msra.mxu0 %v3459
    %3525 = vmatprep.subr.bf16.mxu0 %v3462
    %3526 = vmatpush1.bf16.msra.mxu0 %v3461
    %3527 = vmatprep.subr.bf16.mxu0 %v3464
    %3528 = vmatpush1.bf16.msra.mxu0 %v3463
    %3529 = vmatprep.subr.bf16.mxu0 %v3466
    %3530 = vmatpush1.bf16.msra.mxu0 %v3465
    %3531 = vmatprep.subr.bf16.mxu0 %v3468
    %3532 = vmatpush1.bf16.msra.mxu0 %v3467
    %3533 = vmatprep.subr.bf16.mxu0 %v3470
    %3534 = vmatpush1.bf16.msra.mxu0 %v3469
    %3535 = vmatprep.subr.bf16.mxu0 %v3472
    %3536 = vmatpush1.bf16.msra.mxu0 %v3471
    %3537 = vmatprep.subr.bf16.mxu0 %v3474
    %3538 = vmatpush1.bf16.msra.mxu0 %v3473
    %3539 = vmatprep.subr.bf16.mxu0 %v3476
    %3540 = vmatpush1.bf16.msra.mxu0 %v3475
    %3541 = vmatprep.subr.bf16.mxu0 %v3478
    %3542 = vmatpush1.bf16.msra.mxu0 %v3477
    %3543 = vmatprep.subr.bf16.mxu0 %v3480
    %3544 = vmatpush1.bf16.msra.mxu0 %v3479
    %3545 = vmatprep.subr.bf16.mxu0 %v3482
    %3546 = vmatpush1.bf16.msra.mxu0 %v3481
    %3547 = vmatprep.subr.bf16.mxu0 %v3484
    %3548 = vmatpush1.bf16.msra.mxu0 %v3483
    %3549 = vmatprep.subr.bf16.mxu0 %v3486
    %3550 = vmatpush1.bf16.msra.mxu0 %v3485
    %3551 = vmatprep.subr.bf16.mxu0 %v3488
    %3552 = vmatpush1.bf16.msra.mxu0 %v3487
    %3553 = vmatprep.mubr.bf16.mxu0 %v3315
    %3554 = vmatmul.mubr.bf16.gmra.mrb[0].mxu0 %v3314
    %v3555 = vpop.f32.mrb[0].mxu0
    %v3556 = vadd.f32 %v3354, %v3555
    %v3557 = vpop.f32.mrb[0].mxu0
    %v3558 = vadd.f32 %v3358, %v3557
    %v3559 = vpop.f32.mrb[0].mxu0
    %v3560 = vpop.f32.mrb[0].mxu0
    %3561 = vdwg.mxu0
    %v3562 = vmax.f32 %v3556, 0.0
    %v3563 = vmax.f32 %v3558, 0.0
    %v3564 = vpack.c.bf16 %v3312, %v3312
    %v3565 = vpack.c.bf16 %v3313, %v3313
    %v3566 = vld [vmem:[#allocation2 + $0xd00] sm:$0xff]
    %v3567 = vld [vmem:[#allocation2 + $0xd08] sm:$0xff]
    %v3568 = vld [vmem:[#allocation2 + $0xd10] sm:$0xff]
    %v3569 = vld [vmem:[#allocation2 + $0xd18] sm:$0xff]
    %v3570 = vld [vmem:[#allocation2 + $0xd20] sm:$0xff]
    %v3571 = vld [vmem:[#allocation2 + $0xd28] sm:$0xff]
    %v3572 = vld [vmem:[#allocation2 + $0xd30] sm:$0xff]
    %v3573 = vld [vmem:[#allocation2 + $0xd38] sm:$0xff]
    %v3574 = vld [vmem:[#allocation2 + $0xd40] sm:$0xff]
    %v3575 = vld [vmem:[#allocation2 + $0xd48] sm:$0xff]
    %v3576 = vld [vmem:[#allocation2 + $0xd50] sm:$0xff]
    %v3577 = vld [vmem:[#allocation2 + $0xd58] sm:$0xff]
    %v3578 = vld [vmem:[#allocation2 + $0xd60] sm:$0xff]
    %v3579 = vld [vmem:[#allocation2 + $0xd68] sm:$0xff]
    %v3580 = vld [vmem:[#allocation2 + $0xd70] sm:$0xff]
    %v3581 = vld [vmem:[#allocation2 + $0xd78] sm:$0xff]
    %v3582 = vld [vmem:[#allocation2 + $0xd80] sm:$0xff]
    %v3583 = vld [vmem:[#allocation2 + $0xd88] sm:$0xff]
    %v3584 = vld [vmem:[#allocation2 + $0xd90] sm:$0xff]
    %v3585 = vld [vmem:[#allocation2 + $0xd98] sm:$0xff]
    %v3586 = vld [vmem:[#allocation2 + $0xda0] sm:$0xff]
    %v3587 = vld [vmem:[#allocation2 + $0xda8] sm:$0xff]
    %v3588 = vld [vmem:[#allocation2 + $0xdb0] sm:$0xff]
    %v3589 = vld [vmem:[#allocation2 + $0xdb8] sm:$0xff]
    %v3590 = vld [vmem:[#allocation2 + $0xdc0] sm:$0xff]
    %v3591 = vld [vmem:[#allocation2 + $0xdc8] sm:$0xff]
    %v3592 = vld [vmem:[#allocation2 + $0xdd0] sm:$0xff]
    %v3593 = vld [vmem:[#allocation2 + $0xdd8] sm:$0xff]
    %v3594 = vld [vmem:[#allocation2 + $0xde0] sm:$0xff]
    %v3595 = vld [vmem:[#allocation2 + $0xde8] sm:$0xff]
    %v3596 = vld [vmem:[#allocation2 + $0xdf0] sm:$0xff]
    %v3597 = vld [vmem:[#allocation2 + $0xdf8] sm:$0xff]
    %s3598 = scalar_lea.vmem [#allocation4], 22
    %v3599 = vld [vmem:[%s3598] ss:$8 sm:$0x3]
    %v3601 = vlaneseq
    %v3602 = vshrl.u32 %v3601, 7
    %v3603 = vsub.s32 0, %v3602
    %v3604 = vrot.slane %v3599, %v3603
    %v3605 = vlaneseq
    %v3606 = vshrl.u32 %v3605, 7
    %v3607 = vsub.s32 1, %v3606
    %v3608 = vrot.slane %v3599, %v3607
    %v3643 = vunpack.c.l.b16 %v3566
    %v3644 = vunpack.c.h.b16 %v3566
    %v3645 = vunpack.c.l.b16 %v3567
    %v3646 = vunpack.c.h.b16 %v3567
    %v3647 = vunpack.c.l.b16 %v3568
    %v3648 = vunpack.c.h.b16 %v3568
    %v3649 = vunpack.c.l.b16 %v3569
    %v3650 = vunpack.c.h.b16 %v3569
    %v3651 = vunpack.c.l.b16 %v3570
    %v3652 = vunpack.c.h.b16 %v3570
    %v3653 = vunpack.c.l.b16 %v3571
    %v3654 = vunpack.c.h.b16 %v3571
    %v3655 = vunpack.c.l.b16 %v3572
    %v3656 = vunpack.c.h.b16 %v3572
    %v3657 = vunpack.c.l.b16 %v3573
    %v3658 = vunpack.c.h.b16 %v3573
    %v3659 = vunpack.c.l.b16 %v3574
    %v3660 = vunpack.c.h.b16 %v3574
    %v3661 = vunpack.c.l.b16 %v3575
    %v3662 = vunpack.c.h.b16 %v3575
    %v3663 = vunpack.c.l.b16 %v3576
    %v3664 = vunpack.c.h.b16 %v3576
    %v3665 = vunpack.c.l.b16 %v3577
    %v3666 = vunpack.c.h.b16 %v3577
    %v3667 = vunpack.c.l.b16 %v3578
    %v3668 = vunpack.c.h.b16 %v3578
    %v3669 = vunpack.c.l.b16 %v3579
    %v3670 = vunpack.c.h.b16 %v3579
    %v3671 = vunpack.c.l.b16 %v3580
    %v3672 = vunpack.c.h.b16 %v3580
    %v3673 = vunpack.c.l.b16 %v3581
    %v3674 = vunpack.c.h.b16 %v3581
    %v3675 = vunpack.c.l.b16 %v3582
    %v3676 = vunpack.c.h.b16 %v3582
    %v3677 = vunpack.c.l.b16 %v3583
    %v3678 = vunpack.c.h.b16 %v3583
    %v3679 = vunpack.c.l.b16 %v3584
    %v3680 = vunpack.c.h.b16 %v3584
    %v3681 = vunpack.c.l.b16 %v3585
    %v3682 = vunpack.c.h.b16 %v3585
    %v3683 = vunpack.c.l.b16 %v3586
    %v3684 = vunpack.c.h.b16 %v3586
    %v3685 = vunpack.c.l.b16 %v3587
    %v3686 = vunpack.c.h.b16 %v3587
    %v3687 = vunpack.c.l.b16 %v3588
    %v3688 = vunpack.c.h.b16 %v3588
    %v3689 = vunpack.c.l.b16 %v3589
    %v3690 = vunpack.c.h.b16 %v3589
    %v3691 = vunpack.c.l.b16 %v3590
    %v3692 = vunpack.c.h.b16 %v3590
    %v3693 = vunpack.c.l.b16 %v3591
    %v3694 = vunpack.c.h.b16 %v3591
    %v3695 = vunpack.c.l.b16 %v3592
    %v3696 = vunpack.c.h.b16 %v3592
    %v3697 = vunpack.c.l.b16 %v3593
    %v3698 = vunpack.c.h.b16 %v3593
    %v3699 = vunpack.c.l.b16 %v3594
    %v3700 = vunpack.c.h.b16 %v3594
    %v3701 = vunpack.c.l.b16 %v3595
    %v3702 = vunpack.c.h.b16 %v3595
    %v3703 = vunpack.c.l.b16 %v3596
    %v3704 = vunpack.c.h.b16 %v3596
    %v3705 = vunpack.c.l.b16 %v3597
    %v3706 = vunpack.c.h.b16 %v3597
    %v3707 = vpack.c.b16 %v3645, %v3643
    %v3708 = vpack.c.b16 %v3646, %v3644
    %v3709 = vpack.c.b16 %v3649, %v3647
    %v3710 = vpack.c.b16 %v3650, %v3648
    %v3711 = vpack.c.b16 %v3653, %v3651
    %v3712 = vpack.c.b16 %v3654, %v3652
    %v3713 = vpack.c.b16 %v3657, %v3655
    %v3714 = vpack.c.b16 %v3658, %v3656
    %v3715 = vpack.c.b16 %v3661, %v3659
    %v3716 = vpack.c.b16 %v3662, %v3660
    %v3717 = vpack.c.b16 %v3665, %v3663
    %v3718 = vpack.c.b16 %v3666, %v3664
    %v3719 = vpack.c.b16 %v3669, %v3667
    %v3720 = vpack.c.b16 %v3670, %v3668
    %v3721 = vpack.c.b16 %v3673, %v3671
    %v3722 = vpack.c.b16 %v3674, %v3672
    %v3723 = vpack.c.b16 %v3677, %v3675
    %v3724 = vpack.c.b16 %v3678, %v3676
    %v3725 = vpack.c.b16 %v3681, %v3679
    %v3726 = vpack.c.b16 %v3682, %v3680
    %v3727 = vpack.c.b16 %v3685, %v3683
    %v3728 = vpack.c.b16 %v3686, %v3684
    %v3729 = vpack.c.b16 %v3689, %v3687
    %v3730 = vpack.c.b16 %v3690, %v3688
    %v3731 = vpack.c.b16 %v3693, %v3691
    %v3732 = vpack.c.b16 %v3694, %v3692
    %v3733 = vpack.c.b16 %v3697, %v3695
    %v3734 = vpack.c.b16 %v3698, %v3696
    %v3735 = vpack.c.b16 %v3701, %v3699
    %v3736 = vpack.c.b16 %v3702, %v3700
    %v3737 = vpack.c.b16 %v3705, %v3703
    %v3738 = vpack.c.b16 %v3706, %v3704
    %3771 = vmatprep.subr.bf16.mxu0 %v3708
    %3772 = vmatpush1.bf16.msra.mxu0 %v3707
    %3773 = vmatprep.subr.bf16.mxu0 %v3710
    %3774 = vmatpush1.bf16.msra.mxu0 %v3709
    %3775 = vmatprep.subr.bf16.mxu0 %v3712
    %3776 = vmatpush1.bf16.msra.mxu0 %v3711
    %3777 = vmatprep.subr.bf16.mxu0 %v3714
    %3778 = vmatpush1.bf16.msra.mxu0 %v3713
    %3779 = vmatprep.subr.bf16.mxu0 %v3716
    %3780 = vmatpush1.bf16.msra.mxu0 %v3715
    %3781 = vmatprep.subr.bf16.mxu0 %v3718
    %3782 = vmatpush1.bf16.msra.mxu0 %v3717
    %3783 = vmatprep.subr.bf16.mxu0 %v3720
    %3784 = vmatpush1.bf16.msra.mxu0 %v3719
    %3785 = vmatprep.subr.bf16.mxu0 %v3722
    %3786 = vmatpush1.bf16.msra.mxu0 %v3721
    %3787 = vmatprep.subr.bf16.mxu0 %v3724
    %3788 = vmatpush1.bf16.msra.mxu0 %v3723
    %3789 = vmatprep.subr.bf16.mxu0 %v3726
    %3790 = vmatpush1.bf16.msra.mxu0 %v3725
    %3791 = vmatprep.subr.bf16.mxu0 %v3728
    %3792 = vmatpush1.bf16.msra.mxu0 %v3727
    %3793 = vmatprep.subr.bf16.mxu0 %v3730
    %3794 = vmatpush1.bf16.msra.mxu0 %v3729
    %3795 = vmatprep.subr.bf16.mxu0 %v3732
    %3796 = vmatpush1.bf16.msra.mxu0 %v3731
    %3797 = vmatprep.subr.bf16.mxu0 %v3734
    %3798 = vmatpush1.bf16.msra.mxu0 %v3733
    %3799 = vmatprep.subr.bf16.mxu0 %v3736
    %3800 = vmatpush1.bf16.msra.mxu0 %v3735
    %3801 = vmatprep.subr.bf16.mxu0 %v3738
    %3802 = vmatpush1.bf16.msra.mxu0 %v3737
    %3803 = vmatprep.mubr.bf16.mxu0 %v3565
    %3804 = vmatmul.mubr.bf16.gmra.mrb[0].mxu0 %v3564
    %v3805 = vpop.f32.mrb[0].mxu0
    %v3806 = vadd.f32 %v3604, %v3805
    %v3807 = vpop.f32.mrb[0].mxu0
    %v3808 = vadd.f32 %v3608, %v3807
    %v3809 = vpop.f32.mrb[0].mxu0
    %v3810 = vpop.f32.mrb[0].mxu0
    %3811 = vdwg.mxu0
    %v3812 = vmax.f32 %v3806, 0.0
    %v3813 = vmax.f32 %v3808, 0.0
    %v3814 = vpack.c.bf16 %v3562, %v3562
    %v3815 = vpack.c.bf16 %v3563, %v3563
    %v3816 = vld [vmem:[#allocation2 + $0xe04] sm:$0xf]
    %v3817 = vld [vmem:[#allocation2 + $0xe0c] sm:$0xf]
    %v3818 = vld [vmem:[#allocation2 + $0xe14] sm:$0xf]
    %v3819 = vld [vmem:[#allocation2 + $0xe1c] sm:$0xf]
    %v3820 = vld [vmem:[#allocation2 + $0xe24] sm:$0xf]
    %v3821 = vld [vmem:[#allocation2 + $0xe2c] sm:$0xf]
    %v3822 = vld [vmem:[#allocation2 + $0xe34] sm:$0xf]
    %v3823 = vld [vmem:[#allocation2 + $0xe3c] sm:$0xf]
    %v3824 = vld [vmem:[#allocation2 + $0xe44] sm:$0xf]
    %v3825 = vld [vmem:[#allocation2 + $0xe4c] sm:$0xf]
    %v3826 = vld [vmem:[#allocation2 + $0xe54] sm:$0xf]
    %v3827 = vld [vmem:[#allocation2 + $0xe5c] sm:$0xf]
    %v3828 = vld [vmem:[#allocation2 + $0xe64] sm:$0xf]
    %v3829 = vld [vmem:[#allocation2 + $0xe6c] sm:$0xf]
    %v3830 = vld [vmem:[#allocation2 + $0xe74] sm:$0xf]
    %v3831 = vld [vmem:[#allocation2 + $0xe7c] sm:$0xf]
    %v3832 = vld [vmem:[#allocation2 + $0xe84] sm:$0xf]
    %v3833 = vld [vmem:[#allocation2 + $0xe8c] sm:$0xf]
    %v3834 = vld [vmem:[#allocation2 + $0xe94] sm:$0xf]
    %v3835 = vld [vmem:[#allocation2 + $0xe9c] sm:$0xf]
    %v3836 = vld [vmem:[#allocation2 + $0xea4] sm:$0xf]
    %v3837 = vld [vmem:[#allocation2 + $0xeac] sm:$0xf]
    %v3838 = vld [vmem:[#allocation2 + $0xeb4] sm:$0xf]
    %v3839 = vld [vmem:[#allocation2 + $0xebc] sm:$0xf]
    %v3840 = vld [vmem:[#allocation2 + $0xec4] sm:$0xf]
    %v3841 = vld [vmem:[#allocation2 + $0xecc] sm:$0xf]
    %v3842 = vld [vmem:[#allocation2 + $0xed4] sm:$0xf]
    %v3843 = vld [vmem:[#allocation2 + $0xedc] sm:$0xf]
    %v3844 = vld [vmem:[#allocation2 + $0xee4] sm:$0xf]
    %v3845 = vld [vmem:[#allocation2 + $0xeec] sm:$0xf]
    %v3846 = vld [vmem:[#allocation2 + $0xef4] sm:$0xf]
    %v3847 = vld [vmem:[#allocation2 + $0xefc] sm:$0xf]
    %v3848 = vld [vmem:[#allocation4 + $0x20] ss:$0 sm:$0xff]
    %v3881 = vunpack.c.l.b16 %v3816
    %v3882 = vunpack.c.l.b16 %v3817
    %v3883 = vunpack.c.l.b16 %v3818
    %v3884 = vunpack.c.l.b16 %v3819
    %v3885 = vunpack.c.l.b16 %v3820
    %v3886 = vunpack.c.l.b16 %v3821
    %v3887 = vunpack.c.l.b16 %v3822
    %v3888 = vunpack.c.l.b16 %v3823
    %v3889 = vunpack.c.l.b16 %v3824
    %v3890 = vunpack.c.l.b16 %v3825
    %v3891 = vunpack.c.l.b16 %v3826
    %v3892 = vunpack.c.l.b16 %v3827
    %v3893 = vunpack.c.l.b16 %v3828
    %v3894 = vunpack.c.l.b16 %v3829
    %v3895 = vunpack.c.l.b16 %v3830
    %v3896 = vunpack.c.l.b16 %v3831
    %v3897 = vunpack.c.l.b16 %v3832
    %v3898 = vunpack.c.l.b16 %v3833
    %v3899 = vunpack.c.l.b16 %v3834
    %v3900 = vunpack.c.l.b16 %v3835
    %v3901 = vunpack.c.l.b16 %v3836
    %v3902 = vunpack.c.l.b16 %v3837
    %v3903 = vunpack.c.l.b16 %v3838
    %v3904 = vunpack.c.l.b16 %v3839
    %v3905 = vunpack.c.l.b16 %v3840
    %v3906 = vunpack.c.l.b16 %v3841
    %v3907 = vunpack.c.l.b16 %v3842
    %v3908 = vunpack.c.l.b16 %v3843
    %v3909 = vunpack.c.l.b16 %v3844
    %v3910 = vunpack.c.l.b16 %v3845
    %v3911 = vunpack.c.l.b16 %v3846
    %v3912 = vunpack.c.l.b16 %v3847
    %v3913 = vpack.c.b16 %v3882, %v3881
    %v3914 = vpack.c.b16 %v3884, %v3883
    %v3915 = vpack.c.b16 %v3886, %v3885
    %v3916 = vpack.c.b16 %v3888, %v3887
    %v3917 = vpack.c.b16 %v3890, %v3889
    %v3918 = vpack.c.b16 %v3892, %v3891
    %v3919 = vpack.c.b16 %v3894, %v3893
    %v3920 = vpack.c.b16 %v3896, %v3895
    %v3921 = vpack.c.b16 %v3898, %v3897
    %v3922 = vpack.c.b16 %v3900, %v3899
    %v3923 = vpack.c.b16 %v3902, %v3901
    %v3924 = vpack.c.b16 %v3904, %v3903
    %v3925 = vpack.c.b16 %v3906, %v3905
    %v3926 = vpack.c.b16 %v3908, %v3907
    %v3927 = vpack.c.b16 %v3910, %v3909
    %v3928 = vpack.c.b16 %v3912, %v3911
    %3945 = vmatprep.subr.bf16.mxu0 0
    %3946 = vmatpush1.bf16.msra.mxu0 %v3913
    %3947 = vmatprep.subr.bf16.mxu0 0
    %3948 = vmatpush1.bf16.msra.mxu0 %v3914
    %3949 = vmatprep.subr.bf16.mxu0 0
    %3950 = vmatpush1.bf16.msra.mxu0 %v3915
    %3951 = vmatprep.subr.bf16.mxu0 0
    %3952 = vmatpush1.bf16.msra.mxu0 %v3916
    %3953 = vmatprep.subr.bf16.mxu0 0
    %3954 = vmatpush1.bf16.msra.mxu0 %v3917
    %3955 = vmatprep.subr.bf16.mxu0 0
    %3956 = vmatpush1.bf16.msra.mxu0 %v3918
    %3957 = vmatprep.subr.bf16.mxu0 0
    %3958 = vmatpush1.bf16.msra.mxu0 %v3919
    %3959 = vmatprep.subr.bf16.mxu0 0
    %3960 = vmatpush1.bf16.msra.mxu0 %v3920
    %3961 = vmatprep.subr.bf16.mxu0 0
    %3962 = vmatpush1.bf16.msra.mxu0 %v3921
    %3963 = vmatprep.subr.bf16.mxu0 0
    %3964 = vmatpush1.bf16.msra.mxu0 %v3922
    %3965 = vmatprep.subr.bf16.mxu0 0
    %3966 = vmatpush1.bf16.msra.mxu0 %v3923
    %3967 = vmatprep.subr.bf16.mxu0 0
    %3968 = vmatpush1.bf16.msra.mxu0 %v3924
    %3969 = vmatprep.subr.bf16.mxu0 0
    %3970 = vmatpush1.bf16.msra.mxu0 %v3925
    %3971 = vmatprep.subr.bf16.mxu0 0
    %3972 = vmatpush1.bf16.msra.mxu0 %v3926
    %3973 = vmatprep.subr.bf16.mxu0 0
    %3974 = vmatpush1.bf16.msra.mxu0 %v3927
    %3975 = vmatprep.subr.bf16.mxu0 0
    %3976 = vmatpush1.bf16.msra.mxu0 %v3928
    %3977 = vmatprep.mubr.bf16.mxu0 %v3815
    %3978 = vmatmul.mubr.bf16.gmra.mrb[0].mxu0 %v3814
    %v3979 = vpop.f32.mrb[0].mxu0
    %v3980 = vadd.f32 %v3848, %v3979
    %v3981 = vpop.f32.mrb[0].mxu0
    %v3982 = vpop.f32.mrb[0].mxu0
    %v3983 = vpop.f32.mrb[0].mxu0
    %3984 = vdwg.mxu0
    %v3985 = vpack.c.bf16 %v3812, %v3812
    %v3986 = vpack.c.bf16 %v3813, %v3813
    %v3987 = vld [vmem:[#allocation2 + $0xf00] sm:$0xf]
    %v3988 = vld [vmem:[#allocation2 + $0xf08] sm:$0xf]
    %v3989 = vld [vmem:[#allocation2 + $0xf10] sm:$0xf]
    %v3990 = vld [vmem:[#allocation2 + $0xf18] sm:$0xf]
    %v3991 = vld [vmem:[#allocation2 + $0xf20] sm:$0xf]
    %v3992 = vld [vmem:[#allocation2 + $0xf28] sm:$0xf]
    %v3993 = vld [vmem:[#allocation2 + $0xf30] sm:$0xf]
    %v3994 = vld [vmem:[#allocation2 + $0xf38] sm:$0xf]
    %v3995 = vld [vmem:[#allocation2 + $0xf40] sm:$0xf]
    %v3996 = vld [vmem:[#allocation2 + $0xf48] sm:$0xf]
    %v3997 = vld [vmem:[#allocation2 + $0xf50] sm:$0xf]
    %v3998 = vld [vmem:[#allocation2 + $0xf58] sm:$0xf]
    %v3999 = vld [vmem:[#allocation2 + $0xf60] sm:$0xf]
    %v4000 = vld [vmem:[#allocation2 + $0xf68] sm:$0xf]
    %v4001 = vld [vmem:[#allocation2 + $0xf70] sm:$0xf]
    %v4002 = vld [vmem:[#allocation2 + $0xf78] sm:$0xf]
    %v4003 = vld [vmem:[#allocation2 + $0xf80] sm:$0xf]
    %v4004 = vld [vmem:[#allocation2 + $0xf88] sm:$0xf]
    %v4005 = vld [vmem:[#allocation2 + $0xf90] sm:$0xf]
    %v4006 = vld [vmem:[#allocation2 + $0xf98] sm:$0xf]
    %v4007 = vld [vmem:[#allocation2 + $0xfa0] sm:$0xf]
    %v4008 = vld [vmem:[#allocation2 + $0xfa8] sm:$0xf]
    %v4009 = vld [vmem:[#allocation2 + $0xfb0] sm:$0xf]
    %v4010 = vld [vmem:[#allocation2 + $0xfb8] sm:$0xf]
    %v4011 = vld [vmem:[#allocation2 + $0xfc0] sm:$0xf]
    %v4012 = vld [vmem:[#allocation2 + $0xfc8] sm:$0xf]
    %v4013 = vld [vmem:[#allocation2 + $0xfd0] sm:$0xf]
    %v4014 = vld [vmem:[#allocation2 + $0xfd8] sm:$0xf]
    %v4015 = vld [vmem:[#allocation2 + $0xfe0] sm:$0xf]
    %v4016 = vld [vmem:[#allocation2 + $0xfe8] sm:$0xf]
    %v4017 = vld [vmem:[#allocation2 + $0xff0] sm:$0xf]
    %v4018 = vld [vmem:[#allocation2 + $0xff8] sm:$0xf]
    %v4019 = vld [vmem:[#allocation4 + $0x21] ss:$0 sm:$0xff]
    %v4052 = vunpack.c.l.b16 %v3987
    %v4053 = vunpack.c.l.b16 %v3988
    %v4054 = vunpack.c.l.b16 %v3989
    %v4055 = vunpack.c.l.b16 %v3990
    %v4056 = vunpack.c.l.b16 %v3991
    %v4057 = vunpack.c.l.b16 %v3992
    %v4058 = vunpack.c.l.b16 %v3993
    %v4059 = vunpack.c.l.b16 %v3994
    %v4060 = vunpack.c.l.b16 %v3995
    %v4061 = vunpack.c.l.b16 %v3996
    %v4062 = vunpack.c.l.b16 %v3997
    %v4063 = vunpack.c.l.b16 %v3998
    %v4064 = vunpack.c.l.b16 %v3999
    %v4065 = vunpack.c.l.b16 %v4000
    %v4066 = vunpack.c.l.b16 %v4001
    %v4067 = vunpack.c.l.b16 %v4002
    %v4068 = vunpack.c.l.b16 %v4003
    %v4069 = vunpack.c.l.b16 %v4004
    %v4070 = vunpack.c.l.b16 %v4005
    %v4071 = vunpack.c.l.b16 %v4006
    %v4072 = vunpack.c.l.b16 %v4007
    %v4073 = vunpack.c.l.b16 %v4008
    %v4074 = vunpack.c.l.b16 %v4009
    %v4075 = vunpack.c.l.b16 %v4010
    %v4076 = vunpack.c.l.b16 %v4011
    %v4077 = vunpack.c.l.b16 %v4012
    %v4078 = vunpack.c.l.b16 %v4013
    %v4079 = vunpack.c.l.b16 %v4014
    %v4080 = vunpack.c.l.b16 %v4015
    %v4081 = vunpack.c.l.b16 %v4016
    %v4082 = vunpack.c.l.b16 %v4017
    %v4083 = vunpack.c.l.b16 %v4018
    %v4084 = vpack.c.b16 %v4053, %v4052
    %v4085 = vpack.c.b16 %v4055, %v4054
    %v4086 = vpack.c.b16 %v4057, %v4056
    %v4087 = vpack.c.b16 %v4059, %v4058
    %v4088 = vpack.c.b16 %v4061, %v4060
    %v4089 = vpack.c.b16 %v4063, %v4062
    %v4090 = vpack.c.b16 %v4065, %v4064
    %v4091 = vpack.c.b16 %v4067, %v4066
    %v4092 = vpack.c.b16 %v4069, %v4068
    %v4093 = vpack.c.b16 %v4071, %v4070
    %v4094 = vpack.c.b16 %v4073, %v4072
    %v4095 = vpack.c.b16 %v4075, %v4074
    %v4096 = vpack.c.b16 %v4077, %v4076
    %v4097 = vpack.c.b16 %v4079, %v4078
    %v4098 = vpack.c.b16 %v4081, %v4080
    %v4099 = vpack.c.b16 %v4083, %v4082
    %4116 = vmatprep.subr.bf16.mxu0 0
    %4117 = vmatpush1.bf16.msra.mxu0 %v4084
    %4118 = vmatprep.subr.bf16.mxu0 0
    %4119 = vmatpush1.bf16.msra.mxu0 %v4085
    %4120 = vmatprep.subr.bf16.mxu0 0
    %4121 = vmatpush1.bf16.msra.mxu0 %v4086
    %4122 = vmatprep.subr.bf16.mxu0 0
    %4123 = vmatpush1.bf16.msra.mxu0 %v4087
    %4124 = vmatprep.subr.bf16.mxu0 0
    %4125 = vmatpush1.bf16.msra.mxu0 %v4088
    %4126 = vmatprep.subr.bf16.mxu0 0
    %4127 = vmatpush1.bf16.msra.mxu0 %v4089
    %4128 = vmatprep.subr.bf16.mxu0 0
    %4129 = vmatpush1.bf16.msra.mxu0 %v4090
    %4130 = vmatprep.subr.bf16.mxu0 0
    %4131 = vmatpush1.bf16.msra.mxu0 %v4091
    %4132 = vmatprep.subr.bf16.mxu0 0
    %4133 = vmatpush1.bf16.msra.mxu0 %v4092
    %4134 = vmatprep.subr.bf16.mxu0 0
    %4135 = vmatpush1.bf16.msra.mxu0 %v4093
    %4136 = vmatprep.subr.bf16.mxu0 0
    %4137 = vmatpush1.bf16.msra.mxu0 %v4094
    %4138 = vmatprep.subr.bf16.mxu0 0
    %4139 = vmatpush1.bf16.msra.mxu0 %v4095
    %4140 = vmatprep.subr.bf16.mxu0 0
    %4141 = vmatpush1.bf16.msra.mxu0 %v4096
    %4142 = vmatprep.subr.bf16.mxu0 0
    %4143 = vmatpush1.bf16.msra.mxu0 %v4097
    %4144 = vmatprep.subr.bf16.mxu0 0
    %4145 = vmatpush1.bf16.msra.mxu0 %v4098
    %4146 = vmatprep.subr.bf16.mxu0 0
    %4147 = vmatpush1.bf16.msra.mxu0 %v4099
    %4148 = vmatprep.mubr.bf16.mxu0 %v3986
    %4149 = vmatmul.mubr.bf16.gmra.mrb[0].mxu0 %v3985
    %v4150 = vpop.f32.mrb[0].mxu0
    %v4151 = vadd.f32 %v4019, %v4150
    %v4152 = vpop.f32.mrb[0].mxu0
    %v4153 = vpop.f32.mrb[0].mxu0
    %v4154 = vpop.f32.mrb[0].mxu0
    %4155 = vdwg.mxu0
    %4156 = vst [vmem:[%s3] sm:$0xff] %v3980
    %4157 = vst [vmem:[%s3 + $0x8] sm:$0xff] %v4151
    // Predicated region
    $region22: #{encoder_decoder_dynamics_forward.1} parent=1 // pred_check
      _
    $region23: #{encoder_decoder_dynamics_forward.1} parent=1 // pred_check_branch
      %4159 = sbr.rel (0) target = $region25
    $region24: #{encoder_decoder_dynamics_forward.1} parent=1 // pred_region
      _
    $region25: #{encoder_decoder_dynamics_forward.1} parent=1 // pred_fallthru
      _
    // Predicated region
    $region26: #{encoder_decoder_dynamics_forward.1} parent=1 // pred_check
      _
    $region27: #{encoder_decoder_dynamics_forward.1} parent=1 // pred_check_branch
      %4161 = sbr.rel (0) target = $region29
    $region28: #{encoder_decoder_dynamics_forward.1} parent=1 // pred_region
      _
    $region29: #{encoder_decoder_dynamics_forward.1} parent=1 // pred_fallthru
      _
    %4162 = vsyncpa [#allocation3], 1
    %4163 = vsyncpa [#allocation5], 1

</llo_original>
